<compile_context>
chip_gen: v7x
topology: tpu7x:2x2x1
jax: 0.10.0
libtpu: 0.0.40
codegen_flags: <defaults>
</compile_context>

<pallas_src>
import numpy as np
import jax
import jax.numpy as jnp
from jax.experimental import pallas as pl
from jax.experimental.pallas import tpu as pltpu

SQRT2_INV = 0.7071067811865476
_IN_EPS = 1e-6   # SFNO config: InstanceNorm2d(..., eps=1e-06, affine=True)


# ----------------------------------------------------------------------------- in-kernel helpers
def _erf(x):
    # Abramowitz & Stegun 7.1.26 rational approximation, |err| < 1.5e-7
    # (float32-accurate stand-in for exact erf; exp() runs on the EUP slot).
    a1, a2, a3, a4, a5 = (0.254829592, -0.284496736, 1.421413741,
                          -1.453152027, 1.061405429)
    p = 0.3275911
    sgn = jnp.where(x >= 0.0, 1.0, -1.0)
    ax = jnp.abs(x)
    t = 1.0 / (1.0 + p * ax)
    poly = ((((a5 * t + a4) * t + a3) * t + a2) * t + a1) * t
    return sgn * (1.0 - poly * jnp.exp(-ax * ax))


def _gelu(x):
    # exact-erf GELU (PyTorch nn.GELU default) via the float32-accurate erf approx
    return 0.5 * x * (1.0 + _erf(x * SQRT2_INV))


def _inorm(x, g, b):
    # InstanceNorm2d semantics: per-channel mean/biased-variance over tokens, affine.
    m = jnp.mean(x, axis=-1, keepdims=True)
    xc = x - m
    v = jnp.mean(xc * xc, axis=-1, keepdims=True)
    return xc * jax.lax.rsqrt(v + _IN_EPS) * g + b


def _mm(a, b):
    return jnp.dot(a, b, preferred_element_type=jnp.float32)


def _const_spec(a):
    # whole-array block, broadcast across the batch grid (DMA'd once).
    nd = a.ndim
    return pl.BlockSpec(a.shape, lambda b, nd=nd: (0,) * nd)


# ----------------------------------------------------------------------------- fused encoder kernel
def _encoder_kernel(x_ref, w0_ref, b0_ref, w1_ref, pos_ref, o_ref):
    x = x_ref[0]                                            # (Cin, T)
    h = _gelu(_mm(w0_ref[...], x) + b0_ref[...])            # Conv1x1 + GELU
    o_ref[0] = _mm(w1_ref[...], h) + pos_ref[...]           # Conv1x1 (no bias) + pos_embed


def encoder_forward(x, p):
    bsz, cin, t = x.shape
    e = p['enc_w0'].shape[0]
    b0 = p['enc_b0'].reshape(e, 1)
    pos = p['pos_embed'].reshape(e, t)
    return pl.pallas_call(
        _encoder_kernel,
        out_shape=jax.ShapeDtypeStruct((bsz, e, t), jnp.float32),
        grid=(bsz,),
        in_specs=[
            pl.BlockSpec((1, cin, t), lambda b: (b, 0, 0)),
            _const_spec(p['enc_w0']), _const_spec(b0),
            _const_spec(p['enc_w1']), _const_spec(pos),
        ],
        out_specs=pl.BlockSpec((1, e, t), lambda b: (b, 0, 0)),
        compiler_params=pltpu.CompilerParams(dimension_semantics=("parallel",)),
    )(x, p['enc_w0'], b0, p['enc_w1'], pos)


# ----------------------------------------------------------------------------- fused SFNO block kernel
def _sfno_block_kernel(x_ref, g0_ref, b0_ref, wr_ref, wi_ref, fb_ref,
                       skw_ref, skb_ref, g1_ref, b1_ref,
                       f1w_ref, f1b_ref, f2w_ref, f2b_ref,
                       dfr_ref, dfi_ref, dgr_ref, dgi_ref, o_ref):
    x = x_ref[0]                                            # (E, T)

    # norm0 (InstanceNorm2d); its output is also the block residual
    xn = _inorm(x, g0_ref[...], b0_ref[...])

    # --- SpectralConvS2: rfft2('ortho') as flattened lane-dense matmuls (K = H*W)
    fr = _mm(xn, dfr_ref[...])                              # (E, L*M) real part
    fi = _mm(xn, dfi_ref[...])                              # (E, L*M) imag part

    # 'diagonal' complex channel mix: y[o,k] = sum_i f[i,k] * w[i,o,k]
    wr = wr_ref[...]                                        # (Ci, Co, L*M)
    wi = wi_ref[...]
    fr_b = fr[:, None, :]
    fi_b = fi[:, None, :]
    yr = jnp.sum(fr_b * wr - fi_b * wi, axis=0)             # (Co, L*M)
    yi = jnp.sum(fr_b * wi + fi_b * wr, axis=0)

    # irfft2('ortho') as flattened matmuls (N = H*W), + filter bias
    xs = _mm(yr, dgr_ref[...]) + _mm(yi, dgi_ref[...]) + fb_ref[...]   # (Co, T)

    # inner skip (linear 1x1 conv of the norm0 output) then GELU
    x1 = _gelu(xs + _mm(skw_ref[...], xn) + skb_ref[...])

    # norm1
    x1n = _inorm(x1, g1_ref[...], b1_ref[...])

    # MLP fc1 -> GELU -> fc2 ; drop_path = Identity ; outer skip = identity(residual)
    hid = _gelu(_mm(f1w_ref[...], x1n) + f1b_ref[...])
    o_ref[0] = _mm(f2w_ref[...], hid) + f2b_ref[...] + xn


def sfno_block_forward(x, blk, dft):
    bsz, e, t = x.shape
    co = blk['wr'].shape[1]
    args = (x,
            blk['g0'].reshape(e, 1), blk['b0'].reshape(e, 1),
            blk['wr'], blk['wi'], blk['filt_b'].reshape(co, 1),
            blk['skip_w'], blk['skip_b'].reshape(e, 1),
            blk['g1'].reshape(e, 1), blk['b1'].reshape(e, 1),
            blk['fc1_w'], blk['fc1_b'].reshape(-1, 1),
            blk['fc2_w'], blk['fc2_b'].reshape(e, 1),
            dft['Fr'], dft['Fi'], dft['Gr'], dft['Gi'])
    in_specs = ([pl.BlockSpec((1, e, t), lambda b: (b, 0, 0))]
                + [_const_spec(a) for a in args[1:]])
    return pl.pallas_call(
        _sfno_block_kernel,
        out_shape=jax.ShapeDtypeStruct((bsz, e, t), jnp.float32),
        grid=(bsz,),
        in_specs=in_specs,
        out_specs=pl.BlockSpec((1, e, t), lambda b: (b, 0, 0)),
        compiler_params=pltpu.CompilerParams(dimension_semantics=("parallel",)),
    )(*args)


# ----------------------------------------------------------------------------- fused decoder kernel (big skip)
def _decoder_kernel(f_ref, x_ref, w0a_ref, w0b_ref, b0_ref, w1_ref, o_ref):
    # channel-concat big skip realized by splitting the first decoder weight:
    # Conv1x1([feat ; x_in]) = W0a @ feat + W0b @ x_in + b0
    h = _gelu(_mm(w0a_ref[...], f_ref[0]) + _mm(w0b_ref[...], x_ref[0]) + b0_ref[...])
    o_ref[0] = _mm(w1_ref[...], h)                          # Conv1x1 (no bias)


def decoder_forward(feat, xres, p):
    bsz, e, t = feat.shape
    cin = xres.shape[1]
    cout = p['dec_w1'].shape[0]
    b0 = p['dec_b0'].reshape(e, 1)
    return pl.pallas_call(
        _decoder_kernel,
        out_shape=jax.ShapeDtypeStruct((bsz, cout, t), jnp.float32),
        grid=(bsz,),
        in_specs=[
            pl.BlockSpec((1, e, t), lambda b: (b, 0, 0)),
            pl.BlockSpec((1, cin, t), lambda b: (b, 0, 0)),
            _const_spec(p['dec_w0a']), _const_spec(p['dec_w0b']),
            _const_spec(b0), _const_spec(p['dec_w1']),
        ],
        out_specs=pl.BlockSpec((1, cout, t), lambda b: (b, 0, 0)),
        compiler_params=pltpu.CompilerParams(dimension_semantics=("parallel",)),
    )(feat, xres, p['dec_w0a'], p['dec_w0b'], b0, p['dec_w1'])


# ----------------------------------------------------------------------------- flattened DFT matrices (glue, deterministic)
def build_dft(h, w):
    """rfft2/irfft2 (norm='ortho') as flattened real matrices.

    Fr/Fi: (H*W, L*M) so that  X = x_flat @ (Fr + i*Fi)        (forward rfft2)
    Gr/Gi: (L*M, H*W) so that  x = Re-part reconstruction      (inverse irfft2)
           x_flat = Xr @ Gr + Xi @ Gi   (one-sided doubling baked into Gr/Gi)
    """
    m = w // 2 + 1
    hw, lm = h * w, h * m
    scale = 1.0 / np.sqrt(h * w)
    lh = np.outer(np.arange(h), np.arange(h)) / h           # (H, L): h*l/H
    mw = np.outer(np.arange(w), np.arange(m)) / w           # (W, M): w*m/W

    theta_f = 2.0 * np.pi * (lh[:, None, :, None] + mw[None, :, None, :])  # (H,W,L,M)
    Fr = (np.cos(theta_f) * scale).reshape(hw, lm)
    Fi = (-np.sin(theta_f) * scale).reshape(hw, lm)

    dup = np.full((m,), 2.0)
    dup[0] = 1.0
    if w % 2 == 0:
        dup[-1] = 1.0                                        # Nyquist column: no doubling
    theta_i = 2.0 * np.pi * (lh.T[:, None, :, None] + mw.T[None, :, None, :])  # (L,M,H,W)
    Gr = (dup[None, :, None, None] * np.cos(theta_i) * scale).reshape(lm, hw)
    Gi = (-dup[None, :, None, None] * np.sin(theta_i) * scale).reshape(lm, hw)

    arrs = dict(Fr=Fr, Fi=Fi, Gr=Gr, Gi=Gi)
    return {k: jnp.asarray(v, jnp.float32) for k, v in arrs.items()}


# ----------------------------------------------------------------------------- forward (reshapes only; no transposes)
def sfno_forward(x, params, dft):
    b, cin, h, w = x.shape
    t = h * w
    xt = x.reshape(b, cin, t)                 # NCHW -> (B, C, tokens); free reshape
    feat = encoder_forward(xt, params)        # encoder + pos_embed (pos_drop = Identity)
    for blk in params['blocks']:
        feat = sfno_block_forward(feat, blk, dft)
    out = decoder_forward(feat, xt, params)   # big-skip concat folded into split weight
    return out.reshape(b, -1, h, w)


# ----------------------------------------------------------------------------- deterministic synthetic params
def init_params(key, *, img_size=(16, 16), in_chans=3, out_chans=3,
                embed_dim=16, num_layers=2, mlp_ratio=2.0):
    h, w = img_size
    m = w // 2 + 1
    lm = h * m
    hid = int(embed_dim * mlp_ratio)
    keys = iter(jax.random.split(key, 8 + 12 * num_layers))

    def nrm(shape, std=0.02):
        return std * jax.random.normal(next(keys), shape, jnp.float32)

    params = dict(
        # encoder: Conv1x1(in->E, bias) -> GELU -> Conv1x1(E->E, no bias)
        enc_w0=nrm((embed_dim, in_chans)), enc_b0=nrm((embed_dim,), 0.01),
        enc_w1=nrm((embed_dim, embed_dim)),
        pos_embed=nrm((1, embed_dim, h, w)),       # synthetic (module inits zeros)
        # decoder: Conv1x1(E+in->E, bias) -> GELU -> Conv1x1(E->out, no bias);
        # first weight pre-split into the feature part and the big-skip part.
        dec_w0a=nrm((embed_dim, embed_dim)), dec_w0b=nrm((embed_dim, in_chans)),
        dec_b0=nrm((embed_dim,), 0.01),
        dec_w1=nrm((out_chans, embed_dim)),
        blocks=[],
    )
    for _ in range(num_layers):
        params['blocks'].append(dict(
            g0=jnp.ones((embed_dim,), jnp.float32), b0=jnp.zeros((embed_dim,), jnp.float32),
            # complex spectral weight, modes flattened to L*M (= module weight.reshape)
            wr=nrm((embed_dim, embed_dim, lm)),
            wi=nrm((embed_dim, embed_dim, lm)),
            filt_b=nrm((embed_dim,), 0.01),
            skip_w=nrm((embed_dim, embed_dim)), skip_b=nrm((embed_dim,), 0.01),
            g1=jnp.ones((embed_dim,), jnp.float32), b1=jnp.zeros((embed_dim,), jnp.float32),
            fc1_w=nrm((hid, embed_dim)), fc1_b=nrm((hid,), 0.01),
            fc2_w=nrm((embed_dim, hid)), fc2_b=nrm((embed_dim,), 0.01),
        ))
    return params


if __name__ == "__main__":
    H, W = 16, 16
    B, CIN, COUT, E = 2, 3, 3, 16
    key = jax.random.PRNGKey(0)
    pkey, xkey = jax.random.split(key)
    params = init_params(pkey, img_size=(H, W), in_chans=CIN, out_chans=COUT,
                         embed_dim=E, num_layers=2, mlp_ratio=2.0)
    dft = build_dft(H, W)
    x = jax.random.normal(xkey, (B, CIN, H, W), jnp.float32)

    fwd = jax.jit(sfno_forward)
    y = jax.block_until_ready(fwd(x, params, dft))
    assert y.shape == (B, COUT, H, W) and y.dtype == jnp.float32
    print("KERNEL_OK")
</pallas_src>

<mosaic_0001>
module attributes {stable_mosaic.version = 11 : i64} {
  func.func @_decoder_kernel(%arg0: i32, %arg1: memref<1x16x256xf32, #tpu.memory_space<vmem>>, %arg2: memref<1x3x256xf32, #tpu.memory_space<vmem>>, %arg3: memref<16x16xf32, #tpu.memory_space<vmem>>, %arg4: memref<16x3xf32, #tpu.memory_space<vmem>>, %arg5: memref<16x1xf32, #tpu.memory_space<vmem>>, %arg6: memref<3x16xf32, #tpu.memory_space<vmem>>, %arg7: memref<1x3x256xf32, #tpu.memory_space<vmem>>) attributes {dimension_semantics = [#tpu.dimension_semantics<parallel>], iteration_bounds = array<i64: 2>, scalar_prefetch = 0 : i64, scratch_operands = 0 : i64, tpu.core_type = #tpu.core_type<tc>, window_params = [{transform_indices = @transform_0, window_bounds = array<i64: 1, 16, 256>}, {transform_indices = @transform_1, window_bounds = array<i64: 1, 3, 256>}, {pipeline_mode = #tpu.pipeline_mode<synchronous>, transform_indices = @transform_2, window_bounds = array<i64: 16, 16>}, {pipeline_mode = #tpu.pipeline_mode<synchronous>, transform_indices = @transform_3, window_bounds = array<i64: 16, 3>}, {pipeline_mode = #tpu.pipeline_mode<synchronous>, transform_indices = @transform_4, window_bounds = array<i64: 16, 1>}, {pipeline_mode = #tpu.pipeline_mode<synchronous>, transform_indices = @transform_5, window_bounds = array<i64: 3, 16>}, {transform_indices = @transform_6, window_bounds = array<i64: 1, 3, 256>}]} {
    %c0 = arith.constant 0 : index
    %c0_0 = arith.constant 0 : index
    %0 = vector.load %arg3[%c0, %c0_0] : memref<16x16xf32, #tpu.memory_space<vmem>>, vector<16x16xf32>
    %c0_1 = arith.constant 0 : index
    %c0_2 = arith.constant 0 : index
    %c0_3 = arith.constant 0 : index
    %1 = vector.load %arg1[%c0_1, %c0_2, %c0_3] : memref<1x16x256xf32, #tpu.memory_space<vmem>>, vector<1x16x256xf32>
    %2 = vector.shape_cast %1 : vector<1x16x256xf32> to vector<16x256xf32>
    %cst = arith.constant dense<0.000000e+00> : vector<16x256xf32>
    %3 = tpu.matmul %0, %2, %cst {dimension_numbers = #tpu.dot_dimension_numbers<[1], [0], [0], [1], [0, 0, 1, 1], [], []>} : vector<16x16xf32>, vector<16x256xf32>, vector<16x256xf32> -> vector<16x256xf32>
    %c0_4 = arith.constant 0 : index
    %c0_5 = arith.constant 0 : index
    %4 = vector.load %arg4[%c0_4, %c0_5] : memref<16x3xf32, #tpu.memory_space<vmem>>, vector<16x3xf32>
    %c0_6 = arith.constant 0 : index
    %c0_7 = arith.constant 0 : index
    %c0_8 = arith.constant 0 : index
    %5 = vector.load %arg2[%c0_6, %c0_7, %c0_8] : memref<1x3x256xf32, #tpu.memory_space<vmem>>, vector<1x3x256xf32>
    %6 = vector.shape_cast %5 : vector<1x3x256xf32> to vector<3x256xf32>
    %cst_9 = arith.constant dense<0.000000e+00> : vector<16x256xf32>
    %7 = tpu.matmul %4, %6, %cst_9 {dimension_numbers = #tpu.dot_dimension_numbers<[1], [0], [0], [1], [0, 0, 1, 1], [], []>} : vector<16x3xf32>, vector<3x256xf32>, vector<16x256xf32> -> vector<16x256xf32>
    %8 = arith.addf %3, %7 : vector<16x256xf32>
    %c0_10 = arith.constant 0 : index
    %c0_11 = arith.constant 0 : index
    %9 = vector.load %arg5[%c0_10, %c0_11] : memref<16x1xf32, #tpu.memory_space<vmem>>, vector<16x1xf32>
    %10 = vector.broadcast %9 : vector<16x1xf32> to vector<16x256xf32>
    %11 = arith.addf %8, %10 : vector<16x256xf32>
    %cst_12 = arith.constant 5.000000e-01 : f32
    %12 = vector.broadcast %cst_12 : f32 to vector<16x256xf32>
    %13 = arith.mulf %12, %11 : vector<16x256xf32>
    %cst_13 = arith.constant 0.707106769 : f32
    %14 = vector.broadcast %cst_13 : f32 to vector<16x256xf32>
    %15 = arith.mulf %11, %14 : vector<16x256xf32>
    %cst_14 = arith.constant 0.000000e+00 : f32
    %16 = vector.broadcast %cst_14 : f32 to vector<16x256xf32>
    %17 = arith.cmpf oge, %15, %16 : vector<16x256xf32>
    %cst_15 = arith.constant 1.000000e+00 : f32
    %cst_16 = arith.constant -1.000000e+00 : f32
    %18 = vector.broadcast %cst_15 : f32 to vector<16x256xf32>
    %19 = vector.broadcast %cst_16 : f32 to vector<16x256xf32>
    %20 = arith.select %17, %18, %19 : vector<16x256xi1>, vector<16x256xf32>
    %21 = math.absf %15 : vector<16x256xf32>
    %cst_17 = arith.constant 0.327591091 : f32
    %22 = vector.broadcast %cst_17 : f32 to vector<16x256xf32>
    %23 = arith.mulf %22, %21 : vector<16x256xf32>
    %cst_18 = arith.constant 1.000000e+00 : f32
    %24 = vector.broadcast %cst_18 : f32 to vector<16x256xf32>
    %25 = arith.addf %24, %23 : vector<16x256xf32>
    %cst_19 = arith.constant 1.000000e+00 : f32
    %26 = vector.broadcast %cst_19 : f32 to vector<16x256xf32>
    %27 = arith.divf %26, %25 : vector<16x256xf32>
    %cst_20 = arith.constant 1.06140542 : f32
    %28 = vector.broadcast %cst_20 : f32 to vector<16x256xf32>
    %29 = arith.mulf %28, %27 : vector<16x256xf32>
    %cst_21 = arith.constant -1.45315206 : f32
    %30 = vector.broadcast %cst_21 : f32 to vector<16x256xf32>
    %31 = arith.addf %29, %30 : vector<16x256xf32>
    %32 = arith.mulf %31, %27 : vector<16x256xf32>
    %cst_22 = arith.constant 1.42141378 : f32
    %33 = vector.broadcast %cst_22 : f32 to vector<16x256xf32>
    %34 = arith.addf %32, %33 : vector<16x256xf32>
    %35 = arith.mulf %34, %27 : vector<16x256xf32>
    %cst_23 = arith.constant -0.284496725 : f32
    %36 = vector.broadcast %cst_23 : f32 to vector<16x256xf32>
    %37 = arith.addf %35, %36 : vector<16x256xf32>
    %38 = arith.mulf %37, %27 : vector<16x256xf32>
    %cst_24 = arith.constant 0.254829586 : f32
    %39 = vector.broadcast %cst_24 : f32 to vector<16x256xf32>
    %40 = arith.addf %38, %39 : vector<16x256xf32>
    %41 = arith.mulf %40, %27 : vector<16x256xf32>
    %cst_25 = arith.constant 0.000000e+00 : f32
    %42 = vector.broadcast %cst_25 : f32 to vector<16x256xf32>
    %43 = arith.subf %42, %21 : vector<16x256xf32>
    %44 = arith.mulf %43, %21 : vector<16x256xf32>
    %45 = math.exp %44 : vector<16x256xf32>
    %46 = arith.mulf %41, %45 : vector<16x256xf32>
    %cst_26 = arith.constant 1.000000e+00 : f32
    %47 = vector.broadcast %cst_26 : f32 to vector<16x256xf32>
    %48 = arith.subf %47, %46 : vector<16x256xf32>
    %49 = arith.mulf %20, %48 : vector<16x256xf32>
    %cst_27 = arith.constant 1.000000e+00 : f32
    %50 = vector.broadcast %cst_27 : f32 to vector<16x256xf32>
    %51 = arith.addf %50, %49 : vector<16x256xf32>
    %52 = arith.mulf %13, %51 : vector<16x256xf32>
    %c0_28 = arith.constant 0 : index
    %c0_29 = arith.constant 0 : index
    %53 = vector.load %arg6[%c0_28, %c0_29] : memref<3x16xf32, #tpu.memory_space<vmem>>, vector<3x16xf32>
    %cst_30 = arith.constant dense<0.000000e+00> : vector<3x256xf32>
    %54 = tpu.matmul %53, %52, %cst_30 {dimension_numbers = #tpu.dot_dimension_numbers<[1], [0], [0], [1], [0, 0, 1, 1], [], []>} : vector<3x16xf32>, vector<16x256xf32>, vector<3x256xf32> -> vector<3x256xf32>
    %c0_31 = arith.constant 0 : index
    %c0_32 = arith.constant 0 : index
    %c0_33 = arith.constant 0 : index
    %55 = vector.load %arg7[%c0_31, %c0_32, %c0_33] : memref<1x3x256xf32, #tpu.memory_space<vmem>>, vector<1x3x256xf32>
    %56 = vector.shape_cast %55 : vector<1x3x256xf32> to vector<3x256xf32>
    %57 = vector.shape_cast %54 : vector<3x256xf32> to vector<1x3x256xf32>
    tpu.vector_store %arg7[%c0_31, %c0_32, %c0_33], %57 {strides = array<i32>} : memref<1x3x256xf32, #tpu.memory_space<vmem>>, vector<1x3x256xf32>,
    return
  }
  func.func @transform_0(%arg0: i32) -> (i32, i32, i32) {
    %c0_i32 = arith.constant 0 : i32
    %c0_i32_0 = arith.constant 0 : i32
    %c0_i32_1 = arith.constant 0 : i32
    return %arg0, %c0_i32, %c0_i32_0 : i32, i32, i32
  }
  func.func @transform_1(%arg0: i32) -> (i32, i32, i32) {
    %c0_i32 = arith.constant 0 : i32
    %c0_i32_0 = arith.constant 0 : i32
    %c0_i32_1 = arith.constant 0 : i32
    return %arg0, %c0_i32, %c0_i32_0 : i32, i32, i32
  }
  func.func @transform_2(%arg0: i32) -> (i32, i32) {
    %c0_i32 = arith.constant 0 : i32
    %c0_i32_0 = arith.constant 0 : i32
    %c0_i32_1 = arith.constant 0 : i32
    return %c0_i32, %c0_i32_0 : i32, i32
  }
  func.func @transform_3(%arg0: i32) -> (i32, i32) {
    %c0_i32 = arith.constant 0 : i32
    %c0_i32_0 = arith.constant 0 : i32
    %c0_i32_1 = arith.constant 0 : i32
    return %c0_i32, %c0_i32_0 : i32, i32
  }
  func.func @transform_4(%arg0: i32) -> (i32, i32) {
    %c0_i32 = arith.constant 0 : i32
    %c0_i32_0 = arith.constant 0 : i32
    %c0_i32_1 = arith.constant 0 : i32
    return %c0_i32, %c0_i32_0 : i32, i32
  }
  func.func @transform_5(%arg0: i32) -> (i32, i32) {
    %c0_i32 = arith.constant 0 : i32
    %c0_i32_0 = arith.constant 0 : i32
    %c0_i32_1 = arith.constant 0 : i32
    return %c0_i32, %c0_i32_0 : i32, i32
  }
  func.func @transform_6(%arg0: i32) -> (i32, i32, i32) {
    %c0_i32 = arith.constant 0 : i32
    %c0_i32_0 = arith.constant 0 : i32
    %c0_i32_1 = arith.constant 0 : i32
    return %arg0, %c0_i32, %c0_i32_0 : i32, i32, i32
  }
}

module attributes {stable_mosaic.version = 11 : i64} {
  func.func @_encoder_kernel(%arg0: i32, %arg1: memref<1x3x256xf32, #tpu.memory_space<vmem>>, %arg2: memref<16x3xf32, #tpu.memory_space<vmem>>, %arg3: memref<16x1xf32, #tpu.memory_space<vmem>>, %arg4: memref<16x16xf32, #tpu.memory_space<vmem>>, %arg5: memref<16x256xf32, #tpu.memory_space<vmem>>, %arg6: memref<1x16x256xf32, #tpu.memory_space<vmem>>) attributes {dimension_semantics = [#tpu.dimension_semantics<parallel>], iteration_bounds = array<i64: 2>, scalar_prefetch = 0 : i64, scratch_operands = 0 : i64, tpu.core_type = #tpu.core_type<tc>, window_params = [{transform_indices = @transform_0, window_bounds = array<i64: 1, 3, 256>}, {pipeline_mode = #tpu.pipeline_mode<synchronous>, transform_indices = @transform_1, window_bounds = array<i64: 16, 3>}, {pipeline_mode = #tpu.pipeline_mode<synchronous>, transform_indices = @transform_2, window_bounds = array<i64: 16, 1>}, {pipeline_mode = #tpu.pipeline_mode<synchronous>, transform_indices = @transform_3, window_bounds = array<i64: 16, 16>}, {pipeline_mode = #tpu.pipeline_mode<synchronous>, transform_indices = @transform_4, window_bounds = array<i64: 16, 256>}, {transform_indices = @transform_5, window_bounds = array<i64: 1, 16, 256>}]} {
    %c0 = arith.constant 0 : index
    %c0_0 = arith.constant 0 : index
    %c0_1 = arith.constant 0 : index
    %0 = vector.load %arg1[%c0, %c0_0, %c0_1] : memref<1x3x256xf32, #tpu.memory_space<vmem>>, vector<1x3x256xf32>
    %1 = vector.shape_cast %0 : vector<1x3x256xf32> to vector<3x256xf32>
    %c0_2 = arith.constant 0 : index
    %c0_3 = arith.constant 0 : index
    %2 = vector.load %arg2[%c0_2, %c0_3] : memref<16x3xf32, #tpu.memory_space<vmem>>, vector<16x3xf32>
    %cst = arith.constant dense<0.000000e+00> : vector<16x256xf32>
    %3 = tpu.matmul %2, %1, %cst {dimension_numbers = #tpu.dot_dimension_numbers<[1], [0], [0], [1], [0, 0, 1, 1], [], []>} : vector<16x3xf32>, vector<3x256xf32>, vector<16x256xf32> -> vector<16x256xf32>
    %c0_4 = arith.constant 0 : index
    %c0_5 = arith.constant 0 : index
    %4 = vector.load %arg3[%c0_4, %c0_5] : memref<16x1xf32, #tpu.memory_space<vmem>>, vector<16x1xf32>
    %5 = vector.broadcast %4 : vector<16x1xf32> to vector<16x256xf32>
    %6 = arith.addf %3, %5 : vector<16x256xf32>
    %cst_6 = arith.constant 5.000000e-01 : f32
    %7 = vector.broadcast %cst_6 : f32 to vector<16x256xf32>
    %8 = arith.mulf %7, %6 : vector<16x256xf32>
    %cst_7 = arith.constant 0.707106769 : f32
    %9 = vector.broadcast %cst_7 : f32 to vector<16x256xf32>
    %10 = arith.mulf %6, %9 : vector<16x256xf32>
    %cst_8 = arith.constant 0.000000e+00 : f32
    %11 = vector.broadcast %cst_8 : f32 to vector<16x256xf32>
    %12 = arith.cmpf oge, %10, %11 : vector<16x256xf32>
    %cst_9 = arith.constant 1.000000e+00 : f32
    %cst_10 = arith.constant -1.000000e+00 : f32
    %13 = vector.broadcast %cst_9 : f32 to vector<16x256xf32>
    %14 = vector.broadcast %cst_10 : f32 to vector<16x256xf32>
    %15 = arith.select %12, %13, %14 : vector<16x256xi1>, vector<16x256xf32>
    %16 = math.absf %10 : vector<16x256xf32>
    %cst_11 = arith.constant 0.327591091 : f32
    %17 = vector.broadcast %cst_11 : f32 to vector<16x256xf32>
    %18 = arith.mulf %17, %16 : vector<16x256xf32>
    %cst_12 = arith.constant 1.000000e+00 : f32
    %19 = vector.broadcast %cst_12 : f32 to vector<16x256xf32>
    %20 = arith.addf %19, %18 : vector<16x256xf32>
    %cst_13 = arith.constant 1.000000e+00 : f32
    %21 = vector.broadcast %cst_13 : f32 to vector<16x256xf32>
    %22 = arith.divf %21, %20 : vector<16x256xf32>
    %cst_14 = arith.constant 1.06140542 : f32
    %23 = vector.broadcast %cst_14 : f32 to vector<16x256xf32>
    %24 = arith.mulf %23, %22 : vector<16x256xf32>
    %cst_15 = arith.constant -1.45315206 : f32
    %25 = vector.broadcast %cst_15 : f32 to vector<16x256xf32>
    %26 = arith.addf %24, %25 : vector<16x256xf32>
    %27 = arith.mulf %26, %22 : vector<16x256xf32>
    %cst_16 = arith.constant 1.42141378 : f32
    %28 = vector.broadcast %cst_16 : f32 to vector<16x256xf32>
    %29 = arith.addf %27, %28 : vector<16x256xf32>
    %30 = arith.mulf %29, %22 : vector<16x256xf32>
    %cst_17 = arith.constant -0.284496725 : f32
    %31 = vector.broadcast %cst_17 : f32 to vector<16x256xf32>
    %32 = arith.addf %30, %31 : vector<16x256xf32>
    %33 = arith.mulf %32, %22 : vector<16x256xf32>
    %cst_18 = arith.constant 0.254829586 : f32
    %34 = vector.broadcast %cst_18 : f32 to vector<16x256xf32>
    %35 = arith.addf %33, %34 : vector<16x256xf32>
    %36 = arith.mulf %35, %22 : vector<16x256xf32>
    %cst_19 = arith.constant 0.000000e+00 : f32
    %37 = vector.broadcast %cst_19 : f32 to vector<16x256xf32>
    %38 = arith.subf %37, %16 : vector<16x256xf32>
    %39 = arith.mulf %38, %16 : vector<16x256xf32>
    %40 = math.exp %39 : vector<16x256xf32>
    %41 = arith.mulf %36, %40 : vector<16x256xf32>
    %cst_20 = arith.constant 1.000000e+00 : f32
    %42 = vector.broadcast %cst_20 : f32 to vector<16x256xf32>
    %43 = arith.subf %42, %41 : vector<16x256xf32>
    %44 = arith.mulf %15, %43 : vector<16x256xf32>
    %cst_21 = arith.constant 1.000000e+00 : f32
    %45 = vector.broadcast %cst_21 : f32 to vector<16x256xf32>
    %46 = arith.addf %45, %44 : vector<16x256xf32>
    %47 = arith.mulf %8, %46 : vector<16x256xf32>
    %c0_22 = arith.constant 0 : index
    %c0_23 = arith.constant 0 : index
    %48 = vector.load %arg4[%c0_22, %c0_23] : memref<16x16xf32, #tpu.memory_space<vmem>>, vector<16x16xf32>
    %cst_24 = arith.constant dense<0.000000e+00> : vector<16x256xf32>
    %49 = tpu.matmul %48, %47, %cst_24 {dimension_numbers = #tpu.dot_dimension_numbers<[1], [0], [0], [1], [0, 0, 1, 1], [], []>} : vector<16x16xf32>, vector<16x256xf32>, vector<16x256xf32> -> vector<16x256xf32>
    %c0_25 = arith.constant 0 : index
    %c0_26 = arith.constant 0 : index
    %50 = vector.load %arg5[%c0_25, %c0_26] : memref<16x256xf32, #tpu.memory_space<vmem>>, vector<16x256xf32>
    %51 = arith.addf %49, %50 : vector<16x256xf32>
    %c0_27 = arith.constant 0 : index
    %c0_28 = arith.constant 0 : index
    %c0_29 = arith.constant 0 : index
    %52 = vector.load %arg6[%c0_27, %c0_28, %c0_29] : memref<1x16x256xf32, #tpu.memory_space<vmem>>, vector<1x16x256xf32>
    %53 = vector.shape_cast %52 : vector<1x16x256xf32> to vector<16x256xf32>
    %54 = vector.shape_cast %51 : vector<16x256xf32> to vector<1x16x256xf32>
    tpu.vector_store %arg6[%c0_27, %c0_28, %c0_29], %54 {strides = array<i32>} : memref<1x16x256xf32, #tpu.memory_space<vmem>>, vector<1x16x256xf32>,
    return
  }
  func.func @transform_0(%arg0: i32) -> (i32, i32, i32) {
    %c0_i32 = arith.constant 0 : i32
    %c0_i32_0 = arith.constant 0 : i32
    %c0_i32_1 = arith.constant 0 : i32
    return %arg0, %c0_i32, %c0_i32_0 : i32, i32, i32
  }
  func.func @transform_1(%arg0: i32) -> (i32, i32) {
    %c0_i32 = arith.constant 0 : i32
    %c0_i32_0 = arith.constant 0 : i32
    %c0_i32_1 = arith.constant 0 : i32
    return %c0_i32, %c0_i32_0 : i32, i32
  }
  func.func @transform_2(%arg0: i32) -> (i32, i32) {
    %c0_i32 = arith.constant 0 : i32
    %c0_i32_0 = arith.constant 0 : i32
    %c0_i32_1 = arith.constant 0 : i32
    return %c0_i32, %c0_i32_0 : i32, i32
  }
  func.func @transform_3(%arg0: i32) -> (i32, i32) {
    %c0_i32 = arith.constant 0 : i32
    %c0_i32_0 = arith.constant 0 : i32
    %c0_i32_1 = arith.constant 0 : i32
    return %c0_i32, %c0_i32_0 : i32, i32
  }
  func.func @transform_4(%arg0: i32) -> (i32, i32) {
    %c0_i32 = arith.constant 0 : i32
    %c0_i32_0 = arith.constant 0 : i32
    %c0_i32_1 = arith.constant 0 : i32
    return %c0_i32, %c0_i32_0 : i32, i32
  }
  func.func @transform_5(%arg0: i32) -> (i32, i32, i32) {
    %c0_i32 = arith.constant 0 : i32
    %c0_i32_0 = arith.constant 0 : i32
    %c0_i32_1 = arith.constant 0 : i32
    return %arg0, %c0_i32, %c0_i32_0 : i32, i32, i32
  }
}

module attributes {stable_mosaic.version = 11 : i64} {
  func.func @_sfno_block_kernel(%arg0: i32, %arg1: memref<1x16x256xf32, #tpu.memory_space<vmem>>, %arg2: memref<16x1xf32, #tpu.memory_space<vmem>>, %arg3: memref<16x1xf32, #tpu.memory_space<vmem>>, %arg4: memref<16x16x144xf32, #tpu.memory_space<vmem>>, %arg5: memref<16x16x144xf32, #tpu.memory_space<vmem>>, %arg6: memref<16x1xf32, #tpu.memory_space<vmem>>, %arg7: memref<16x16xf32, #tpu.memory_space<vmem>>, %arg8: memref<16x1xf32, #tpu.memory_space<vmem>>, %arg9: memref<16x1xf32, #tpu.memory_space<vmem>>, %arg10: memref<16x1xf32, #tpu.memory_space<vmem>>, %arg11: memref<32x16xf32, #tpu.memory_space<vmem>>, %arg12: memref<32x1xf32, #tpu.memory_space<vmem>>, %arg13: memref<16x32xf32, #tpu.memory_space<vmem>>, %arg14: memref<16x1xf32, #tpu.memory_space<vmem>>, %arg15: memref<256x144xf32, #tpu.memory_space<vmem>>, %arg16: memref<256x144xf32, #tpu.memory_space<vmem>>, %arg17: memref<144x256xf32, #tpu.memory_space<vmem>>, %arg18: memref<144x256xf32, #tpu.memory_space<vmem>>, %arg19: memref<1x16x256xf32, #tpu.memory_space<vmem>>) attributes {dimension_semantics = [#tpu.dimension_semantics<parallel>], iteration_bounds = array<i64: 2>, scalar_prefetch = 0 : i64, scratch_operands = 0 : i64, tpu.core_type = #tpu.core_type<tc>, window_params = [{transform_indices = @transform_0, window_bounds = array<i64: 1, 16, 256>}, {pipeline_mode = #tpu.pipeline_mode<synchronous>, transform_indices = @transform_1, window_bounds = array<i64: 16, 1>}, {pipeline_mode = #tpu.pipeline_mode<synchronous>, transform_indices = @transform_2, window_bounds = array<i64: 16, 1>}, {pipeline_mode = #tpu.pipeline_mode<synchronous>, transform_indices = @transform_3, window_bounds = array<i64: 16, 16, 144>}, {pipeline_mode = #tpu.pipeline_mode<synchronous>, transform_indices = @transform_4, window_bounds = array<i64: 16, 16, 144>}, {pipeline_mode = #tpu.pipeline_mode<synchronous>, transform_indices = @transform_5, window_bounds = array<i64: 16, 1>}, {pipeline_mode = #tpu.pipeline_mode<synchronous>, transform_indices = @transform_6, window_bounds = array<i64: 16, 16>}, {pipeline_mode = #tpu.pipeline_mode<synchronous>, transform_indices = @transform_7, window_bounds = array<i64: 16, 1>}, {pipeline_mode = #tpu.pipeline_mode<synchronous>, transform_indices = @transform_8, window_bounds = array<i64: 16, 1>}, {pipeline_mode = #tpu.pipeline_mode<synchronous>, transform_indices = @transform_9, window_bounds = array<i64: 16, 1>}, {pipeline_mode = #tpu.pipeline_mode<synchronous>, transform_indices = @transform_10, window_bounds = array<i64: 32, 16>}, {pipeline_mode = #tpu.pipeline_mode<synchronous>, transform_indices = @transform_11, window_bounds = array<i64: 32, 1>}, {pipeline_mode = #tpu.pipeline_mode<synchronous>, transform_indices = @transform_12, window_bounds = array<i64: 16, 32>}, {pipeline_mode = #tpu.pipeline_mode<synchronous>, transform_indices = @transform_13, window_bounds = array<i64: 16, 1>}, {pipeline_mode = #tpu.pipeline_mode<synchronous>, transform_indices = @transform_14, window_bounds = array<i64: 256, 144>}, {pipeline_mode = #tpu.pipeline_mode<synchronous>, transform_indices = @transform_15, window_bounds = array<i64: 256, 144>}, {pipeline_mode = #tpu.pipeline_mode<synchronous>, transform_indices = @transform_16, window_bounds = array<i64: 144, 256>}, {pipeline_mode = #tpu.pipeline_mode<synchronous>, transform_indices = @transform_17, window_bounds = array<i64: 144, 256>}, {transform_indices = @transform_18, window_bounds = array<i64: 1, 16, 256>}]} {
    %c0 = arith.constant 0 : index
    %c0_0 = arith.constant 0 : index
    %c0_1 = arith.constant 0 : index
    %0 = vector.load %arg1[%c0, %c0_0, %c0_1] : memref<1x16x256xf32, #tpu.memory_space<vmem>>, vector<1x16x256xf32>
    %1 = vector.shape_cast %0 : vector<1x16x256xf32> to vector<16x256xf32>
    %c0_2 = arith.constant 0 : index
    %c0_3 = arith.constant 0 : index
    %2 = vector.load %arg2[%c0_2, %c0_3] : memref<16x1xf32, #tpu.memory_space<vmem>>, vector<16x1xf32>
    %c0_4 = arith.constant 0 : index
    %c0_5 = arith.constant 0 : index
    %3 = vector.load %arg3[%c0_4, %c0_5] : memref<16x1xf32, #tpu.memory_space<vmem>>, vector<16x1xf32>
    %cst = arith.constant dense<0.000000e+00> : vector<16xf32>
    %4 = vector.multi_reduction <add>, %1, %cst [1] : vector<16x256xf32> to vector<16xf32>
    %5 = vector.shape_cast %4 : vector<16xf32> to vector<16x1xf32>
    %cst_6 = arith.constant 2.560000e+02 : f32
    %6 = vector.broadcast %cst_6 : f32 to vector<16x1xf32>
    %7 = arith.divf %5, %6 : vector<16x1xf32>
    %8 = vector.broadcast %7 : vector<16x1xf32> to vector<16x256xf32>
    %9 = arith.subf %1, %8 : vector<16x256xf32>
    %10 = arith.mulf %9, %9 : vector<16x256xf32>
    %cst_7 = arith.constant dense<0.000000e+00> : vector<16xf32>
    %11 = vector.multi_reduction <add>, %10, %cst_7 [1] : vector<16x256xf32> to vector<16xf32>
    %12 = vector.shape_cast %11 : vector<16xf32> to vector<16x1xf32>
    %cst_8 = arith.constant 2.560000e+02 : f32
    %13 = vector.broadcast %cst_8 : f32 to vector<16x1xf32>
    %14 = arith.divf %12, %13 : vector<16x1xf32>
    %cst_9 = arith.constant 9.99999997E-7 : f32
    %15 = vector.broadcast %cst_9 : f32 to vector<16x1xf32>
    %16 = arith.addf %14, %15 : vector<16x1xf32>
    %17 = math.rsqrt %16 : vector<16x1xf32>
    %18 = vector.broadcast %17 : vector<16x1xf32> to vector<16x256xf32>
    %19 = arith.mulf %9, %18 : vector<16x256xf32>
    %20 = vector.broadcast %2 : vector<16x1xf32> to vector<16x256xf32>
    %21 = arith.mulf %19, %20 : vector<16x256xf32>
    %22 = vector.broadcast %3 : vector<16x1xf32> to vector<16x256xf32>
    %23 = arith.addf %21, %22 : vector<16x256xf32>
    %c0_10 = arith.constant 0 : index
    %c0_11 = arith.constant 0 : index
    %24 = vector.load %arg15[%c0_10, %c0_11] : memref<256x144xf32, #tpu.memory_space<vmem>>, vector<256x144xf32>
    %cst_12 = arith.constant dense<0.000000e+00> : vector<16x144xf32>
    %25 = tpu.matmul %23, %24, %cst_12 {dimension_numbers = #tpu.dot_dimension_numbers<[1], [0], [0], [1], [0, 0, 1, 1], [], []>} : vector<16x256xf32>, vector<256x144xf32>, vector<16x144xf32> -> vector<16x144xf32>
    %c0_13 = arith.constant 0 : index
    %c0_14 = arith.constant 0 : index
    %26 = vector.load %arg16[%c0_13, %c0_14] : memref<256x144xf32, #tpu.memory_space<vmem>>, vector<256x144xf32>
    %cst_15 = arith.constant dense<0.000000e+00> : vector<16x144xf32>
    %27 = tpu.matmul %23, %26, %cst_15 {dimension_numbers = #tpu.dot_dimension_numbers<[1], [0], [0], [1], [0, 0, 1, 1], [], []>} : vector<16x256xf32>, vector<256x144xf32>, vector<16x144xf32> -> vector<16x144xf32>
    %c0_16 = arith.constant 0 : index
    %c0_17 = arith.constant 0 : index
    %c0_18 = arith.constant 0 : index
    %28 = vector.load %arg4[%c0_16, %c0_17, %c0_18] : memref<16x16x144xf32, #tpu.memory_space<vmem>>, vector<16x16x144xf32>
    %c0_19 = arith.constant 0 : index
    %c0_20 = arith.constant 0 : index
    %c0_21 = arith.constant 0 : index
    %29 = vector.load %arg5[%c0_19, %c0_20, %c0_21] : memref<16x16x144xf32, #tpu.memory_space<vmem>>, vector<16x16x144xf32>
    %30 = vector.shape_cast %25 : vector<16x144xf32> to vector<16x1x144xf32>
    %31 = vector.shape_cast %27 : vector<16x144xf32> to vector<16x1x144xf32>
    %32 = vector.broadcast %30 : vector<16x1x144xf32> to vector<16x16x144xf32>
    %33 = arith.mulf %32, %28 : vector<16x16x144xf32>
    %34 = vector.broadcast %31 : vector<16x1x144xf32> to vector<16x16x144xf32>
    %35 = arith.mulf %34, %29 : vector<16x16x144xf32>
    %36 = arith.subf %33, %35 : vector<16x16x144xf32>
    %cst_22 = arith.constant dense<0.000000e+00> : vector<16x144xf32>
    %37 = vector.multi_reduction <add>, %36, %cst_22 [0] : vector<16x16x144xf32> to vector<16x144xf32>
    %38 = vector.broadcast %30 : vector<16x1x144xf32> to vector<16x16x144xf32>
    %39 = arith.mulf %38, %29 : vector<16x16x144xf32>
    %40 = vector.broadcast %31 : vector<16x1x144xf32> to vector<16x16x144xf32>
    %41 = arith.mulf %40, %28 : vector<16x16x144xf32>
    %42 = arith.addf %39, %41 : vector<16x16x144xf32>
    %cst_23 = arith.constant dense<0.000000e+00> : vector<16x144xf32>
    %43 = vector.multi_reduction <add>, %42, %cst_23 [0] : vector<16x16x144xf32> to vector<16x144xf32>
    %c0_24 = arith.constant 0 : index
    %c0_25 = arith.constant 0 : index
    %44 = vector.load %arg17[%c0_24, %c0_25] : memref<144x256xf32, #tpu.memory_space<vmem>>, vector<144x256xf32>
    %cst_26 = arith.constant dense<0.000000e+00> : vector<16x256xf32>
    %45 = tpu.matmul %37, %44, %cst_26 {dimension_numbers = #tpu.dot_dimension_numbers<[1], [0], [0], [1], [0, 0, 1, 1], [], []>} : vector<16x144xf32>, vector<144x256xf32>, vector<16x256xf32> -> vector<16x256xf32>
    %c0_27 = arith.constant 0 : index
    %c0_28 = arith.constant 0 : index
    %46 = vector.load %arg18[%c0_27, %c0_28] : memref<144x256xf32, #tpu.memory_space<vmem>>, vector<144x256xf32>
    %cst_29 = arith.constant dense<0.000000e+00> : vector<16x256xf32>
    %47 = tpu.matmul %43, %46, %cst_29 {dimension_numbers = #tpu.dot_dimension_numbers<[1], [0], [0], [1], [0, 0, 1, 1], [], []>} : vector<16x144xf32>, vector<144x256xf32>, vector<16x256xf32> -> vector<16x256xf32>
    %48 = arith.addf %45, %47 : vector<16x256xf32>
    %c0_30 = arith.constant 0 : index
    %c0_31 = arith.constant 0 : index
    %49 = vector.load %arg6[%c0_30, %c0_31] : memref<16x1xf32, #tpu.memory_space<vmem>>, vector<16x1xf32>
    %50 = vector.broadcast %49 : vector<16x1xf32> to vector<16x256xf32>
    %51 = arith.addf %48, %50 : vector<16x256xf32>
    %c0_32 = arith.constant 0 : index
    %c0_33 = arith.constant 0 : index
    %52 = vector.load %arg7[%c0_32, %c0_33] : memref<16x16xf32, #tpu.memory_space<vmem>>, vector<16x16xf32>
    %cst_34 = arith.constant dense<0.000000e+00> : vector<16x256xf32>
    %53 = tpu.matmul %52, %23, %cst_34 {dimension_numbers = #tpu.dot_dimension_numbers<[1], [0], [0], [1], [0, 0, 1, 1], [], []>} : vector<16x16xf32>, vector<16x256xf32>, vector<16x256xf32> -> vector<16x256xf32>
    %54 = arith.addf %51, %53 : vector<16x256xf32>
    %c0_35 = arith.constant 0 : index
    %c0_36 = arith.constant 0 : index
    %55 = vector.load %arg8[%c0_35, %c0_36] : memref<16x1xf32, #tpu.memory_space<vmem>>, vector<16x1xf32>
    %56 = vector.broadcast %55 : vector<16x1xf32> to vector<16x256xf32>
    %57 = arith.addf %54, %56 : vector<16x256xf32>
    %cst_37 = arith.constant 5.000000e-01 : f32
    %58 = vector.broadcast %cst_37 : f32 to vector<16x256xf32>
    %59 = arith.mulf %58, %57 : vector<16x256xf32>
    %cst_38 = arith.constant 0.707106769 : f32
    %60 = vector.broadcast %cst_38 : f32 to vector<16x256xf32>
    %61 = arith.mulf %57, %60 : vector<16x256xf32>
    %cst_39 = arith.constant 0.000000e+00 : f32
    %62 = vector.broadcast %cst_39 : f32 to vector<16x256xf32>
    %63 = arith.cmpf oge, %61, %62 : vector<16x256xf32>
    %cst_40 = arith.constant 1.000000e+00 : f32
    %cst_41 = arith.constant -1.000000e+00 : f32
    %64 = vector.broadcast %cst_40 : f32 to vector<16x256xf32>
    %65 = vector.broadcast %cst_41 : f32 to vector<16x256xf32>
    %66 = arith.select %63, %64, %65 : vector<16x256xi1>, vector<16x256xf32>
    %67 = math.absf %61 : vector<16x256xf32>
    %cst_42 = arith.constant 0.327591091 : f32
    %68 = vector.broadcast %cst_42 : f32 to vector<16x256xf32>
    %69 = arith.mulf %68, %67 : vector<16x256xf32>
    %cst_43 = arith.constant 1.000000e+00 : f32
    %70 = vector.broadcast %cst_43 : f32 to vector<16x256xf32>
    %71 = arith.addf %70, %69 : vector<16x256xf32>
    %cst_44 = arith.constant 1.000000e+00 : f32
    %72 = vector.broadcast %cst_44 : f32 to vector<16x256xf32>
    %73 = arith.divf %72, %71 : vector<16x256xf32>
    %cst_45 = arith.constant 1.06140542 : f32
    %74 = vector.broadcast %cst_45 : f32 to vector<16x256xf32>
    %75 = arith.mulf %74, %73 : vector<16x256xf32>
    %cst_46 = arith.constant -1.45315206 : f32
    %76 = vector.broadcast %cst_46 : f32 to vector<16x256xf32>
    %77 = arith.addf %75, %76 : vector<16x256xf32>
    %78 = arith.mulf %77, %73 : vector<16x256xf32>
    %cst_47 = arith.constant 1.42141378 : f32
    %79 = vector.broadcast %cst_47 : f32 to vector<16x256xf32>
    %80 = arith.addf %78, %79 : vector<16x256xf32>
    %81 = arith.mulf %80, %73 : vector<16x256xf32>
    %cst_48 = arith.constant -0.284496725 : f32
    %82 = vector.broadcast %cst_48 : f32 to vector<16x256xf32>
    %83 = arith.addf %81, %82 : vector<16x256xf32>
    %84 = arith.mulf %83, %73 : vector<16x256xf32>
    %cst_49 = arith.constant 0.254829586 : f32
    %85 = vector.broadcast %cst_49 : f32 to vector<16x256xf32>
    %86 = arith.addf %84, %85 : vector<16x256xf32>
    %87 = arith.mulf %86, %73 : vector<16x256xf32>
    %cst_50 = arith.constant 0.000000e+00 : f32
    %88 = vector.broadcast %cst_50 : f32 to vector<16x256xf32>
    %89 = arith.subf %88, %67 : vector<16x256xf32>
    %90 = arith.mulf %89, %67 : vector<16x256xf32>
    %91 = math.exp %90 : vector<16x256xf32>
    %92 = arith.mulf %87, %91 : vector<16x256xf32>
    %cst_51 = arith.constant 1.000000e+00 : f32
    %93 = vector.broadcast %cst_51 : f32 to vector<16x256xf32>
    %94 = arith.subf %93, %92 : vector<16x256xf32>
    %95 = arith.mulf %66, %94 : vector<16x256xf32>
    %cst_52 = arith.constant 1.000000e+00 : f32
    %96 = vector.broadcast %cst_52 : f32 to vector<16x256xf32>
    %97 = arith.addf %96, %95 : vector<16x256xf32>
    %98 = arith.mulf %59, %97 : vector<16x256xf32>
    %c0_53 = arith.constant 0 : index
    %c0_54 = arith.constant 0 : index
    %99 = vector.load %arg9[%c0_53, %c0_54] : memref<16x1xf32, #tpu.memory_space<vmem>>, vector<16x1xf32>
    %c0_55 = arith.constant 0 : index
    %c0_56 = arith.constant 0 : index
    %100 = vector.load %arg10[%c0_55, %c0_56] : memref<16x1xf32, #tpu.memory_space<vmem>>, vector<16x1xf32>
    %cst_57 = arith.constant dense<0.000000e+00> : vector<16xf32>
    %101 = vector.multi_reduction <add>, %98, %cst_57 [1] : vector<16x256xf32> to vector<16xf32>
    %102 = vector.shape_cast %101 : vector<16xf32> to vector<16x1xf32>
    %cst_58 = arith.constant 2.560000e+02 : f32
    %103 = vector.broadcast %cst_58 : f32 to vector<16x1xf32>
    %104 = arith.divf %102, %103 : vector<16x1xf32>
    %105 = vector.broadcast %104 : vector<16x1xf32> to vector<16x256xf32>
    %106 = arith.subf %98, %105 : vector<16x256xf32>
    %107 = arith.mulf %106, %106 : vector<16x256xf32>
    %cst_59 = arith.constant dense<0.000000e+00> : vector<16xf32>
    %108 = vector.multi_reduction <add>, %107, %cst_59 [1] : vector<16x256xf32> to vector<16xf32>
    %109 = vector.shape_cast %108 : vector<16xf32> to vector<16x1xf32>
    %cst_60 = arith.constant 2.560000e+02 : f32
    %110 = vector.broadcast %cst_60 : f32 to vector<16x1xf32>
    %111 = arith.divf %109, %110 : vector<16x1xf32>
    %cst_61 = arith.constant 9.99999997E-7 : f32
    %112 = vector.broadcast %cst_61 : f32 to vector<16x1xf32>
    %113 = arith.addf %111, %112 : vector<16x1xf32>
    %114 = math.rsqrt %113 : vector<16x1xf32>
    %115 = vector.broadcast %114 : vector<16x1xf32> to vector<16x256xf32>
    %116 = arith.mulf %106, %115 : vector<16x256xf32>
    %117 = vector.broadcast %99 : vector<16x1xf32> to vector<16x256xf32>
    %118 = arith.mulf %116, %117 : vector<16x256xf32>
    %119 = vector.broadcast %100 : vector<16x1xf32> to vector<16x256xf32>
    %120 = arith.addf %118, %119 : vector<16x256xf32>
    %c0_62 = arith.constant 0 : index
    %c0_63 = arith.constant 0 : index
    %121 = vector.load %arg11[%c0_62, %c0_63] : memref<32x16xf32, #tpu.memory_space<vmem>>, vector<32x16xf32>
    %cst_64 = arith.constant dense<0.000000e+00> : vector<32x256xf32>
    %122 = tpu.matmul %121, %120, %cst_64 {dimension_numbers = #tpu.dot_dimension_numbers<[1], [0], [0], [1], [0, 0, 1, 1], [], []>} : vector<32x16xf32>, vector<16x256xf32>, vector<32x256xf32> -> vector<32x256xf32>
    %c0_65 = arith.constant 0 : index
    %c0_66 = arith.constant 0 : index
    %123 = vector.load %arg12[%c0_65, %c0_66] : memref<32x1xf32, #tpu.memory_space<vmem>>, vector<32x1xf32>
    %124 = vector.broadcast %123 : vector<32x1xf32> to vector<32x256xf32>
    %125 = arith.addf %122, %124 : vector<32x256xf32>
    %cst_67 = arith.constant 5.000000e-01 : f32
    %126 = vector.broadcast %cst_67 : f32 to vector<32x256xf32>
    %127 = arith.mulf %126, %125 : vector<32x256xf32>
    %cst_68 = arith.constant 0.707106769 : f32
    %128 = vector.broadcast %cst_68 : f32 to vector<32x256xf32>
    %129 = arith.mulf %125, %128 : vector<32x256xf32>
    %cst_69 = arith.constant 0.000000e+00 : f32
    %130 = vector.broadcast %cst_69 : f32 to vector<32x256xf32>
    %131 = arith.cmpf oge, %129, %130 : vector<32x256xf32>
    %cst_70 = arith.constant 1.000000e+00 : f32
    %cst_71 = arith.constant -1.000000e+00 : f32
    %132 = vector.broadcast %cst_70 : f32 to vector<32x256xf32>
    %133 = vector.broadcast %cst_71 : f32 to vector<32x256xf32>
    %134 = arith.select %131, %132, %133 : vector<32x256xi1>, vector<32x256xf32>
    %135 = math.absf %129 : vector<32x256xf32>
    %cst_72 = arith.constant 0.327591091 : f32
    %136 = vector.broadcast %cst_72 : f32 to vector<32x256xf32>
    %137 = arith.mulf %136, %135 : vector<32x256xf32>
    %cst_73 = arith.constant 1.000000e+00 : f32
    %138 = vector.broadcast %cst_73 : f32 to vector<32x256xf32>
    %139 = arith.addf %138, %137 : vector<32x256xf32>
    %cst_74 = arith.constant 1.000000e+00 : f32
    %140 = vector.broadcast %cst_74 : f32 to vector<32x256xf32>
    %141 = arith.divf %140, %139 : vector<32x256xf32>
    %cst_75 = arith.constant 1.06140542 : f32
    %142 = vector.broadcast %cst_75 : f32 to vector<32x256xf32>
    %143 = arith.mulf %142, %141 : vector<32x256xf32>
    %cst_76 = arith.constant -1.45315206 : f32
    %144 = vector.broadcast %cst_76 : f32 to vector<32x256xf32>
    %145 = arith.addf %143, %144 : vector<32x256xf32>
    %146 = arith.mulf %145, %141 : vector<32x256xf32>
    %cst_77 = arith.constant 1.42141378 : f32
    %147 = vector.broadcast %cst_77 : f32 to vector<32x256xf32>
    %148 = arith.addf %146, %147 : vector<32x256xf32>
    %149 = arith.mulf %148, %141 : vector<32x256xf32>
    %cst_78 = arith.constant -0.284496725 : f32
    %150 = vector.broadcast %cst_78 : f32 to vector<32x256xf32>
    %151 = arith.addf %149, %150 : vector<32x256xf32>
    %152 = arith.mulf %151, %141 : vector<32x256xf32>
    %cst_79 = arith.constant 0.254829586 : f32
    %153 = vector.broadcast %cst_79 : f32 to vector<32x256xf32>
    %154 = arith.addf %152, %153 : vector<32x256xf32>
    %155 = arith.mulf %154, %141 : vector<32x256xf32>
    %cst_80 = arith.constant 0.000000e+00 : f32
    %156 = vector.broadcast %cst_80 : f32 to vector<32x256xf32>
    %157 = arith.subf %156, %135 : vector<32x256xf32>
    %158 = arith.mulf %157, %135 : vector<32x256xf32>
    %159 = math.exp %158 : vector<32x256xf32>
    %160 = arith.mulf %155, %159 : vector<32x256xf32>
    %cst_81 = arith.constant 1.000000e+00 : f32
    %161 = vector.broadcast %cst_81 : f32 to vector<32x256xf32>
    %162 = arith.subf %161, %160 : vector<32x256xf32>
    %163 = arith.mulf %134, %162 : vector<32x256xf32>
    %cst_82 = arith.constant 1.000000e+00 : f32
    %164 = vector.broadcast %cst_82 : f32 to vector<32x256xf32>
    %165 = arith.addf %164, %163 : vector<32x256xf32>
    %166 = arith.mulf %127, %165 : vector<32x256xf32>
    %c0_83 = arith.constant 0 : index
    %c0_84 = arith.constant 0 : index
    %167 = vector.load %arg13[%c0_83, %c0_84] : memref<16x32xf32, #tpu.memory_space<vmem>>, vector<16x32xf32>
    %cst_85 = arith.constant dense<0.000000e+00> : vector<16x256xf32>
    %168 = tpu.matmul %167, %166, %cst_85 {dimension_numbers = #tpu.dot_dimension_numbers<[1], [0], [0], [1], [0, 0, 1, 1], [], []>} : vector<16x32xf32>, vector<32x256xf32>, vector<16x256xf32> -> vector<16x256xf32>
    %c0_86 = arith.constant 0 : index
    %c0_87 = arith.constant 0 : index
    %169 = vector.load %arg14[%c0_86, %c0_87] : memref<16x1xf32, #tpu.memory_space<vmem>>, vector<16x1xf32>
    %170 = vector.broadcast %169 : vector<16x1xf32> to vector<16x256xf32>
    %171 = arith.addf %168, %170 : vector<16x256xf32>
    %172 = arith.addf %171, %23 : vector<16x256xf32>
    %c0_88 = arith.constant 0 : index
    %c0_89 = arith.constant 0 : index
    %c0_90 = arith.constant 0 : index
    %173 = vector.load %arg19[%c0_88, %c0_89, %c0_90] : memref<1x16x256xf32, #tpu.memory_space<vmem>>, vector<1x16x256xf32>
    %174 = vector.shape_cast %173 : vector<1x16x256xf32> to vector<16x256xf32>
    %175 = vector.shape_cast %172 : vector<16x256xf32> to vector<1x16x256xf32>
    tpu.vector_store %arg19[%c0_88, %c0_89, %c0_90], %175 {strides = array<i32>} : memref<1x16x256xf32, #tpu.memory_space<vmem>>, vector<1x16x256xf32>,
    return
  }
  func.func @transform_0(%arg0: i32) -> (i32, i32, i32) {
    %c0_i32 = arith.constant 0 : i32
    %c0_i32_0 = arith.constant 0 : i32
    %c0_i32_1 = arith.constant 0 : i32
    return %arg0, %c0_i32, %c0_i32_0 : i32, i32, i32
  }
  func.func @transform_1(%arg0: i32) -> (i32, i32) {
    %c0_i32 = arith.constant 0 : i32
    %c0_i32_0 = arith.constant 0 : i32
    %c0_i32_1 = arith.constant 0 : i32
    return %c0_i32, %c0_i32_0 : i32, i32
  }
  func.func @transform_2(%arg0: i32) -> (i32, i32) {
    %c0_i32 = arith.constant 0 : i32
    %c0_i32_0 = arith.constant 0 : i32
    %c0_i32_1 = arith.constant 0 : i32
    return %c0_i32, %c0_i32_0 : i32, i32
  }
  func.func @transform_3(%arg0: i32) -> (i32, i32, i32) {
    %c0_i32 = arith.constant 0 : i32
    %c0_i32_0 = arith.constant 0 : i32
    %c0_i32_1 = arith.constant 0 : i32
    %c0_i32_2 = arith.constant 0 : i32
    return %c0_i32, %c0_i32_0, %c0_i32_1 : i32, i32, i32
  }
  func.func @transform_4(%arg0: i32) -> (i32, i32, i32) {
    %c0_i32 = arith.constant 0 : i32
    %c0_i32_0 = arith.constant 0 : i32
    %c0_i32_1 = arith.constant 0 : i32
    %c0_i32_2 = arith.constant 0 : i32
    return %c0_i32, %c0_i32_0, %c0_i32_1 : i32, i32, i32
  }
  func.func @transform_5(%arg0: i32) -> (i32, i32) {
    %c0_i32 = arith.constant 0 : i32
    %c0_i32_0 = arith.constant 0 : i32
    %c0_i32_1 = arith.constant 0 : i32
    return %c0_i32, %c0_i32_0 : i32, i32
  }
  func.func @transform_6(%arg0: i32) -> (i32, i32) {
    %c0_i32 = arith.constant 0 : i32
    %c0_i32_0 = arith.constant 0 : i32
    %c0_i32_1 = arith.constant 0 : i32
    return %c0_i32, %c0_i32_0 : i32, i32
  }
  func.func @transform_7(%arg0: i32) -> (i32, i32) {
    %c0_i32 = arith.constant 0 : i32
    %c0_i32_0 = arith.constant 0 : i32
    %c0_i32_1 = arith.constant 0 : i32
    return %c0_i32, %c0_i32_0 : i32, i32
  }
  func.func @transform_8(%arg0: i32) -> (i32, i32) {
    %c0_i32 = arith.constant 0 : i32
    %c0_i32_0 = arith.constant 0 : i32
    %c0_i32_1 = arith.constant 0 : i32
    return %c0_i32, %c0_i32_0 : i32, i32
  }
  func.func @transform_9(%arg0: i32) -> (i32, i32) {
    %c0_i32 = arith.constant 0 : i32
    %c0_i32_0 = arith.constant 0 : i32
    %c0_i32_1 = arith.constant 0 : i32
    return %c0_i32, %c0_i32_0 : i32, i32
  }
  func.func @transform_10(%arg0: i32) -> (i32, i32) {
    %c0_i32 = arith.constant 0 : i32
    %c0_i32_0 = arith.constant 0 : i32
    %c0_i32_1 = arith.constant 0 : i32
    return %c0_i32, %c0_i32_0 : i32, i32
  }
  func.func @transform_11(%arg0: i32) -> (i32, i32) {
    %c0_i32 = arith.constant 0 : i32
    %c0_i32_0 = arith.constant 0 : i32
    %c0_i32_1 = arith.constant 0 : i32
    return %c0_i32, %c0_i32_0 : i32, i32
  }
  func.func @transform_12(%arg0: i32) -> (i32, i32) {
    %c0_i32 = arith.constant 0 : i32
    %c0_i32_0 = arith.constant 0 : i32
    %c0_i32_1 = arith.constant 0 : i32
    return %c0_i32, %c0_i32_0 : i32, i32
  }
  func.func @transform_13(%arg0: i32) -> (i32, i32) {
    %c0_i32 = arith.constant 0 : i32
    %c0_i32_0 = arith.constant 0 : i32
    %c0_i32_1 = arith.constant 0 : i32
    return %c0_i32, %c0_i32_0 : i32, i32
  }
  func.func @transform_14(%arg0: i32) -> (i32, i32) {
    %c0_i32 = arith.constant 0 : i32
    %c0_i32_0 = arith.constant 0 : i32
    %c0_i32_1 = arith.constant 0 : i32
    return %c0_i32, %c0_i32_0 : i32, i32
  }
  func.func @transform_15(%arg0: i32) -> (i32, i32) {
    %c0_i32 = arith.constant 0 : i32
    %c0_i32_0 = arith.constant 0 : i32
    %c0_i32_1 = arith.constant 0 : i32
    return %c0_i32, %c0_i32_0 : i32, i32
  }
  func.func @transform_16(%arg0: i32) -> (i32, i32) {
    %c0_i32 = arith.constant 0 : i32
    %c0_i32_0 = arith.constant 0 : i32
    %c0_i32_1 = arith.constant 0 : i32
    return %c0_i32, %c0_i32_0 : i32, i32
  }
  func.func @transform_17(%arg0: i32) -> (i32, i32) {
    %c0_i32 = arith.constant 0 : i32
    %c0_i32_0 = arith.constant 0 : i32
    %c0_i32_1 = arith.constant 0 : i32
    return %c0_i32, %c0_i32_0 : i32, i32
  }
  func.func @transform_18(%arg0: i32) -> (i32, i32, i32) {
    %c0_i32 = arith.constant 0 : i32
    %c0_i32_0 = arith.constant 0 : i32
    %c0_i32_1 = arith.constant 0 : i32
    return %arg0, %c0_i32, %c0_i32_0 : i32, i32, i32
  }
}

</mosaic_0001>

<llo_original>
// kernel: sfno_forward.7
$region0: #{sfno_forward.7}
  #allocation0 [shape = 'u32[]', space=smem, size = 0x4, offset = 0x4, fixed_abs, tag = 'smem constant byte address 0x4 - core index']
  #allocation1 [shape = 'u32[144,128]{1,0:T(1,128)}', space=vmem, size = 0x12000, scoped, tag = 'internal scratch']
  %s0 = inlined_call_operand.vmem [shape: f32[2,16,256], index: 0, kind: input, shape index: {}]
  %s1 = inlined_call_operand.vmem [shape: f32[2,3,256], index: 1, kind: input, shape index: {}]
  %s2 = inlined_call_operand.vmem [shape: f32[16,16], index: 2, kind: input, shape index: {}]
  %s3 = inlined_call_operand.vmem [shape: f32[16,3], index: 3, kind: input, shape index: {}]
  %s4 = inlined_call_operand.vmem [shape: f32[16,1], index: 4, kind: input, shape index: {}]
  %s5 = inlined_call_operand.vmem [shape: f32[3,16], index: 5, kind: input, shape index: {}]
  %s6 = inlined_call_operand.vmem [shape: f32[2,3,256], index: 6, kind: output, shape index: {}]
  %s7 = sld [smem:[#allocation0]]
  $region57: #{sfno_forward.7} parent=0
    _
  %s9 = ssub.s32 1, %s7
  %s10 = scalar_select 0, %s9, %s7
  loop: start=0, step=1, limit=4
  $region2: #{sfno_forward.7} parent=0 // loop_pre_header
    _
  $region3: #{sfno_forward.7} parent=0 // loop_header
    %s12 = sphi 0, %s16
    %p13 = scmp.ge.s32.totalorder %s12, 4
    %s22 = sphi 0, %s24
    %s25 = sphi 0, %s22
    %s26 = sphi 0, %s25
    %s42 = sphi 0, %s26
    %s48 = sphi 0, %s50
    %s51 = sphi 0, %s48
    %s52 = sphi 0, %s51
    %s68 = sphi 0, %s52
    %s72 = sphi 0, %s72
    %s74 = sphi 0, %s72
    %s75 = sphi 0, %s74
    %s89 = sphi 0, %s75
    %s93 = sphi 0, %s93
    %s95 = sphi 0, %s93
    %s96 = sphi 0, %s95
    %s110 = sphi 0, %s96
    %s114 = sphi 0, %s114
    %s116 = sphi 0, %s114
    %s117 = sphi 0, %s116
    %s131 = sphi 0, %s117
    %s135 = sphi 0, %s135
    %s137 = sphi 0, %s135
    %s138 = sphi 0, %s137
    %s152 = sphi 0, %s138
    %s158 = sphi 0, %s160
    %s161 = sphi 0, %s158
    %s162 = sphi 0, %s161
    %s178 = sphi 0, %s162
  $region4: #{sfno_forward.7} parent=0 // loop_header_branch
    %15 = sbr.rel (%p13) target = $region8
  $region5: #{sfno_forward.7} parent=0 // loop_body
    %s17 = ssub.s32 %s12, 1
    %s18 = ssub.s32 %s12, 2
    %s19 = sadd.s32 %s12, 1
    %s20 = ssub.s32 %s12, %s19
    %p21 = scmp.eq.s32.totalorder %s20, 0
    %s23 = sadd.s32 %s22, 1
    %s24 = scalar_select %p21, %s22, %s23
    %p27 = pneg %p21
    %p28 = scmp.eq.s32.totalorder %s12, 1
    %p29 = por %p27, %p28
    %p30 = scmp.ne.s32.totalorder %s22, %s25
    %p31 = scmp.eq.s32.totalorder %s12, 0
    %p32 = por %p30, %p31
    %p33 = scmp.ne.s32.totalorder %s22, %s25
    %p34 = scmp.eq.s32.totalorder %s17, 1
    %p35 = por %p33, %p34
    %p36 = scmp.ne.s32.totalorder %s25, %s26
    %p37 = scmp.eq.s32.totalorder %s17, 0
    %p38 = por %p36, %p37
    %p39 = scmp.ne.s32.totalorder %s25, %s26
    %p40 = scmp.eq.s32.totalorder %s18, 1
    %p41 = por %p39, %p40
    %p43 = scmp.ne.s32.totalorder %s26, %s42
    %p44 = scmp.eq.s32.totalorder %s18, 0
    %p45 = por %p43, %p44
    %s46 = ssub.s32 %s12, %s19
    %p47 = scmp.eq.s32.totalorder %s46, 0
    %s49 = sadd.s32 %s48, 1
    %s50 = scalar_select %p47, %s48, %s49
    %p53 = pneg %p47
    %p54 = scmp.eq.s32.totalorder %s12, 1
    %p55 = por %p53, %p54
    %p56 = scmp.ne.s32.totalorder %s48, %s51
    %p57 = scmp.eq.s32.totalorder %s12, 0
    %p58 = por %p56, %p57
    %p59 = scmp.ne.s32.totalorder %s48, %s51
    %p60 = scmp.eq.s32.totalorder %s17, 1
    %p61 = por %p59, %p60
    %p62 = scmp.ne.s32.totalorder %s51, %s52
    %p63 = scmp.eq.s32.totalorder %s17, 0
    %p64 = por %p62, %p63
    %p65 = scmp.ne.s32.totalorder %s51, %s52
    %p66 = scmp.eq.s32.totalorder %s18, 1
    %p67 = por %p65, %p66
    %p69 = scmp.ne.s32.totalorder %s52, %s68
    %p70 = scmp.eq.s32.totalorder %s18, 0
    %p71 = por %p69, %p70
    %s73 = sadd.s32 %s72, 1
    %p76 = scmp.eq.s32.totalorder %s12, 1
    %p77 = scmp.ne.s32.totalorder %s72, %s74
    %p78 = scmp.eq.s32.totalorder %s12, 0
    %p79 = por %p77, %p78
    %p80 = scmp.ne.s32.totalorder %s72, %s74
    %p81 = scmp.eq.s32.totalorder %s17, 1
    %p82 = por %p80, %p81
    %p83 = scmp.ne.s32.totalorder %s74, %s75
    %p84 = scmp.eq.s32.totalorder %s17, 0
    %p85 = por %p83, %p84
    %p86 = scmp.ne.s32.totalorder %s74, %s75
    %p87 = scmp.eq.s32.totalorder %s18, 1
    %p88 = por %p86, %p87
    %p90 = scmp.ne.s32.totalorder %s75, %s89
    %p91 = scmp.eq.s32.totalorder %s18, 0
    %p92 = por %p90, %p91
    %s94 = sadd.s32 %s93, 1
    %p97 = scmp.eq.s32.totalorder %s12, 1
    %p98 = scmp.ne.s32.totalorder %s93, %s95
    %p99 = scmp.eq.s32.totalorder %s12, 0
    %p100 = por %p98, %p99
    %p101 = scmp.ne.s32.totalorder %s93, %s95
    %p102 = scmp.eq.s32.totalorder %s17, 1
    %p103 = por %p101, %p102
    %p104 = scmp.ne.s32.totalorder %s95, %s96
    %p105 = scmp.eq.s32.totalorder %s17, 0
    %p106 = por %p104, %p105
    %p107 = scmp.ne.s32.totalorder %s95, %s96
    %p108 = scmp.eq.s32.totalorder %s18, 1
    %p109 = por %p107, %p108
    %p111 = scmp.ne.s32.totalorder %s96, %s110
    %p112 = scmp.eq.s32.totalorder %s18, 0
    %p113 = por %p111, %p112
    %s115 = sadd.s32 %s114, 1
    %p118 = scmp.eq.s32.totalorder %s12, 1
    %p119 = scmp.ne.s32.totalorder %s114, %s116
    %p120 = scmp.eq.s32.totalorder %s12, 0
    %p121 = por %p119, %p120
    %p122 = scmp.ne.s32.totalorder %s114, %s116
    %p123 = scmp.eq.s32.totalorder %s17, 1
    %p124 = por %p122, %p123
    %p125 = scmp.ne.s32.totalorder %s116, %s117
    %p126 = scmp.eq.s32.totalorder %s17, 0
    %p127 = por %p125, %p126
    %p128 = scmp.ne.s32.totalorder %s116, %s117
    %p129 = scmp.eq.s32.totalorder %s18, 1
    %p130 = por %p128, %p129
    %p132 = scmp.ne.s32.totalorder %s117, %s131
    %p133 = scmp.eq.s32.totalorder %s18, 0
    %p134 = por %p132, %p133
    %s136 = sadd.s32 %s135, 1
    %p139 = scmp.eq.s32.totalorder %s12, 1
    %p140 = scmp.ne.s32.totalorder %s135, %s137
    %p141 = scmp.eq.s32.totalorder %s12, 0
    %p142 = por %p140, %p141
    %p143 = scmp.ne.s32.totalorder %s135, %s137
    %p144 = scmp.eq.s32.totalorder %s17, 1
    %p145 = por %p143, %p144
    %p146 = scmp.ne.s32.totalorder %s137, %s138
    %p147 = scmp.eq.s32.totalorder %s17, 0
    %p148 = por %p146, %p147
    %p149 = scmp.ne.s32.totalorder %s137, %s138
    %p150 = scmp.eq.s32.totalorder %s18, 1
    %p151 = por %p149, %p150
    %p153 = scmp.ne.s32.totalorder %s138, %s152
    %p154 = scmp.eq.s32.totalorder %s18, 0
    %p155 = por %p153, %p154
    %s156 = ssub.s32 %s12, %s19
    %p157 = scmp.eq.s32.totalorder %s156, 0
    %s159 = sadd.s32 %s158, 1
    %s160 = scalar_select %p157, %s158, %s159
    %p163 = pneg %p157
    %p164 = scmp.eq.s32.totalorder %s12, 1
    %p165 = por %p163, %p164
    %p166 = scmp.ne.s32.totalorder %s158, %s161
    %p167 = scmp.eq.s32.totalorder %s12, 0
    %p168 = por %p166, %p167
    %p169 = scmp.ne.s32.totalorder %s158, %s161
    %p170 = scmp.eq.s32.totalorder %s17, 1
    %p171 = por %p169, %p170
    %p172 = scmp.ne.s32.totalorder %s161, %s162
    %p173 = scmp.eq.s32.totalorder %s17, 0
    %p174 = por %p172, %p173
    %p175 = scmp.ne.s32.totalorder %s161, %s162
    %p176 = scmp.eq.s32.totalorder %s18, 1
    %p177 = por %p175, %p176
    %p179 = scmp.ne.s32.totalorder %s162, %s178
    %p180 = scmp.eq.s32.totalorder %s18, 0
    %p181 = por %p179, %p180
    %p182 = scmp.le.s32.totalorder 1, %s12
    %p183 = scmp.lt.s32.totalorder %s12, 3
    %p184 = pnand %p182, %p183
    %p185 = pneg %p184
    // Predicated region
    $region9: #{sfno_forward.7} parent=5 // pred_check
      _
    $region10: #{sfno_forward.7} parent=5 // pred_check_branch
      %187 = sbr.rel (%p184) target = $region12
    $region11: #{sfno_forward.7} parent=5 // pred_region
      %s188 = ssub.s32 %s12, 1
      // Predicated region
      $region13: #{sfno_forward.7} parent=11 // pred_check
        %p189 = pneg %p85
      $region14: #{sfno_forward.7} parent=11 // pred_check_branch
        %191 = sbr.rel (%p189) target = $region16
      $region15: #{sfno_forward.7} parent=11 // pred_region
        _
      $region16: #{sfno_forward.7} parent=11 // pred_fallthru
        _
      // Predicated region
      $region17: #{sfno_forward.7} parent=11 // pred_check
        %p192 = pneg %p106
      $region18: #{sfno_forward.7} parent=11 // pred_check_branch
        %194 = sbr.rel (%p192) target = $region20
      $region19: #{sfno_forward.7} parent=11 // pred_region
        _
      $region20: #{sfno_forward.7} parent=11 // pred_fallthru
        _
      // Predicated region
      $region21: #{sfno_forward.7} parent=11 // pred_check
        %p195 = pneg %p127
      $region22: #{sfno_forward.7} parent=11 // pred_check_branch
        %197 = sbr.rel (%p195) target = $region24
      $region23: #{sfno_forward.7} parent=11 // pred_region
        _
      $region24: #{sfno_forward.7} parent=11 // pred_fallthru
        _
      // Predicated region
      $region25: #{sfno_forward.7} parent=11 // pred_check
        %p198 = pneg %p148
      $region26: #{sfno_forward.7} parent=11 // pred_check_branch
        %200 = sbr.rel (%p198) target = $region28
      $region27: #{sfno_forward.7} parent=11 // pred_region
        _
      $region28: #{sfno_forward.7} parent=11 // pred_fallthru
        _
    $region12: #{sfno_forward.7} parent=5 // pred_fallthru
      _
    %p201 = scmp.lt.s32.totalorder %s12, 2
    // Predicated region
    $region29: #{sfno_forward.7} parent=5 // pred_check
      %p202 = pneg %p201
    $region30: #{sfno_forward.7} parent=5 // pred_check_branch
      %204 = sbr.rel (%p202) target = $region32
    $region31: #{sfno_forward.7} parent=5 // pred_region
      // Predicated region
      $region33: #{sfno_forward.7} parent=31 // pred_check
        %p205 = pneg %p32
      $region34: #{sfno_forward.7} parent=31 // pred_check_branch
        %207 = sbr.rel (%p205) target = $region36
      $region35: #{sfno_forward.7} parent=31 // pred_region
        %p208 = scmp.lt.s32.totalorder %s12, 1
        %s209 = scalar_select %p208, %s12, 1
        %s210 = smul.addr %s209, 4
        %s211 = smul.addr %s210, 8
        %s212 = scalar_lea.vmem %s0, %s211
      $region36: #{sfno_forward.7} parent=31 // pred_fallthru
        _
      // Predicated region
      $region37: #{sfno_forward.7} parent=31 // pred_check
        %p213 = pneg %p58
      $region38: #{sfno_forward.7} parent=31 // pred_check_branch
        %215 = sbr.rel (%p213) target = $region40
      $region39: #{sfno_forward.7} parent=31 // pred_region
        %p216 = scmp.lt.s32.totalorder %s12, 1
        %s217 = scalar_select %p216, %s12, 1
        %s218 = smul.addr %s217, 2
        %s219 = smul.addr %s218, 4
        %s220 = scalar_lea.vmem %s1, %s219
      $region40: #{sfno_forward.7} parent=31 // pred_fallthru
        _
    $region32: #{sfno_forward.7} parent=5 // pred_fallthru
      _
    %p221 = scmp.le.s32.totalorder 1, %s12
    %p222 = scmp.lt.s32.totalorder %s12, 3
    %p223 = pnand %p221, %p222
    %p224 = pneg %p223
    // Predicated region
    $region41: #{sfno_forward.7} parent=5 // pred_check
      _
    $region42: #{sfno_forward.7} parent=5 // pred_check_branch
      %226 = sbr.rel (%p223) target = $region44
    $region43: #{sfno_forward.7} parent=5 // pred_region
      %s227 = ssub.s32 %s12, 1
      %p228 = scmp.lt.s32.totalorder %s17, 1
      %s229 = scalar_select %p228, %s17, 1
      %s230 = smul.addr %s229, 4
      %s231 = smul.addr %s230, 8
      %s232 = scalar_lea.vmem %s0, %s231
      %p233 = pneg %p38
      %p234 = pneg %p35
      %p235 = scmp.lt.s32.totalorder %s17, 1
      %s236 = scalar_select %p235, %s17, 1
      %s237 = smul.addr %s236, 2
      %s238 = smul.addr %s237, 4
      %s239 = scalar_lea.vmem %s1, %s238
      %p240 = pneg %p64
      %p241 = pneg %p61
      %p242 = pneg %p85
      %p243 = pneg %p82
      %p244 = pneg %p106
      %p245 = pneg %p103
      %p246 = pneg %p127
      %p247 = pneg %p124
      %p248 = pneg %p148
      %p249 = pneg %p145
      %p250 = pneg %p174
      %p251 = pneg %p171
      %p252 = scmp.lt.s32.totalorder %s17, 1
      %s253 = scalar_select %p252, %s17, 1
      %s254 = smul.addr %s253, 2
      %s255 = smul.addr %s254, 4
      %s256 = scalar_lea.vmem %s6, %s255
      %p257 = scmp.lt.s32.totalorder %s17, 1
      %s258 = scalar_select %p257, %s17, 1
      %s259 = smul.addr %s258, 4
      %s260 = smul.addr %s259, 8
      %s261 = scalar_lea.vmem %s0, %s260
      %p262 = scmp.lt.s32.totalorder %s17, 1
      %s263 = scalar_select %p262, %s17, 1
      %s264 = smul.addr %s263, 2
      %s265 = smul.addr %s264, 4
      %s266 = scalar_lea.vmem %s1, %s265
      %p267 = scmp.lt.s32.totalorder %s17, 1
      %s268 = scalar_select %p267, %s17, 1
      %s269 = smul.addr %s268, 2
      %s270 = smul.addr %s269, 4
      %s271 = scalar_lea.vmem %s6, %s270
      %v272 = vld [vmem:[%s2] sm:$0xff]
      %v273 = vld [vmem:[%s2 + $0x8] sm:$0xff]
      %v274 = vld [vmem:[%s261] sm:$0xff]
      %v275 = vld [vmem:[%s261 + $0x8] sm:$0xff]
      %v276 = vld [vmem:[%s261 + $0x10] sm:$0xff]
      %v277 = vld [vmem:[%s261 + $0x18] sm:$0xff]
      %v278 = vld [vmem:[%s3] sm:$0xff]
      %v279 = vld [vmem:[%s3 + $0x8] sm:$0xff]
      %v280 = vld [vmem:[%s266] sm:$0x77]
      %v282 = vcombine.high %v280, %v280
      %vm283 = vcmask 23552
      %v285 = vsel %vm283, %v278, 0
      %v288 = vsel %vm283, %v279, 0
      %vm290 = vcmask 1042432
      %v291 = vsel %vm290, %v280, 0
      %v293 = vsel %vm290, %v282, 0
      %295 = vmatprep.subr.mxu0 %v293
      %296 = vmatpush1.msra.mxu0 %v291
      %297 = vmatprep.subr.mxu0 0.0
      %298 = vmatpush1.msra.mxu0 0.0
      %299 = vmatprep.subr.mxu0 0.0
      %300 = vmatpush1.msra.mxu0 0.0
      %301 = vmatprep.subr.mxu0 0.0
      %302 = vmatpush1.msra.mxu0 0.0
      %303 = vmatprep.subr.mxu0 0.0
      %304 = vmatpush1.msra.mxu0 0.0
      %305 = vmatprep.subr.mxu0 0.0
      %306 = vmatpush1.msra.mxu0 0.0
      %307 = vmatprep.subr.mxu0 0.0
      %308 = vmatpush1.msra.mxu0 0.0
      %309 = vmatprep.subr.mxu0 0.0
      %310 = vmatpush1.msra.mxu0 0.0
      %311 = vmatprep.subr.mxu0 0.0
      %312 = vmatpush1.msra.mxu0 0.0
      %313 = vmatprep.subr.mxu0 0.0
      %314 = vmatpush1.msra.mxu0 0.0
      %315 = vmatprep.subr.mxu0 0.0
      %316 = vmatpush1.msra.mxu0 0.0
      %317 = vmatprep.subr.mxu0 0.0
      %318 = vmatpush1.msra.mxu0 0.0
      %319 = vmatprep.subr.mxu0 0.0
      %320 = vmatpush1.msra.mxu0 0.0
      %321 = vmatprep.subr.mxu0 0.0
      %322 = vmatpush1.msra.mxu0 0.0
      %323 = vmatprep.subr.mxu0 0.0
      %324 = vmatpush1.msra.mxu0 0.0
      %325 = vmatprep.subr.mxu0 0.0
      %326 = vmatpush1.msra.mxu0 0.0
      %327 = vmatprep.subr.mxu0 0.0
      %328 = vmatpush1.msra.mxu0 0.0
      %329 = vmatprep.subr.mxu0 0.0
      %330 = vmatpush1.msra.mxu0 0.0
      %331 = vmatprep.subr.mxu0 0.0
      %332 = vmatpush1.msra.mxu0 0.0
      %333 = vmatprep.subr.mxu0 0.0
      %334 = vmatpush1.msra.mxu0 0.0
      %335 = vmatprep.subr.mxu0 0.0
      %336 = vmatpush1.msra.mxu0 0.0
      %337 = vmatprep.subr.mxu0 0.0
      %338 = vmatpush1.msra.mxu0 0.0
      %339 = vmatprep.subr.mxu0 0.0
      %340 = vmatpush1.msra.mxu0 0.0
      %341 = vmatprep.subr.mxu0 0.0
      %342 = vmatpush1.msra.mxu0 0.0
      %343 = vmatprep.subr.mxu0 0.0
      %344 = vmatpush1.msra.mxu0 0.0
      %345 = vmatprep.subr.mxu0 0.0
      %346 = vmatpush1.msra.mxu0 0.0
      %347 = vmatprep.subr.mxu0 0.0
      %348 = vmatpush1.msra.mxu0 0.0
      %349 = vmatprep.subr.mxu0 0.0
      %350 = vmatpush1.msra.mxu0 0.0
      %351 = vmatprep.subr.mxu0 0.0
      %352 = vmatpush1.msra.mxu0 0.0
      %353 = vmatprep.subr.mxu0 0.0
      %354 = vmatpush1.msra.mxu0 0.0
      %355 = vmatprep.subr.mxu0 0.0
      %356 = vmatpush1.msra.mxu0 0.0
      %357 = vmatprep.subr.mxu0 0.0
      %358 = vmatpush1.msra.mxu0 0.0
      %359 = vmatprep.mubr.f32.mxu0 0.0
      %360 = vmatmul.mubr.f32.gmra.mrb[0].mxu0 %v285
      %v361 = vpop.f32.mrb[0].mxu0
      %v362 = vadd.f32 0.0, %v361
      %v363 = vpop.f32.mrb[0].mxu0
      %v364 = vadd.f32 0.0, %v363
      %365 = vmatprep.mubr.f32.mxu0 0.0
      %366 = vmatmul.mubr.f32.gmra.mrb[0].mxu0 %v288
      %v367 = vpop.f32.mrb[0].mxu0
      %v368 = vadd.f32 0.0, %v367
      %v369 = vpop.f32.mrb[0].mxu0
      %v370 = vadd.f32 0.0, %v369
      %371 = vdwg.mxu0
      %vm372 = vcmask 130048
      %v374 = vsel %vm372, %v272, 0
      %v377 = vsel %vm372, %v273, 0
      %379 = vmatprep.subr.mxu0 %v275
      %380 = vmatpush1.msra.mxu0 %v274
      %381 = vmatprep.subr.mxu0 %v277
      %382 = vmatpush1.msra.mxu0 %v276
      %383 = vmatprep.subr.mxu0 0.0
      %384 = vmatpush1.msra.mxu0 0.0
      %385 = vmatprep.subr.mxu0 0.0
      %386 = vmatpush1.msra.mxu0 0.0
      %387 = vmatprep.subr.mxu0 0.0
      %388 = vmatpush1.msra.mxu0 0.0
      %389 = vmatprep.subr.mxu0 0.0
      %390 = vmatpush1.msra.mxu0 0.0
      %391 = vmatprep.subr.mxu0 0.0
      %392 = vmatpush1.msra.mxu0 0.0
      %393 = vmatprep.subr.mxu0 0.0
      %394 = vmatpush1.msra.mxu0 0.0
      %395 = vmatprep.subr.mxu0 0.0
      %396 = vmatpush1.msra.mxu0 0.0
      %397 = vmatprep.subr.mxu0 0.0
      %398 = vmatpush1.msra.mxu0 0.0
      %399 = vmatprep.subr.mxu0 0.0
      %400 = vmatpush1.msra.mxu0 0.0
      %401 = vmatprep.subr.mxu0 0.0
      %402 = vmatpush1.msra.mxu0 0.0
      %403 = vmatprep.subr.mxu0 0.0
      %404 = vmatpush1.msra.mxu0 0.0
      %405 = vmatprep.subr.mxu0 0.0
      %406 = vmatpush1.msra.mxu0 0.0
      %407 = vmatprep.subr.mxu0 0.0
      %408 = vmatpush1.msra.mxu0 0.0
      %409 = vmatprep.subr.mxu0 0.0
      %410 = vmatpush1.msra.mxu0 0.0
      %411 = vmatprep.subr.mxu0 0.0
      %412 = vmatpush1.msra.mxu0 0.0
      %413 = vmatprep.subr.mxu0 0.0
      %414 = vmatpush1.msra.mxu0 0.0
      %415 = vmatprep.subr.mxu0 0.0
      %416 = vmatpush1.msra.mxu0 0.0
      %417 = vmatprep.subr.mxu0 0.0
      %418 = vmatpush1.msra.mxu0 0.0
      %419 = vmatprep.subr.mxu0 0.0
      %420 = vmatpush1.msra.mxu0 0.0
      %421 = vmatprep.subr.mxu0 0.0
      %422 = vmatpush1.msra.mxu0 0.0
      %423 = vmatprep.subr.mxu0 0.0
      %424 = vmatpush1.msra.mxu0 0.0
      %425 = vmatprep.subr.mxu0 0.0
      %426 = vmatpush1.msra.mxu0 0.0
      %427 = vmatprep.subr.mxu0 0.0
      %428 = vmatpush1.msra.mxu0 0.0
      %429 = vmatprep.subr.mxu0 0.0
      %430 = vmatpush1.msra.mxu0 0.0
      %431 = vmatprep.subr.mxu0 0.0
      %432 = vmatpush1.msra.mxu0 0.0
      %433 = vmatprep.subr.mxu0 0.0
      %434 = vmatpush1.msra.mxu0 0.0
      %435 = vmatprep.subr.mxu0 0.0
      %436 = vmatpush1.msra.mxu0 0.0
      %437 = vmatprep.subr.mxu0 0.0
      %438 = vmatpush1.msra.mxu0 0.0
      %439 = vmatprep.subr.mxu0 0.0
      %440 = vmatpush1.msra.mxu0 0.0
      %441 = vmatprep.subr.mxu0 0.0
      %442 = vmatpush1.msra.mxu0 0.0
      %443 = vmatprep.mubr.f32.mxu0 0.0
      %444 = vmatmul.mubr.f32.gmra.mrb[0].mxu0 %v374
      %v445 = vpop.f32.mrb[0].mxu0
      %v446 = vadd.f32 %v362, %v445
      %v447 = vpop.f32.mrb[0].mxu0
      %v448 = vadd.f32 %v364, %v447
      %449 = vmatprep.mubr.f32.mxu0 0.0
      %450 = vmatmul.mubr.f32.gmra.mrb[0].mxu0 %v377
      %v451 = vpop.f32.mrb[0].mxu0
      %v452 = vadd.f32 %v368, %v451
      %v453 = vpop.f32.mrb[0].mxu0
      %v454 = vadd.f32 %v370, %v453
      %455 = vdwg.mxu0
      %v456 = vld [vmem:[%s4] sm:$0xff]
      %v457 = vld [vmem:[%s4 + $0x8] sm:$0xff]
      %459 = vset.pattern.permute.xlu0 0
      %460 = vperm.xlu0 %459, %v456
      %v461 = vpop.permute.xlu0 %460
      %464 = vset.pattern.permute.xlu0 0
      %465 = vperm.xlu0 %464, %v457
      %v466 = vpop.permute.xlu0 %465
      %v468 = vadd.f32 %v446, %v461
      %v469 = vadd.f32 %v448, %v461
      %v470 = vadd.f32 %v452, %v466
      %v471 = vadd.f32 %v454, %v466
      %v472 = vmul.f32 %v468, 0.5
      %v473 = vmul.f32 %v469, 0.5
      %v474 = vmul.f32 %v470, 0.5
      %v475 = vmul.f32 %v471, 0.5
      %v476 = vmul.f32 %v468, 0.70710677
      %v477 = vmul.f32 %v469, 0.70710677
      %v478 = vmul.f32 %v470, 0.70710677
      %v479 = vmul.f32 %v471, 0.70710677
      %vm480 = vcmp.ge.f32.partialorder %v476, 0.0
      %vm481 = vcmp.ge.f32.partialorder %v477, 0.0
      %vm482 = vcmp.ge.f32.partialorder %v478, 0.0
      %vm483 = vcmp.ge.f32.partialorder %v479, 0.0
      %v484 = vsel %vm480, 1.0, -1.0
      %v485 = vsel %vm481, 1.0, -1.0
      %v486 = vsel %vm482, 1.0, -1.0
      %v487 = vsel %vm483, 1.0, -1.0
      %v488 = vand.u32 2147483647, %v476
      %v489 = vand.u32 2147483647, %v477
      %v490 = vand.u32 2147483647, %v478
      %v491 = vand.u32 2147483647, %v479
      %v492 = vmul.f32 %v488, 0.3275911
      %v493 = vmul.f32 %v489, 0.3275911
      %v494 = vmul.f32 %v490, 0.3275911
      %v495 = vmul.f32 %v491, 0.3275911
      %v496 = vadd.f32 %v492, 1.0
      %v497 = vadd.f32 %v493, 1.0
      %v498 = vadd.f32 %v494, 1.0
      %v499 = vadd.f32 %v495, 1.0
      %v500 = vrcp.pop %v496
      %v501 = vmul.f32 1.0, %v500
      %v502 = vrcp.pop %v497
      %v503 = vmul.f32 1.0, %v502
      %v504 = vrcp.pop %v498
      %v505 = vmul.f32 1.0, %v504
      %v506 = vrcp.pop %v499
      %v507 = vmul.f32 1.0, %v506
      %v508 = vmul.f32 %v501, 1.0614054
      %v509 = vmul.f32 %v503, 1.0614054
      %v510 = vmul.f32 %v505, 1.0614054
      %v511 = vmul.f32 %v507, 1.0614054
      %v512 = vadd.f32 %v508, -1.4531521
      %v513 = vadd.f32 %v509, -1.4531521
      %v514 = vadd.f32 %v510, -1.4531521
      %v515 = vadd.f32 %v511, -1.4531521
      %v516 = vmul.f32 %v512, %v501
      %v517 = vmul.f32 %v513, %v503
      %v518 = vmul.f32 %v514, %v505
      %v519 = vmul.f32 %v515, %v507
      %v520 = vadd.f32 %v516, 1.4214138
      %v521 = vadd.f32 %v517, 1.4214138
      %v522 = vadd.f32 %v518, 1.4214138
      %v523 = vadd.f32 %v519, 1.4214138
      %v524 = vmul.f32 %v520, %v501
      %v525 = vmul.f32 %v521, %v503
      %v526 = vmul.f32 %v522, %v505
      %v527 = vmul.f32 %v523, %v507
      %v528 = vadd.f32 %v524, -0.28449672
      %v529 = vadd.f32 %v525, -0.28449672
      %v530 = vadd.f32 %v526, -0.28449672
      %v531 = vadd.f32 %v527, -0.28449672
      %v532 = vmul.f32 %v528, %v501
      %v533 = vmul.f32 %v529, %v503
      %v534 = vmul.f32 %v530, %v505
      %v535 = vmul.f32 %v531, %v507
      %v536 = vadd.f32 %v532, 0.2548296
      %v537 = vadd.f32 %v533, 0.2548296
      %v538 = vadd.f32 %v534, 0.2548296
      %v539 = vadd.f32 %v535, 0.2548296
      %v540 = vmul.f32 %v536, %v501
      %v541 = vmul.f32 %v537, %v503
      %v542 = vmul.f32 %v538, %v505
      %v543 = vmul.f32 %v539, %v507
      %v544 = vsub.f32 0.0, %v488
      %v545 = vsub.f32 0.0, %v489
      %v546 = vsub.f32 0.0, %v490
      %v547 = vsub.f32 0.0, %v491
      %v548 = vmul.f32 %v544, %v488
      %v549 = vmul.f32 %v545, %v489
      %v550 = vmul.f32 %v546, %v490
      %v551 = vmul.f32 %v547, %v491
      %v552 = vmul.f32 %v548, 1.442695
      %v553 = vpow.pop %v552
      %v554 = vmul.f32 %v549, 1.442695
      %v555 = vpow.pop %v554
      %v556 = vmul.f32 %v550, 1.442695
      %v557 = vpow.pop %v556
      %v558 = vmul.f32 %v551, 1.442695
      %v559 = vpow.pop %v558
      %v560 = vmul.f32 %v540, %v553
      %v561 = vmul.f32 %v541, %v555
      %v562 = vmul.f32 %v542, %v557
      %v563 = vmul.f32 %v543, %v559
      %v564 = vsub.f32 1.0, %v560
      %v565 = vsub.f32 1.0, %v561
      %v566 = vsub.f32 1.0, %v562
      %v567 = vsub.f32 1.0, %v563
      %v568 = vmul.f32 %v484, %v564
      %v569 = vmul.f32 %v485, %v565
      %v570 = vmul.f32 %v486, %v566
      %v571 = vmul.f32 %v487, %v567
      %v572 = vadd.f32 %v568, 1.0
      %v573 = vadd.f32 %v569, 1.0
      %v574 = vadd.f32 %v570, 1.0
      %v575 = vadd.f32 %v571, 1.0
      %v576 = vmul.f32 %v472, %v572
      %v577 = vmul.f32 %v473, %v573
      %v578 = vmul.f32 %v474, %v574
      %v579 = vmul.f32 %v475, %v575
      %v580 = vld [vmem:[%s5] sm:$0x7]
      %v582 = vsel %vm372, %v580, 0
      %584 = vmatprep.subr.mxu0 %v577
      %585 = vmatpush1.msra.mxu0 %v576
      %586 = vmatprep.subr.mxu0 %v579
      %587 = vmatpush1.msra.mxu0 %v578
      %588 = vmatprep.subr.mxu0 0.0
      %589 = vmatpush1.msra.mxu0 0.0
      %590 = vmatprep.subr.mxu0 0.0
      %591 = vmatpush1.msra.mxu0 0.0
      %592 = vmatprep.subr.mxu0 0.0
      %593 = vmatpush1.msra.mxu0 0.0
      %594 = vmatprep.subr.mxu0 0.0
      %595 = vmatpush1.msra.mxu0 0.0
      %596 = vmatprep.subr.mxu0 0.0
      %597 = vmatpush1.msra.mxu0 0.0
      %598 = vmatprep.subr.mxu0 0.0
      %599 = vmatpush1.msra.mxu0 0.0
      %600 = vmatprep.subr.mxu0 0.0
      %601 = vmatpush1.msra.mxu0 0.0
      %602 = vmatprep.subr.mxu0 0.0
      %603 = vmatpush1.msra.mxu0 0.0
      %604 = vmatprep.subr.mxu0 0.0
      %605 = vmatpush1.msra.mxu0 0.0
      %606 = vmatprep.subr.mxu0 0.0
      %607 = vmatpush1.msra.mxu0 0.0
      %608 = vmatprep.subr.mxu0 0.0
      %609 = vmatpush1.msra.mxu0 0.0
      %610 = vmatprep.subr.mxu0 0.0
      %611 = vmatpush1.msra.mxu0 0.0
      %612 = vmatprep.subr.mxu0 0.0
      %613 = vmatpush1.msra.mxu0 0.0
      %614 = vmatprep.subr.mxu0 0.0
      %615 = vmatpush1.msra.mxu0 0.0
      %616 = vmatprep.subr.mxu0 0.0
      %617 = vmatpush1.msra.mxu0 0.0
      %618 = vmatprep.subr.mxu0 0.0
      %619 = vmatpush1.msra.mxu0 0.0
      %620 = vmatprep.subr.mxu0 0.0
      %621 = vmatpush1.msra.mxu0 0.0
      %622 = vmatprep.subr.mxu0 0.0
      %623 = vmatpush1.msra.mxu0 0.0
      %624 = vmatprep.subr.mxu0 0.0
      %625 = vmatpush1.msra.mxu0 0.0
      %626 = vmatprep.subr.mxu0 0.0
      %627 = vmatpush1.msra.mxu0 0.0
      %628 = vmatprep.subr.mxu0 0.0
      %629 = vmatpush1.msra.mxu0 0.0
      %630 = vmatprep.subr.mxu0 0.0
      %631 = vmatpush1.msra.mxu0 0.0
      %632 = vmatprep.subr.mxu0 0.0
      %633 = vmatpush1.msra.mxu0 0.0
      %634 = vmatprep.subr.mxu0 0.0
      %635 = vmatpush1.msra.mxu0 0.0
      %636 = vmatprep.subr.mxu0 0.0
      %637 = vmatpush1.msra.mxu0 0.0
      %638 = vmatprep.subr.mxu0 0.0
      %639 = vmatpush1.msra.mxu0 0.0
      %640 = vmatprep.subr.mxu0 0.0
      %641 = vmatpush1.msra.mxu0 0.0
      %642 = vmatprep.subr.mxu0 0.0
      %643 = vmatpush1.msra.mxu0 0.0
      %644 = vmatprep.subr.mxu0 0.0
      %645 = vmatpush1.msra.mxu0 0.0
      %646 = vmatprep.subr.mxu0 0.0
      %647 = vmatpush1.msra.mxu0 0.0
      %648 = vmatprep.mubr.f32.mxu0 0.0
      %649 = vmatmul.mubr.f32.gmra.mrb[0].mxu0 %v582
      %v650 = vpop.f32.mrb[0].mxu0
      %v651 = vadd.f32 0.0, %v650
      %v652 = vpop.f32.mrb[0].mxu0
      %v653 = vadd.f32 0.0, %v652
      %654 = vdwg.mxu0
      %v657 = vcombine.low %v651, %v653
      %659 = vst [vmem:[%s271] sm:$0x77] %v657
      %p660 = scmp.lt.s32.totalorder %s17, 1
      %s661 = scalar_select %p660, %s17, 1
      %s662 = smul.addr %s661, 2
      %s663 = smul.addr %s662, 4
      %s664 = scalar_lea.vmem %s6, %s663
      // Predicated region
      $region45: #{sfno_forward.7} parent=43 // pred_check
        %p665 = pneg %p171
      $region46: #{sfno_forward.7} parent=43 // pred_check_branch
        %667 = sbr.rel (%p665) target = $region48
      $region47: #{sfno_forward.7} parent=43 // pred_region
        _
      $region48: #{sfno_forward.7} parent=43 // pred_fallthru
        _
    $region44: #{sfno_forward.7} parent=5 // pred_fallthru
      _
    %p668 = scmp.le.s32.totalorder 2, %s12
    // Predicated region
    $region49: #{sfno_forward.7} parent=5 // pred_check
      %p669 = pneg %p668
    $region50: #{sfno_forward.7} parent=5 // pred_check_branch
      %671 = sbr.rel (%p669) target = $region52
    $region51: #{sfno_forward.7} parent=5 // pred_region
      %s672 = ssub.s32 %s12, 2
      // Predicated region
      $region53: #{sfno_forward.7} parent=51 // pred_check
        %p673 = pneg %p177
      $region54: #{sfno_forward.7} parent=51 // pred_check_branch
        %675 = sbr.rel (%p673) target = $region56
      $region55: #{sfno_forward.7} parent=51 // pred_region
        %p676 = scmp.lt.s32.totalorder %s18, 1
        %s677 = scalar_select %p676, %s18, 1
        %s678 = smul.addr %s677, 2
        %s679 = smul.addr %s678, 4
        %s680 = scalar_lea.vmem %s6, %s679
      $region56: #{sfno_forward.7} parent=51 // pred_fallthru
        _
    $region52: #{sfno_forward.7} parent=5 // pred_fallthru
      _
  $region6: #{sfno_forward.7} parent=0 // loop_footer
    %s16 = sadd.s32 1, %s12
  $region7: #{sfno_forward.7} parent=0 // loop_footer_branch
    %11 = sbr.rel target = $region3
  $region8: #{sfno_forward.7} parent=0 // loop_exit
    _

// kernel: sfno_forward.4
$region0: #{sfno_forward.4}
  #allocation0 [shape = 'u32[]', space=smem, size = 0x4, offset = 0x4, fixed_abs, tag = 'smem constant byte address 0x4 - core index']
  #allocation1 [shape = 'u32[144,128]{1,0:T(1,128)}', space=vmem, size = 0x12000, scoped, tag = 'internal scratch']
  %s0 = inlined_call_operand.vmem [shape: f32[2,3,256], index: 0, kind: input, shape index: {}]
  %s1 = inlined_call_operand.vmem [shape: f32[16,3], index: 1, kind: input, shape index: {}]
  %s2 = inlined_call_operand.vmem [shape: f32[16,1], index: 2, kind: input, shape index: {}]
  %s3 = inlined_call_operand.vmem [shape: f32[16,16], index: 3, kind: input, shape index: {}]
  %s4 = inlined_call_operand.vmem [shape: f32[16,256], index: 4, kind: input, shape index: {}]
  %s5 = inlined_call_operand.vmem [shape: f32[2,16,256], index: 5, kind: output, shape index: {}]
  %s6 = sld [smem:[#allocation0]]
  $region53: #{sfno_forward.4} parent=0
    _
  %s8 = ssub.s32 1, %s6
  %s9 = scalar_select 0, %s8, %s6
  loop: start=0, step=1, limit=4
  $region2: #{sfno_forward.4} parent=0 // loop_pre_header
    _
  $region3: #{sfno_forward.4} parent=0 // loop_header
    %s11 = sphi 0, %s15
    %p12 = scmp.ge.s32.totalorder %s11, 4
    %s21 = sphi 0, %s23
    %s24 = sphi 0, %s21
    %s25 = sphi 0, %s24
    %s41 = sphi 0, %s25
    %s45 = sphi 0, %s45
    %s47 = sphi 0, %s45
    %s48 = sphi 0, %s47
    %s62 = sphi 0, %s48
    %s66 = sphi 0, %s66
    %s68 = sphi 0, %s66
    %s69 = sphi 0, %s68
    %s83 = sphi 0, %s69
    %s87 = sphi 0, %s87
    %s89 = sphi 0, %s87
    %s90 = sphi 0, %s89
    %s104 = sphi 0, %s90
    %s108 = sphi 0, %s108
    %s110 = sphi 0, %s108
    %s111 = sphi 0, %s110
    %s125 = sphi 0, %s111
    %s131 = sphi 0, %s133
    %s134 = sphi 0, %s131
    %s135 = sphi 0, %s134
    %s151 = sphi 0, %s135
  $region4: #{sfno_forward.4} parent=0 // loop_header_branch
    %14 = sbr.rel (%p12) target = $region8
  $region5: #{sfno_forward.4} parent=0 // loop_body
    %s16 = ssub.s32 %s11, 1
    %s17 = ssub.s32 %s11, 2
    %s18 = sadd.s32 %s11, 1
    %s19 = ssub.s32 %s11, %s18
    %p20 = scmp.eq.s32.totalorder %s19, 0
    %s22 = sadd.s32 %s21, 1
    %s23 = scalar_select %p20, %s21, %s22
    %p26 = pneg %p20
    %p27 = scmp.eq.s32.totalorder %s11, 1
    %p28 = por %p26, %p27
    %p29 = scmp.ne.s32.totalorder %s21, %s24
    %p30 = scmp.eq.s32.totalorder %s11, 0
    %p31 = por %p29, %p30
    %p32 = scmp.ne.s32.totalorder %s21, %s24
    %p33 = scmp.eq.s32.totalorder %s16, 1
    %p34 = por %p32, %p33
    %p35 = scmp.ne.s32.totalorder %s24, %s25
    %p36 = scmp.eq.s32.totalorder %s16, 0
    %p37 = por %p35, %p36
    %p38 = scmp.ne.s32.totalorder %s24, %s25
    %p39 = scmp.eq.s32.totalorder %s17, 1
    %p40 = por %p38, %p39
    %p42 = scmp.ne.s32.totalorder %s25, %s41
    %p43 = scmp.eq.s32.totalorder %s17, 0
    %p44 = por %p42, %p43
    %s46 = sadd.s32 %s45, 1
    %p49 = scmp.eq.s32.totalorder %s11, 1
    %p50 = scmp.ne.s32.totalorder %s45, %s47
    %p51 = scmp.eq.s32.totalorder %s11, 0
    %p52 = por %p50, %p51
    %p53 = scmp.ne.s32.totalorder %s45, %s47
    %p54 = scmp.eq.s32.totalorder %s16, 1
    %p55 = por %p53, %p54
    %p56 = scmp.ne.s32.totalorder %s47, %s48
    %p57 = scmp.eq.s32.totalorder %s16, 0
    %p58 = por %p56, %p57
    %p59 = scmp.ne.s32.totalorder %s47, %s48
    %p60 = scmp.eq.s32.totalorder %s17, 1
    %p61 = por %p59, %p60
    %p63 = scmp.ne.s32.totalorder %s48, %s62
    %p64 = scmp.eq.s32.totalorder %s17, 0
    %p65 = por %p63, %p64
    %s67 = sadd.s32 %s66, 1
    %p70 = scmp.eq.s32.totalorder %s11, 1
    %p71 = scmp.ne.s32.totalorder %s66, %s68
    %p72 = scmp.eq.s32.totalorder %s11, 0
    %p73 = por %p71, %p72
    %p74 = scmp.ne.s32.totalorder %s66, %s68
    %p75 = scmp.eq.s32.totalorder %s16, 1
    %p76 = por %p74, %p75
    %p77 = scmp.ne.s32.totalorder %s68, %s69
    %p78 = scmp.eq.s32.totalorder %s16, 0
    %p79 = por %p77, %p78
    %p80 = scmp.ne.s32.totalorder %s68, %s69
    %p81 = scmp.eq.s32.totalorder %s17, 1
    %p82 = por %p80, %p81
    %p84 = scmp.ne.s32.totalorder %s69, %s83
    %p85 = scmp.eq.s32.totalorder %s17, 0
    %p86 = por %p84, %p85
    %s88 = sadd.s32 %s87, 1
    %p91 = scmp.eq.s32.totalorder %s11, 1
    %p92 = scmp.ne.s32.totalorder %s87, %s89
    %p93 = scmp.eq.s32.totalorder %s11, 0
    %p94 = por %p92, %p93
    %p95 = scmp.ne.s32.totalorder %s87, %s89
    %p96 = scmp.eq.s32.totalorder %s16, 1
    %p97 = por %p95, %p96
    %p98 = scmp.ne.s32.totalorder %s89, %s90
    %p99 = scmp.eq.s32.totalorder %s16, 0
    %p100 = por %p98, %p99
    %p101 = scmp.ne.s32.totalorder %s89, %s90
    %p102 = scmp.eq.s32.totalorder %s17, 1
    %p103 = por %p101, %p102
    %p105 = scmp.ne.s32.totalorder %s90, %s104
    %p106 = scmp.eq.s32.totalorder %s17, 0
    %p107 = por %p105, %p106
    %s109 = sadd.s32 %s108, 1
    %p112 = scmp.eq.s32.totalorder %s11, 1
    %p113 = scmp.ne.s32.totalorder %s108, %s110
    %p114 = scmp.eq.s32.totalorder %s11, 0
    %p115 = por %p113, %p114
    %p116 = scmp.ne.s32.totalorder %s108, %s110
    %p117 = scmp.eq.s32.totalorder %s16, 1
    %p118 = por %p116, %p117
    %p119 = scmp.ne.s32.totalorder %s110, %s111
    %p120 = scmp.eq.s32.totalorder %s16, 0
    %p121 = por %p119, %p120
    %p122 = scmp.ne.s32.totalorder %s110, %s111
    %p123 = scmp.eq.s32.totalorder %s17, 1
    %p124 = por %p122, %p123
    %p126 = scmp.ne.s32.totalorder %s111, %s125
    %p127 = scmp.eq.s32.totalorder %s17, 0
    %p128 = por %p126, %p127
    %s129 = ssub.s32 %s11, %s18
    %p130 = scmp.eq.s32.totalorder %s129, 0
    %s132 = sadd.s32 %s131, 1
    %s133 = scalar_select %p130, %s131, %s132
    %p136 = pneg %p130
    %p137 = scmp.eq.s32.totalorder %s11, 1
    %p138 = por %p136, %p137
    %p139 = scmp.ne.s32.totalorder %s131, %s134
    %p140 = scmp.eq.s32.totalorder %s11, 0
    %p141 = por %p139, %p140
    %p142 = scmp.ne.s32.totalorder %s131, %s134
    %p143 = scmp.eq.s32.totalorder %s16, 1
    %p144 = por %p142, %p143
    %p145 = scmp.ne.s32.totalorder %s134, %s135
    %p146 = scmp.eq.s32.totalorder %s16, 0
    %p147 = por %p145, %p146
    %p148 = scmp.ne.s32.totalorder %s134, %s135
    %p149 = scmp.eq.s32.totalorder %s17, 1
    %p150 = por %p148, %p149
    %p152 = scmp.ne.s32.totalorder %s135, %s151
    %p153 = scmp.eq.s32.totalorder %s17, 0
    %p154 = por %p152, %p153
    %p155 = scmp.le.s32.totalorder 1, %s11
    %p156 = scmp.lt.s32.totalorder %s11, 3
    %p157 = pnand %p155, %p156
    %p158 = pneg %p157
    // Predicated region
    $region9: #{sfno_forward.4} parent=5 // pred_check
      _
    $region10: #{sfno_forward.4} parent=5 // pred_check_branch
      %160 = sbr.rel (%p157) target = $region12
    $region11: #{sfno_forward.4} parent=5 // pred_region
      %s161 = ssub.s32 %s11, 1
      // Predicated region
      $region13: #{sfno_forward.4} parent=11 // pred_check
        %p162 = pneg %p58
      $region14: #{sfno_forward.4} parent=11 // pred_check_branch
        %164 = sbr.rel (%p162) target = $region16
      $region15: #{sfno_forward.4} parent=11 // pred_region
        _
      $region16: #{sfno_forward.4} parent=11 // pred_fallthru
        _
      // Predicated region
      $region17: #{sfno_forward.4} parent=11 // pred_check
        %p165 = pneg %p79
      $region18: #{sfno_forward.4} parent=11 // pred_check_branch
        %167 = sbr.rel (%p165) target = $region20
      $region19: #{sfno_forward.4} parent=11 // pred_region
        _
      $region20: #{sfno_forward.4} parent=11 // pred_fallthru
        _
      // Predicated region
      $region21: #{sfno_forward.4} parent=11 // pred_check
        %p168 = pneg %p100
      $region22: #{sfno_forward.4} parent=11 // pred_check_branch
        %170 = sbr.rel (%p168) target = $region24
      $region23: #{sfno_forward.4} parent=11 // pred_region
        _
      $region24: #{sfno_forward.4} parent=11 // pred_fallthru
        _
      // Predicated region
      $region25: #{sfno_forward.4} parent=11 // pred_check
        %p171 = pneg %p121
      $region26: #{sfno_forward.4} parent=11 // pred_check_branch
        %173 = sbr.rel (%p171) target = $region28
      $region27: #{sfno_forward.4} parent=11 // pred_region
        _
      $region28: #{sfno_forward.4} parent=11 // pred_fallthru
        _
    $region12: #{sfno_forward.4} parent=5 // pred_fallthru
      _
    %p174 = scmp.lt.s32.totalorder %s11, 2
    // Predicated region
    $region29: #{sfno_forward.4} parent=5 // pred_check
      %p175 = pneg %p174
    $region30: #{sfno_forward.4} parent=5 // pred_check_branch
      %177 = sbr.rel (%p175) target = $region32
    $region31: #{sfno_forward.4} parent=5 // pred_region
      // Predicated region
      $region33: #{sfno_forward.4} parent=31 // pred_check
        %p178 = pneg %p31
      $region34: #{sfno_forward.4} parent=31 // pred_check_branch
        %180 = sbr.rel (%p178) target = $region36
      $region35: #{sfno_forward.4} parent=31 // pred_region
        %p181 = scmp.lt.s32.totalorder %s11, 1
        %s182 = scalar_select %p181, %s11, 1
        %s183 = smul.addr %s182, 2
        %s184 = smul.addr %s183, 4
        %s185 = scalar_lea.vmem %s0, %s184
      $region36: #{sfno_forward.4} parent=31 // pred_fallthru
        _
    $region32: #{sfno_forward.4} parent=5 // pred_fallthru
      _
    %p186 = scmp.le.s32.totalorder 1, %s11
    %p187 = scmp.lt.s32.totalorder %s11, 3
    %p188 = pnand %p186, %p187
    %p189 = pneg %p188
    // Predicated region
    $region37: #{sfno_forward.4} parent=5 // pred_check
      _
    $region38: #{sfno_forward.4} parent=5 // pred_check_branch
      %191 = sbr.rel (%p188) target = $region40
    $region39: #{sfno_forward.4} parent=5 // pred_region
      %s192 = ssub.s32 %s11, 1
      %p193 = scmp.lt.s32.totalorder %s16, 1
      %s194 = scalar_select %p193, %s16, 1
      %s195 = smul.addr %s194, 2
      %s196 = smul.addr %s195, 4
      %s197 = scalar_lea.vmem %s0, %s196
      %p198 = pneg %p37
      %p199 = pneg %p34
      %p200 = pneg %p58
      %p201 = pneg %p55
      %p202 = pneg %p79
      %p203 = pneg %p76
      %p204 = pneg %p100
      %p205 = pneg %p97
      %p206 = pneg %p121
      %p207 = pneg %p118
      %p208 = pneg %p147
      %p209 = pneg %p144
      %p210 = scmp.lt.s32.totalorder %s16, 1
      %s211 = scalar_select %p210, %s16, 1
      %s212 = smul.addr %s211, 4
      %s213 = smul.addr %s212, 8
      %s214 = scalar_lea.vmem %s5, %s213
      %p215 = scmp.lt.s32.totalorder %s16, 1
      %s216 = scalar_select %p215, %s16, 1
      %s217 = smul.addr %s216, 2
      %s218 = smul.addr %s217, 4
      %s219 = scalar_lea.vmem %s0, %s218
      %p220 = scmp.lt.s32.totalorder %s16, 1
      %s221 = scalar_select %p220, %s16, 1
      %s222 = smul.addr %s221, 4
      %s223 = smul.addr %s222, 8
      %s224 = scalar_lea.vmem %s5, %s223
      %v225 = vld [vmem:[%s219] sm:$0x77]
      %v226 = vld [vmem:[%s1] sm:$0xff]
      %v227 = vld [vmem:[%s1 + $0x8] sm:$0xff]
      %v228 = vld [vmem:[%s2] sm:$0xff]
      %v229 = vld [vmem:[%s2 + $0x8] sm:$0xff]
      %231 = vset.pattern.permute.xlu0 0
      %232 = vperm.xlu0 %231, %v228
      %v233 = vpop.permute.xlu0 %232
      %236 = vset.pattern.permute.xlu0 0
      %237 = vperm.xlu0 %236, %v229
      %v238 = vpop.permute.xlu0 %237
      %v241 = vcombine.high %v225, %v225
      %vm242 = vcmask 23552
      %v244 = vsel %vm242, %v226, 0
      %v247 = vsel %vm242, %v227, 0
      %vm249 = vcmask 1042432
      %v250 = vsel %vm249, %v225, 0
      %v252 = vsel %vm249, %v241, 0
      %254 = vmatprep.subr.mxu0 %v252
      %255 = vmatpush1.msra.mxu0 %v250
      %256 = vmatprep.subr.mxu0 0.0
      %257 = vmatpush1.msra.mxu0 0.0
      %258 = vmatprep.subr.mxu0 0.0
      %259 = vmatpush1.msra.mxu0 0.0
      %260 = vmatprep.subr.mxu0 0.0
      %261 = vmatpush1.msra.mxu0 0.0
      %262 = vmatprep.subr.mxu0 0.0
      %263 = vmatpush1.msra.mxu0 0.0
      %264 = vmatprep.subr.mxu0 0.0
      %265 = vmatpush1.msra.mxu0 0.0
      %266 = vmatprep.subr.mxu0 0.0
      %267 = vmatpush1.msra.mxu0 0.0
      %268 = vmatprep.subr.mxu0 0.0
      %269 = vmatpush1.msra.mxu0 0.0
      %270 = vmatprep.subr.mxu0 0.0
      %271 = vmatpush1.msra.mxu0 0.0
      %272 = vmatprep.subr.mxu0 0.0
      %273 = vmatpush1.msra.mxu0 0.0
      %274 = vmatprep.subr.mxu0 0.0
      %275 = vmatpush1.msra.mxu0 0.0
      %276 = vmatprep.subr.mxu0 0.0
      %277 = vmatpush1.msra.mxu0 0.0
      %278 = vmatprep.subr.mxu0 0.0
      %279 = vmatpush1.msra.mxu0 0.0
      %280 = vmatprep.subr.mxu0 0.0
      %281 = vmatpush1.msra.mxu0 0.0
      %282 = vmatprep.subr.mxu0 0.0
      %283 = vmatpush1.msra.mxu0 0.0
      %284 = vmatprep.subr.mxu0 0.0
      %285 = vmatpush1.msra.mxu0 0.0
      %286 = vmatprep.subr.mxu0 0.0
      %287 = vmatpush1.msra.mxu0 0.0
      %288 = vmatprep.subr.mxu0 0.0
      %289 = vmatpush1.msra.mxu0 0.0
      %290 = vmatprep.subr.mxu0 0.0
      %291 = vmatpush1.msra.mxu0 0.0
      %292 = vmatprep.subr.mxu0 0.0
      %293 = vmatpush1.msra.mxu0 0.0
      %294 = vmatprep.subr.mxu0 0.0
      %295 = vmatpush1.msra.mxu0 0.0
      %296 = vmatprep.subr.mxu0 0.0
      %297 = vmatpush1.msra.mxu0 0.0
      %298 = vmatprep.subr.mxu0 0.0
      %299 = vmatpush1.msra.mxu0 0.0
      %300 = vmatprep.subr.mxu0 0.0
      %301 = vmatpush1.msra.mxu0 0.0
      %302 = vmatprep.subr.mxu0 0.0
      %303 = vmatpush1.msra.mxu0 0.0
      %304 = vmatprep.subr.mxu0 0.0
      %305 = vmatpush1.msra.mxu0 0.0
      %306 = vmatprep.subr.mxu0 0.0
      %307 = vmatpush1.msra.mxu0 0.0
      %308 = vmatprep.subr.mxu0 0.0
      %309 = vmatpush1.msra.mxu0 0.0
      %310 = vmatprep.subr.mxu0 0.0
      %311 = vmatpush1.msra.mxu0 0.0
      %312 = vmatprep.subr.mxu0 0.0
      %313 = vmatpush1.msra.mxu0 0.0
      %314 = vmatprep.subr.mxu0 0.0
      %315 = vmatpush1.msra.mxu0 0.0
      %316 = vmatprep.subr.mxu0 0.0
      %317 = vmatpush1.msra.mxu0 0.0
      %318 = vmatprep.mubr.f32.mxu0 0.0
      %319 = vmatmul.mubr.f32.gmra.mrb[0].mxu0 %v244
      %v320 = vpop.f32.mrb[0].mxu0
      %v321 = vadd.f32 %v233, %v320
      %v322 = vpop.f32.mrb[0].mxu0
      %v323 = vadd.f32 %v233, %v322
      %324 = vmatprep.mubr.f32.mxu0 0.0
      %325 = vmatmul.mubr.f32.gmra.mrb[0].mxu0 %v247
      %v326 = vpop.f32.mrb[0].mxu0
      %v327 = vadd.f32 %v238, %v326
      %v328 = vpop.f32.mrb[0].mxu0
      %v329 = vadd.f32 %v238, %v328
      %330 = vdwg.mxu0
      %v331 = vmul.f32 %v321, 0.5
      %v332 = vmul.f32 %v323, 0.5
      %v333 = vmul.f32 %v327, 0.5
      %v334 = vmul.f32 %v329, 0.5
      %v335 = vmul.f32 %v321, 0.70710677
      %v336 = vmul.f32 %v323, 0.70710677
      %v337 = vmul.f32 %v327, 0.70710677
      %v338 = vmul.f32 %v329, 0.70710677
      %vm339 = vcmp.ge.f32.partialorder %v335, 0.0
      %vm340 = vcmp.ge.f32.partialorder %v336, 0.0
      %vm341 = vcmp.ge.f32.partialorder %v337, 0.0
      %vm342 = vcmp.ge.f32.partialorder %v338, 0.0
      %v343 = vsel %vm339, 1.0, -1.0
      %v344 = vsel %vm340, 1.0, -1.0
      %v345 = vsel %vm341, 1.0, -1.0
      %v346 = vsel %vm342, 1.0, -1.0
      %v347 = vand.u32 2147483647, %v335
      %v348 = vand.u32 2147483647, %v336
      %v349 = vand.u32 2147483647, %v337
      %v350 = vand.u32 2147483647, %v338
      %v351 = vmul.f32 %v347, 0.3275911
      %v352 = vmul.f32 %v348, 0.3275911
      %v353 = vmul.f32 %v349, 0.3275911
      %v354 = vmul.f32 %v350, 0.3275911
      %v355 = vadd.f32 %v351, 1.0
      %v356 = vadd.f32 %v352, 1.0
      %v357 = vadd.f32 %v353, 1.0
      %v358 = vadd.f32 %v354, 1.0
      %v359 = vrcp.pop %v355
      %v360 = vmul.f32 1.0, %v359
      %v361 = vrcp.pop %v356
      %v362 = vmul.f32 1.0, %v361
      %v363 = vrcp.pop %v357
      %v364 = vmul.f32 1.0, %v363
      %v365 = vrcp.pop %v358
      %v366 = vmul.f32 1.0, %v365
      %v367 = vmul.f32 %v360, 1.0614054
      %v368 = vmul.f32 %v362, 1.0614054
      %v369 = vmul.f32 %v364, 1.0614054
      %v370 = vmul.f32 %v366, 1.0614054
      %v371 = vadd.f32 %v367, -1.4531521
      %v372 = vadd.f32 %v368, -1.4531521
      %v373 = vadd.f32 %v369, -1.4531521
      %v374 = vadd.f32 %v370, -1.4531521
      %v375 = vmul.f32 %v371, %v360
      %v376 = vmul.f32 %v372, %v362
      %v377 = vmul.f32 %v373, %v364
      %v378 = vmul.f32 %v374, %v366
      %v379 = vadd.f32 %v375, 1.4214138
      %v380 = vadd.f32 %v376, 1.4214138
      %v381 = vadd.f32 %v377, 1.4214138
      %v382 = vadd.f32 %v378, 1.4214138
      %v383 = vmul.f32 %v379, %v360
      %v384 = vmul.f32 %v380, %v362
      %v385 = vmul.f32 %v381, %v364
      %v386 = vmul.f32 %v382, %v366
      %v387 = vadd.f32 %v383, -0.28449672
      %v388 = vadd.f32 %v384, -0.28449672
      %v389 = vadd.f32 %v385, -0.28449672
      %v390 = vadd.f32 %v386, -0.28449672
      %v391 = vmul.f32 %v387, %v360
      %v392 = vmul.f32 %v388, %v362
      %v393 = vmul.f32 %v389, %v364
      %v394 = vmul.f32 %v390, %v366
      %v395 = vadd.f32 %v391, 0.2548296
      %v396 = vadd.f32 %v392, 0.2548296
      %v397 = vadd.f32 %v393, 0.2548296
      %v398 = vadd.f32 %v394, 0.2548296
      %v399 = vmul.f32 %v395, %v360
      %v400 = vmul.f32 %v396, %v362
      %v401 = vmul.f32 %v397, %v364
      %v402 = vmul.f32 %v398, %v366
      %v403 = vsub.f32 0.0, %v347
      %v404 = vsub.f32 0.0, %v348
      %v405 = vsub.f32 0.0, %v349
      %v406 = vsub.f32 0.0, %v350
      %v407 = vmul.f32 %v403, %v347
      %v408 = vmul.f32 %v404, %v348
      %v409 = vmul.f32 %v405, %v349
      %v410 = vmul.f32 %v406, %v350
      %v411 = vmul.f32 %v407, 1.442695
      %v412 = vpow.pop %v411
      %v413 = vmul.f32 %v408, 1.442695
      %v414 = vpow.pop %v413
      %v415 = vmul.f32 %v409, 1.442695
      %v416 = vpow.pop %v415
      %v417 = vmul.f32 %v410, 1.442695
      %v418 = vpow.pop %v417
      %v419 = vmul.f32 %v399, %v412
      %v420 = vmul.f32 %v400, %v414
      %v421 = vmul.f32 %v401, %v416
      %v422 = vmul.f32 %v402, %v418
      %v423 = vsub.f32 1.0, %v419
      %v424 = vsub.f32 1.0, %v420
      %v425 = vsub.f32 1.0, %v421
      %v426 = vsub.f32 1.0, %v422
      %v427 = vmul.f32 %v343, %v423
      %v428 = vmul.f32 %v344, %v424
      %v429 = vmul.f32 %v345, %v425
      %v430 = vmul.f32 %v346, %v426
      %v431 = vadd.f32 %v427, 1.0
      %v432 = vadd.f32 %v428, 1.0
      %v433 = vadd.f32 %v429, 1.0
      %v434 = vadd.f32 %v430, 1.0
      %v435 = vmul.f32 %v331, %v431
      %v436 = vmul.f32 %v332, %v432
      %v437 = vmul.f32 %v333, %v433
      %v438 = vmul.f32 %v334, %v434
      %v439 = vld [vmem:[%s3] sm:$0xff]
      %v440 = vld [vmem:[%s3 + $0x8] sm:$0xff]
      %v441 = vld [vmem:[%s4] sm:$0xff]
      %v442 = vld [vmem:[%s4 + $0x8] sm:$0xff]
      %v443 = vld [vmem:[%s4 + $0x10] sm:$0xff]
      %v444 = vld [vmem:[%s4 + $0x18] sm:$0xff]
      %vm445 = vcmask 130048
      %v447 = vsel %vm445, %v439, 0
      %v450 = vsel %vm445, %v440, 0
      %452 = vmatprep.subr.mxu0 %v436
      %453 = vmatpush1.msra.mxu0 %v435
      %454 = vmatprep.subr.mxu0 %v438
      %455 = vmatpush1.msra.mxu0 %v437
      %456 = vmatprep.subr.mxu0 0.0
      %457 = vmatpush1.msra.mxu0 0.0
      %458 = vmatprep.subr.mxu0 0.0
      %459 = vmatpush1.msra.mxu0 0.0
      %460 = vmatprep.subr.mxu0 0.0
      %461 = vmatpush1.msra.mxu0 0.0
      %462 = vmatprep.subr.mxu0 0.0
      %463 = vmatpush1.msra.mxu0 0.0
      %464 = vmatprep.subr.mxu0 0.0
      %465 = vmatpush1.msra.mxu0 0.0
      %466 = vmatprep.subr.mxu0 0.0
      %467 = vmatpush1.msra.mxu0 0.0
      %468 = vmatprep.subr.mxu0 0.0
      %469 = vmatpush1.msra.mxu0 0.0
      %470 = vmatprep.subr.mxu0 0.0
      %471 = vmatpush1.msra.mxu0 0.0
      %472 = vmatprep.subr.mxu0 0.0
      %473 = vmatpush1.msra.mxu0 0.0
      %474 = vmatprep.subr.mxu0 0.0
      %475 = vmatpush1.msra.mxu0 0.0
      %476 = vmatprep.subr.mxu0 0.0
      %477 = vmatpush1.msra.mxu0 0.0
      %478 = vmatprep.subr.mxu0 0.0
      %479 = vmatpush1.msra.mxu0 0.0
      %480 = vmatprep.subr.mxu0 0.0
      %481 = vmatpush1.msra.mxu0 0.0
      %482 = vmatprep.subr.mxu0 0.0
      %483 = vmatpush1.msra.mxu0 0.0
      %484 = vmatprep.subr.mxu0 0.0
      %485 = vmatpush1.msra.mxu0 0.0
      %486 = vmatprep.subr.mxu0 0.0
      %487 = vmatpush1.msra.mxu0 0.0
      %488 = vmatprep.subr.mxu0 0.0
      %489 = vmatpush1.msra.mxu0 0.0
      %490 = vmatprep.subr.mxu0 0.0
      %491 = vmatpush1.msra.mxu0 0.0
      %492 = vmatprep.subr.mxu0 0.0
      %493 = vmatpush1.msra.mxu0 0.0
      %494 = vmatprep.subr.mxu0 0.0
      %495 = vmatpush1.msra.mxu0 0.0
      %496 = vmatprep.subr.mxu0 0.0
      %497 = vmatpush1.msra.mxu0 0.0
      %498 = vmatprep.subr.mxu0 0.0
      %499 = vmatpush1.msra.mxu0 0.0
      %500 = vmatprep.subr.mxu0 0.0
      %501 = vmatpush1.msra.mxu0 0.0
      %502 = vmatprep.subr.mxu0 0.0
      %503 = vmatpush1.msra.mxu0 0.0
      %504 = vmatprep.subr.mxu0 0.0
      %505 = vmatpush1.msra.mxu0 0.0
      %506 = vmatprep.subr.mxu0 0.0
      %507 = vmatpush1.msra.mxu0 0.0
      %508 = vmatprep.subr.mxu0 0.0
      %509 = vmatpush1.msra.mxu0 0.0
      %510 = vmatprep.subr.mxu0 0.0
      %511 = vmatpush1.msra.mxu0 0.0
      %512 = vmatprep.subr.mxu0 0.0
      %513 = vmatpush1.msra.mxu0 0.0
      %514 = vmatprep.subr.mxu0 0.0
      %515 = vmatpush1.msra.mxu0 0.0
      %516 = vmatprep.mubr.f32.mxu0 0.0
      %517 = vmatmul.mubr.f32.gmra.mrb[0].mxu0 %v447
      %v518 = vpop.f32.mrb[0].mxu0
      %v519 = vadd.f32 %v441, %v518
      %v520 = vpop.f32.mrb[0].mxu0
      %v521 = vadd.f32 %v442, %v520
      %522 = vmatprep.mubr.f32.mxu0 0.0
      %523 = vmatmul.mubr.f32.gmra.mrb[0].mxu0 %v450
      %v524 = vpop.f32.mrb[0].mxu0
      %v525 = vadd.f32 %v443, %v524
      %v526 = vpop.f32.mrb[0].mxu0
      %v527 = vadd.f32 %v444, %v526
      %528 = vdwg.mxu0
      %529 = vst [vmem:[%s224] sm:$0xff] %v519
      %530 = vst [vmem:[%s224 + $0x8] sm:$0xff] %v521
      %531 = vst [vmem:[%s224 + $0x10] sm:$0xff] %v525
      %532 = vst [vmem:[%s224 + $0x18] sm:$0xff] %v527
      %p533 = scmp.lt.s32.totalorder %s16, 1
      %s534 = scalar_select %p533, %s16, 1
      %s535 = smul.addr %s534, 4
      %s536 = smul.addr %s535, 8
      %s537 = scalar_lea.vmem %s5, %s536
      // Predicated region
      $region41: #{sfno_forward.4} parent=39 // pred_check
        %p538 = pneg %p144
      $region42: #{sfno_forward.4} parent=39 // pred_check_branch
        %540 = sbr.rel (%p538) target = $region44
      $region43: #{sfno_forward.4} parent=39 // pred_region
        _
      $region44: #{sfno_forward.4} parent=39 // pred_fallthru
        _
    $region40: #{sfno_forward.4} parent=5 // pred_fallthru
      _
    %p541 = scmp.le.s32.totalorder 2, %s11
    // Predicated region
    $region45: #{sfno_forward.4} parent=5 // pred_check
      %p542 = pneg %p541
    $region46: #{sfno_forward.4} parent=5 // pred_check_branch
      %544 = sbr.rel (%p542) target = $region48
    $region47: #{sfno_forward.4} parent=5 // pred_region
      %s545 = ssub.s32 %s11, 2
      // Predicated region
      $region49: #{sfno_forward.4} parent=47 // pred_check
        %p546 = pneg %p150
      $region50: #{sfno_forward.4} parent=47 // pred_check_branch
        %548 = sbr.rel (%p546) target = $region52
      $region51: #{sfno_forward.4} parent=47 // pred_region
        %p549 = scmp.lt.s32.totalorder %s17, 1
        %s550 = scalar_select %p549, %s17, 1
        %s551 = smul.addr %s550, 4
        %s552 = smul.addr %s551, 8
        %s553 = scalar_lea.vmem %s5, %s552
      $region52: #{sfno_forward.4} parent=47 // pred_fallthru
        _
    $region48: #{sfno_forward.4} parent=5 // pred_fallthru
      _
  $region6: #{sfno_forward.4} parent=0 // loop_footer
    %s15 = sadd.s32 1, %s11
  $region7: #{sfno_forward.4} parent=0 // loop_footer_branch
    %10 = sbr.rel target = $region3
  $region8: #{sfno_forward.4} parent=0 // loop_exit
    _

// kernel: sfno_forward.5
$region0: #{sfno_forward.5}
  #allocation0 [shape = 'u32[]', space=smem, size = 0x4, offset = 0x4, fixed_abs, tag = 'smem constant byte address 0x4 - core index']
  #allocation1 [shape = 'u32[144,128]{1,0:T(1,128)}', space=vmem, size = 0x12000, scoped, tag = 'internal scratch']
  %s0 = inlined_call_operand.vmem [shape: f32[2,16,256], index: 0, kind: input, shape index: {}]
  %s1 = inlined_call_operand.vmem [shape: f32[16,1], index: 1, kind: input, shape index: {}]
  %s2 = inlined_call_operand.vmem [shape: f32[16,1], index: 2, kind: input, shape index: {}]
  %s3 = inlined_call_operand.vmem [shape: f32[16,16,144], index: 3, kind: input, shape index: {}]
  %s4 = inlined_call_operand.vmem [shape: f32[16,16,144], index: 4, kind: input, shape index: {}]
  %s5 = inlined_call_operand.vmem [shape: f32[16,1], index: 5, kind: input, shape index: {}]
  %s6 = inlined_call_operand.vmem [shape: f32[16,16], index: 6, kind: input, shape index: {}]
  %s7 = inlined_call_operand.vmem [shape: f32[16,1], index: 7, kind: input, shape index: {}]
  %s8 = inlined_call_operand.vmem [shape: f32[16,1], index: 8, kind: input, shape index: {}]
  %s9 = inlined_call_operand.vmem [shape: f32[16,1], index: 9, kind: input, shape index: {}]
  %s10 = inlined_call_operand.vmem [shape: f32[32,16], index: 10, kind: input, shape index: {}]
  %s11 = inlined_call_operand.vmem [shape: f32[32,1], index: 11, kind: input, shape index: {}]
  %s12 = inlined_call_operand.vmem [shape: f32[16,32], index: 12, kind: input, shape index: {}]
  %s13 = inlined_call_operand.vmem [shape: f32[16,1], index: 13, kind: input, shape index: {}]
  %s14 = inlined_call_operand.vmem [shape: f32[256,144], index: 14, kind: input, shape index: {}]
  %s15 = inlined_call_operand.vmem [shape: f32[256,144], index: 15, kind: input, shape index: {}]
  %s16 = inlined_call_operand.vmem [shape: f32[144,256], index: 16, kind: input, shape index: {}]
  %s17 = inlined_call_operand.vmem [shape: f32[144,256], index: 17, kind: input, shape index: {}]
  %s18 = inlined_call_operand.vmem [shape: f32[2,16,256], index: 18, kind: output, shape index: {}]
  %s19 = sld [smem:[#allocation0]]
  $region105: #{sfno_forward.5} parent=0
    _
  %s21 = ssub.s32 1, %s19
  %s22 = scalar_select 0, %s21, %s19
  loop: start=0, step=1, limit=4
  $region2: #{sfno_forward.5} parent=0 // loop_pre_header
    _
  $region3: #{sfno_forward.5} parent=0 // loop_header
    %s24 = sphi 0, %s28
    %p25 = scmp.ge.s32.totalorder %s24, 4
    %s34 = sphi 0, %s36
    %s37 = sphi 0, %s34
    %s38 = sphi 0, %s37
    %s54 = sphi 0, %s38
    %s58 = sphi 0, %s58
    %s60 = sphi 0, %s58
    %s61 = sphi 0, %s60
    %s75 = sphi 0, %s61
    %s79 = sphi 0, %s79
    %s81 = sphi 0, %s79
    %s82 = sphi 0, %s81
    %s96 = sphi 0, %s82
    %s100 = sphi 0, %s100
    %s102 = sphi 0, %s100
    %s103 = sphi 0, %s102
    %s117 = sphi 0, %s103
    %s121 = sphi 0, %s121
    %s123 = sphi 0, %s121
    %s124 = sphi 0, %s123
    %s138 = sphi 0, %s124
    %s142 = sphi 0, %s142
    %s144 = sphi 0, %s142
    %s145 = sphi 0, %s144
    %s159 = sphi 0, %s145
    %s163 = sphi 0, %s163
    %s165 = sphi 0, %s163
    %s166 = sphi 0, %s165
    %s180 = sphi 0, %s166
    %s184 = sphi 0, %s184
    %s186 = sphi 0, %s184
    %s187 = sphi 0, %s186
    %s201 = sphi 0, %s187
    %s205 = sphi 0, %s205
    %s207 = sphi 0, %s205
    %s208 = sphi 0, %s207
    %s222 = sphi 0, %s208
    %s226 = sphi 0, %s226
    %s228 = sphi 0, %s226
    %s229 = sphi 0, %s228
    %s243 = sphi 0, %s229
    %s247 = sphi 0, %s247
    %s249 = sphi 0, %s247
    %s250 = sphi 0, %s249
    %s264 = sphi 0, %s250
    %s268 = sphi 0, %s268
    %s270 = sphi 0, %s268
    %s271 = sphi 0, %s270
    %s285 = sphi 0, %s271
    %s289 = sphi 0, %s289
    %s291 = sphi 0, %s289
    %s292 = sphi 0, %s291
    %s306 = sphi 0, %s292
    %s310 = sphi 0, %s310
    %s312 = sphi 0, %s310
    %s313 = sphi 0, %s312
    %s327 = sphi 0, %s313
    %s331 = sphi 0, %s331
    %s333 = sphi 0, %s331
    %s334 = sphi 0, %s333
    %s348 = sphi 0, %s334
    %s352 = sphi 0, %s352
    %s354 = sphi 0, %s352
    %s355 = sphi 0, %s354
    %s369 = sphi 0, %s355
    %s373 = sphi 0, %s373
    %s375 = sphi 0, %s373
    %s376 = sphi 0, %s375
    %s390 = sphi 0, %s376
    %s394 = sphi 0, %s394
    %s396 = sphi 0, %s394
    %s397 = sphi 0, %s396
    %s411 = sphi 0, %s397
    %s417 = sphi 0, %s419
    %s420 = sphi 0, %s417
    %s421 = sphi 0, %s420
    %s437 = sphi 0, %s421
  $region4: #{sfno_forward.5} parent=0 // loop_header_branch
    %27 = sbr.rel (%p25) target = $region8
  $region5: #{sfno_forward.5} parent=0 // loop_body
    %s29 = ssub.s32 %s24, 1
    %s30 = ssub.s32 %s24, 2
    %s31 = sadd.s32 %s24, 1
    %s32 = ssub.s32 %s24, %s31
    %p33 = scmp.eq.s32.totalorder %s32, 0
    %s35 = sadd.s32 %s34, 1
    %s36 = scalar_select %p33, %s34, %s35
    %p39 = pneg %p33
    %p40 = scmp.eq.s32.totalorder %s24, 1
    %p41 = por %p39, %p40
    %p42 = scmp.ne.s32.totalorder %s34, %s37
    %p43 = scmp.eq.s32.totalorder %s24, 0
    %p44 = por %p42, %p43
    %p45 = scmp.ne.s32.totalorder %s34, %s37
    %p46 = scmp.eq.s32.totalorder %s29, 1
    %p47 = por %p45, %p46
    %p48 = scmp.ne.s32.totalorder %s37, %s38
    %p49 = scmp.eq.s32.totalorder %s29, 0
    %p50 = por %p48, %p49
    %p51 = scmp.ne.s32.totalorder %s37, %s38
    %p52 = scmp.eq.s32.totalorder %s30, 1
    %p53 = por %p51, %p52
    %p55 = scmp.ne.s32.totalorder %s38, %s54
    %p56 = scmp.eq.s32.totalorder %s30, 0
    %p57 = por %p55, %p56
    %s59 = sadd.s32 %s58, 1
    %p62 = scmp.eq.s32.totalorder %s24, 1
    %p63 = scmp.ne.s32.totalorder %s58, %s60
    %p64 = scmp.eq.s32.totalorder %s24, 0
    %p65 = por %p63, %p64
    %p66 = scmp.ne.s32.totalorder %s58, %s60
    %p67 = scmp.eq.s32.totalorder %s29, 1
    %p68 = por %p66, %p67
    %p69 = scmp.ne.s32.totalorder %s60, %s61
    %p70 = scmp.eq.s32.totalorder %s29, 0
    %p71 = por %p69, %p70
    %p72 = scmp.ne.s32.totalorder %s60, %s61
    %p73 = scmp.eq.s32.totalorder %s30, 1
    %p74 = por %p72, %p73
    %p76 = scmp.ne.s32.totalorder %s61, %s75
    %p77 = scmp.eq.s32.totalorder %s30, 0
    %p78 = por %p76, %p77
    %s80 = sadd.s32 %s79, 1
    %p83 = scmp.eq.s32.totalorder %s24, 1
    %p84 = scmp.ne.s32.totalorder %s79, %s81
    %p85 = scmp.eq.s32.totalorder %s24, 0
    %p86 = por %p84, %p85
    %p87 = scmp.ne.s32.totalorder %s79, %s81
    %p88 = scmp.eq.s32.totalorder %s29, 1
    %p89 = por %p87, %p88
    %p90 = scmp.ne.s32.totalorder %s81, %s82
    %p91 = scmp.eq.s32.totalorder %s29, 0
    %p92 = por %p90, %p91
    %p93 = scmp.ne.s32.totalorder %s81, %s82
    %p94 = scmp.eq.s32.totalorder %s30, 1
    %p95 = por %p93, %p94
    %p97 = scmp.ne.s32.totalorder %s82, %s96
    %p98 = scmp.eq.s32.totalorder %s30, 0
    %p99 = por %p97, %p98
    %s101 = sadd.s32 %s100, 1
    %p104 = scmp.eq.s32.totalorder %s24, 1
    %p105 = scmp.ne.s32.totalorder %s100, %s102
    %p106 = scmp.eq.s32.totalorder %s24, 0
    %p107 = por %p105, %p106
    %p108 = scmp.ne.s32.totalorder %s100, %s102
    %p109 = scmp.eq.s32.totalorder %s29, 1
    %p110 = por %p108, %p109
    %p111 = scmp.ne.s32.totalorder %s102, %s103
    %p112 = scmp.eq.s32.totalorder %s29, 0
    %p113 = por %p111, %p112
    %p114 = scmp.ne.s32.totalorder %s102, %s103
    %p115 = scmp.eq.s32.totalorder %s30, 1
    %p116 = por %p114, %p115
    %p118 = scmp.ne.s32.totalorder %s103, %s117
    %p119 = scmp.eq.s32.totalorder %s30, 0
    %p120 = por %p118, %p119
    %s122 = sadd.s32 %s121, 1
    %p125 = scmp.eq.s32.totalorder %s24, 1
    %p126 = scmp.ne.s32.totalorder %s121, %s123
    %p127 = scmp.eq.s32.totalorder %s24, 0
    %p128 = por %p126, %p127
    %p129 = scmp.ne.s32.totalorder %s121, %s123
    %p130 = scmp.eq.s32.totalorder %s29, 1
    %p131 = por %p129, %p130
    %p132 = scmp.ne.s32.totalorder %s123, %s124
    %p133 = scmp.eq.s32.totalorder %s29, 0
    %p134 = por %p132, %p133
    %p135 = scmp.ne.s32.totalorder %s123, %s124
    %p136 = scmp.eq.s32.totalorder %s30, 1
    %p137 = por %p135, %p136
    %p139 = scmp.ne.s32.totalorder %s124, %s138
    %p140 = scmp.eq.s32.totalorder %s30, 0
    %p141 = por %p139, %p140
    %s143 = sadd.s32 %s142, 1
    %p146 = scmp.eq.s32.totalorder %s24, 1
    %p147 = scmp.ne.s32.totalorder %s142, %s144
    %p148 = scmp.eq.s32.totalorder %s24, 0
    %p149 = por %p147, %p148
    %p150 = scmp.ne.s32.totalorder %s142, %s144
    %p151 = scmp.eq.s32.totalorder %s29, 1
    %p152 = por %p150, %p151
    %p153 = scmp.ne.s32.totalorder %s144, %s145
    %p154 = scmp.eq.s32.totalorder %s29, 0
    %p155 = por %p153, %p154
    %p156 = scmp.ne.s32.totalorder %s144, %s145
    %p157 = scmp.eq.s32.totalorder %s30, 1
    %p158 = por %p156, %p157
    %p160 = scmp.ne.s32.totalorder %s145, %s159
    %p161 = scmp.eq.s32.totalorder %s30, 0
    %p162 = por %p160, %p161
    %s164 = sadd.s32 %s163, 1
    %p167 = scmp.eq.s32.totalorder %s24, 1
    %p168 = scmp.ne.s32.totalorder %s163, %s165
    %p169 = scmp.eq.s32.totalorder %s24, 0
    %p170 = por %p168, %p169
    %p171 = scmp.ne.s32.totalorder %s163, %s165
    %p172 = scmp.eq.s32.totalorder %s29, 1
    %p173 = por %p171, %p172
    %p174 = scmp.ne.s32.totalorder %s165, %s166
    %p175 = scmp.eq.s32.totalorder %s29, 0
    %p176 = por %p174, %p175
    %p177 = scmp.ne.s32.totalorder %s165, %s166
    %p178 = scmp.eq.s32.totalorder %s30, 1
    %p179 = por %p177, %p178
    %p181 = scmp.ne.s32.totalorder %s166, %s180
    %p182 = scmp.eq.s32.totalorder %s30, 0
    %p183 = por %p181, %p182
    %s185 = sadd.s32 %s184, 1
    %p188 = scmp.eq.s32.totalorder %s24, 1
    %p189 = scmp.ne.s32.totalorder %s184, %s186
    %p190 = scmp.eq.s32.totalorder %s24, 0
    %p191 = por %p189, %p190
    %p192 = scmp.ne.s32.totalorder %s184, %s186
    %p193 = scmp.eq.s32.totalorder %s29, 1
    %p194 = por %p192, %p193
    %p195 = scmp.ne.s32.totalorder %s186, %s187
    %p196 = scmp.eq.s32.totalorder %s29, 0
    %p197 = por %p195, %p196
    %p198 = scmp.ne.s32.totalorder %s186, %s187
    %p199 = scmp.eq.s32.totalorder %s30, 1
    %p200 = por %p198, %p199
    %p202 = scmp.ne.s32.totalorder %s187, %s201
    %p203 = scmp.eq.s32.totalorder %s30, 0
    %p204 = por %p202, %p203
    %s206 = sadd.s32 %s205, 1
    %p209 = scmp.eq.s32.totalorder %s24, 1
    %p210 = scmp.ne.s32.totalorder %s205, %s207
    %p211 = scmp.eq.s32.totalorder %s24, 0
    %p212 = por %p210, %p211
    %p213 = scmp.ne.s32.totalorder %s205, %s207
    %p214 = scmp.eq.s32.totalorder %s29, 1
    %p215 = por %p213, %p214
    %p216 = scmp.ne.s32.totalorder %s207, %s208
    %p217 = scmp.eq.s32.totalorder %s29, 0
    %p218 = por %p216, %p217
    %p219 = scmp.ne.s32.totalorder %s207, %s208
    %p220 = scmp.eq.s32.totalorder %s30, 1
    %p221 = por %p219, %p220
    %p223 = scmp.ne.s32.totalorder %s208, %s222
    %p224 = scmp.eq.s32.totalorder %s30, 0
    %p225 = por %p223, %p224
    %s227 = sadd.s32 %s226, 1
    %p230 = scmp.eq.s32.totalorder %s24, 1
    %p231 = scmp.ne.s32.totalorder %s226, %s228
    %p232 = scmp.eq.s32.totalorder %s24, 0
    %p233 = por %p231, %p232
    %p234 = scmp.ne.s32.totalorder %s226, %s228
    %p235 = scmp.eq.s32.totalorder %s29, 1
    %p236 = por %p234, %p235
    %p237 = scmp.ne.s32.totalorder %s228, %s229
    %p238 = scmp.eq.s32.totalorder %s29, 0
    %p239 = por %p237, %p238
    %p240 = scmp.ne.s32.totalorder %s228, %s229
    %p241 = scmp.eq.s32.totalorder %s30, 1
    %p242 = por %p240, %p241
    %p244 = scmp.ne.s32.totalorder %s229, %s243
    %p245 = scmp.eq.s32.totalorder %s30, 0
    %p246 = por %p244, %p245
    %s248 = sadd.s32 %s247, 1
    %p251 = scmp.eq.s32.totalorder %s24, 1
    %p252 = scmp.ne.s32.totalorder %s247, %s249
    %p253 = scmp.eq.s32.totalorder %s24, 0
    %p254 = por %p252, %p253
    %p255 = scmp.ne.s32.totalorder %s247, %s249
    %p256 = scmp.eq.s32.totalorder %s29, 1
    %p257 = por %p255, %p256
    %p258 = scmp.ne.s32.totalorder %s249, %s250
    %p259 = scmp.eq.s32.totalorder %s29, 0
    %p260 = por %p258, %p259
    %p261 = scmp.ne.s32.totalorder %s249, %s250
    %p262 = scmp.eq.s32.totalorder %s30, 1
    %p263 = por %p261, %p262
    %p265 = scmp.ne.s32.totalorder %s250, %s264
    %p266 = scmp.eq.s32.totalorder %s30, 0
    %p267 = por %p265, %p266
    %s269 = sadd.s32 %s268, 1
    %p272 = scmp.eq.s32.totalorder %s24, 1
    %p273 = scmp.ne.s32.totalorder %s268, %s270
    %p274 = scmp.eq.s32.totalorder %s24, 0
    %p275 = por %p273, %p274
    %p276 = scmp.ne.s32.totalorder %s268, %s270
    %p277 = scmp.eq.s32.totalorder %s29, 1
    %p278 = por %p276, %p277
    %p279 = scmp.ne.s32.totalorder %s270, %s271
    %p280 = scmp.eq.s32.totalorder %s29, 0
    %p281 = por %p279, %p280
    %p282 = scmp.ne.s32.totalorder %s270, %s271
    %p283 = scmp.eq.s32.totalorder %s30, 1
    %p284 = por %p282, %p283
    %p286 = scmp.ne.s32.totalorder %s271, %s285
    %p287 = scmp.eq.s32.totalorder %s30, 0
    %p288 = por %p286, %p287
    %s290 = sadd.s32 %s289, 1
    %p293 = scmp.eq.s32.totalorder %s24, 1
    %p294 = scmp.ne.s32.totalorder %s289, %s291
    %p295 = scmp.eq.s32.totalorder %s24, 0
    %p296 = por %p294, %p295
    %p297 = scmp.ne.s32.totalorder %s289, %s291
    %p298 = scmp.eq.s32.totalorder %s29, 1
    %p299 = por %p297, %p298
    %p300 = scmp.ne.s32.totalorder %s291, %s292
    %p301 = scmp.eq.s32.totalorder %s29, 0
    %p302 = por %p300, %p301
    %p303 = scmp.ne.s32.totalorder %s291, %s292
    %p304 = scmp.eq.s32.totalorder %s30, 1
    %p305 = por %p303, %p304
    %p307 = scmp.ne.s32.totalorder %s292, %s306
    %p308 = scmp.eq.s32.totalorder %s30, 0
    %p309 = por %p307, %p308
    %s311 = sadd.s32 %s310, 1
    %p314 = scmp.eq.s32.totalorder %s24, 1
    %p315 = scmp.ne.s32.totalorder %s310, %s312
    %p316 = scmp.eq.s32.totalorder %s24, 0
    %p317 = por %p315, %p316
    %p318 = scmp.ne.s32.totalorder %s310, %s312
    %p319 = scmp.eq.s32.totalorder %s29, 1
    %p320 = por %p318, %p319
    %p321 = scmp.ne.s32.totalorder %s312, %s313
    %p322 = scmp.eq.s32.totalorder %s29, 0
    %p323 = por %p321, %p322
    %p324 = scmp.ne.s32.totalorder %s312, %s313
    %p325 = scmp.eq.s32.totalorder %s30, 1
    %p326 = por %p324, %p325
    %p328 = scmp.ne.s32.totalorder %s313, %s327
    %p329 = scmp.eq.s32.totalorder %s30, 0
    %p330 = por %p328, %p329
    %s332 = sadd.s32 %s331, 1
    %p335 = scmp.eq.s32.totalorder %s24, 1
    %p336 = scmp.ne.s32.totalorder %s331, %s333
    %p337 = scmp.eq.s32.totalorder %s24, 0
    %p338 = por %p336, %p337
    %p339 = scmp.ne.s32.totalorder %s331, %s333
    %p340 = scmp.eq.s32.totalorder %s29, 1
    %p341 = por %p339, %p340
    %p342 = scmp.ne.s32.totalorder %s333, %s334
    %p343 = scmp.eq.s32.totalorder %s29, 0
    %p344 = por %p342, %p343
    %p345 = scmp.ne.s32.totalorder %s333, %s334
    %p346 = scmp.eq.s32.totalorder %s30, 1
    %p347 = por %p345, %p346
    %p349 = scmp.ne.s32.totalorder %s334, %s348
    %p350 = scmp.eq.s32.totalorder %s30, 0
    %p351 = por %p349, %p350
    %s353 = sadd.s32 %s352, 1
    %p356 = scmp.eq.s32.totalorder %s24, 1
    %p357 = scmp.ne.s32.totalorder %s352, %s354
    %p358 = scmp.eq.s32.totalorder %s24, 0
    %p359 = por %p357, %p358
    %p360 = scmp.ne.s32.totalorder %s352, %s354
    %p361 = scmp.eq.s32.totalorder %s29, 1
    %p362 = por %p360, %p361
    %p363 = scmp.ne.s32.totalorder %s354, %s355
    %p364 = scmp.eq.s32.totalorder %s29, 0
    %p365 = por %p363, %p364
    %p366 = scmp.ne.s32.totalorder %s354, %s355
    %p367 = scmp.eq.s32.totalorder %s30, 1
    %p368 = por %p366, %p367
    %p370 = scmp.ne.s32.totalorder %s355, %s369
    %p371 = scmp.eq.s32.totalorder %s30, 0
    %p372 = por %p370, %p371
    %s374 = sadd.s32 %s373, 1
    %p377 = scmp.eq.s32.totalorder %s24, 1
    %p378 = scmp.ne.s32.totalorder %s373, %s375
    %p379 = scmp.eq.s32.totalorder %s24, 0
    %p380 = por %p378, %p379
    %p381 = scmp.ne.s32.totalorder %s373, %s375
    %p382 = scmp.eq.s32.totalorder %s29, 1
    %p383 = por %p381, %p382
    %p384 = scmp.ne.s32.totalorder %s375, %s376
    %p385 = scmp.eq.s32.totalorder %s29, 0
    %p386 = por %p384, %p385
    %p387 = scmp.ne.s32.totalorder %s375, %s376
    %p388 = scmp.eq.s32.totalorder %s30, 1
    %p389 = por %p387, %p388
    %p391 = scmp.ne.s32.totalorder %s376, %s390
    %p392 = scmp.eq.s32.totalorder %s30, 0
    %p393 = por %p391, %p392
    %s395 = sadd.s32 %s394, 1
    %p398 = scmp.eq.s32.totalorder %s24, 1
    %p399 = scmp.ne.s32.totalorder %s394, %s396
    %p400 = scmp.eq.s32.totalorder %s24, 0
    %p401 = por %p399, %p400
    %p402 = scmp.ne.s32.totalorder %s394, %s396
    %p403 = scmp.eq.s32.totalorder %s29, 1
    %p404 = por %p402, %p403
    %p405 = scmp.ne.s32.totalorder %s396, %s397
    %p406 = scmp.eq.s32.totalorder %s29, 0
    %p407 = por %p405, %p406
    %p408 = scmp.ne.s32.totalorder %s396, %s397
    %p409 = scmp.eq.s32.totalorder %s30, 1
    %p410 = por %p408, %p409
    %p412 = scmp.ne.s32.totalorder %s397, %s411
    %p413 = scmp.eq.s32.totalorder %s30, 0
    %p414 = por %p412, %p413
    %s415 = ssub.s32 %s24, %s31
    %p416 = scmp.eq.s32.totalorder %s415, 0
    %s418 = sadd.s32 %s417, 1
    %s419 = scalar_select %p416, %s417, %s418
    %p422 = pneg %p416
    %p423 = scmp.eq.s32.totalorder %s24, 1
    %p424 = por %p422, %p423
    %p425 = scmp.ne.s32.totalorder %s417, %s420
    %p426 = scmp.eq.s32.totalorder %s24, 0
    %p427 = por %p425, %p426
    %p428 = scmp.ne.s32.totalorder %s417, %s420
    %p429 = scmp.eq.s32.totalorder %s29, 1
    %p430 = por %p428, %p429
    %p431 = scmp.ne.s32.totalorder %s420, %s421
    %p432 = scmp.eq.s32.totalorder %s29, 0
    %p433 = por %p431, %p432
    %p434 = scmp.ne.s32.totalorder %s420, %s421
    %p435 = scmp.eq.s32.totalorder %s30, 1
    %p436 = por %p434, %p435
    %p438 = scmp.ne.s32.totalorder %s421, %s437
    %p439 = scmp.eq.s32.totalorder %s30, 0
    %p440 = por %p438, %p439
    %p441 = scmp.le.s32.totalorder 1, %s24
    %p442 = scmp.lt.s32.totalorder %s24, 3
    %p443 = pnand %p441, %p442
    %p444 = pneg %p443
    // Predicated region
    $region9: #{sfno_forward.5} parent=5 // pred_check
      _
    $region10: #{sfno_forward.5} parent=5 // pred_check_branch
      %446 = sbr.rel (%p443) target = $region12
    $region11: #{sfno_forward.5} parent=5 // pred_region
      %s447 = ssub.s32 %s24, 1
      // Predicated region
      $region13: #{sfno_forward.5} parent=11 // pred_check
        %p448 = pneg %p71
      $region14: #{sfno_forward.5} parent=11 // pred_check_branch
        %450 = sbr.rel (%p448) target = $region16
      $region15: #{sfno_forward.5} parent=11 // pred_region
        _
      $region16: #{sfno_forward.5} parent=11 // pred_fallthru
        _
      // Predicated region
      $region17: #{sfno_forward.5} parent=11 // pred_check
        %p451 = pneg %p92
      $region18: #{sfno_forward.5} parent=11 // pred_check_branch
        %453 = sbr.rel (%p451) target = $region20
      $region19: #{sfno_forward.5} parent=11 // pred_region
        _
      $region20: #{sfno_forward.5} parent=11 // pred_fallthru
        _
      // Predicated region
      $region21: #{sfno_forward.5} parent=11 // pred_check
        %p454 = pneg %p113
      $region22: #{sfno_forward.5} parent=11 // pred_check_branch
        %456 = sbr.rel (%p454) target = $region24
      $region23: #{sfno_forward.5} parent=11 // pred_region
        _
      $region24: #{sfno_forward.5} parent=11 // pred_fallthru
        _
      // Predicated region
      $region25: #{sfno_forward.5} parent=11 // pred_check
        %p457 = pneg %p134
      $region26: #{sfno_forward.5} parent=11 // pred_check_branch
        %459 = sbr.rel (%p457) target = $region28
      $region27: #{sfno_forward.5} parent=11 // pred_region
        _
      $region28: #{sfno_forward.5} parent=11 // pred_fallthru
        _
      // Predicated region
      $region29: #{sfno_forward.5} parent=11 // pred_check
        %p460 = pneg %p155
      $region30: #{sfno_forward.5} parent=11 // pred_check_branch
        %462 = sbr.rel (%p460) target = $region32
      $region31: #{sfno_forward.5} parent=11 // pred_region
        _
      $region32: #{sfno_forward.5} parent=11 // pred_fallthru
        _
      // Predicated region
      $region33: #{sfno_forward.5} parent=11 // pred_check
        %p463 = pneg %p176
      $region34: #{sfno_forward.5} parent=11 // pred_check_branch
        %465 = sbr.rel (%p463) target = $region36
      $region35: #{sfno_forward.5} parent=11 // pred_region
        _
      $region36: #{sfno_forward.5} parent=11 // pred_fallthru
        _
      // Predicated region
      $region37: #{sfno_forward.5} parent=11 // pred_check
        %p466 = pneg %p197
      $region38: #{sfno_forward.5} parent=11 // pred_check_branch
        %468 = sbr.rel (%p466) target = $region40
      $region39: #{sfno_forward.5} parent=11 // pred_region
        _
      $region40: #{sfno_forward.5} parent=11 // pred_fallthru
        _
      // Predicated region
      $region41: #{sfno_forward.5} parent=11 // pred_check
        %p469 = pneg %p218
      $region42: #{sfno_forward.5} parent=11 // pred_check_branch
        %471 = sbr.rel (%p469) target = $region44
      $region43: #{sfno_forward.5} parent=11 // pred_region
        _
      $region44: #{sfno_forward.5} parent=11 // pred_fallthru
        _
      // Predicated region
      $region45: #{sfno_forward.5} parent=11 // pred_check
        %p472 = pneg %p239
      $region46: #{sfno_forward.5} parent=11 // pred_check_branch
        %474 = sbr.rel (%p472) target = $region48
      $region47: #{sfno_forward.5} parent=11 // pred_region
        _
      $region48: #{sfno_forward.5} parent=11 // pred_fallthru
        _
      // Predicated region
      $region49: #{sfno_forward.5} parent=11 // pred_check
        %p475 = pneg %p260
      $region50: #{sfno_forward.5} parent=11 // pred_check_branch
        %477 = sbr.rel (%p475) target = $region52
      $region51: #{sfno_forward.5} parent=11 // pred_region
        _
      $region52: #{sfno_forward.5} parent=11 // pred_fallthru
        _
      // Predicated region
      $region53: #{sfno_forward.5} parent=11 // pred_check
        %p478 = pneg %p281
      $region54: #{sfno_forward.5} parent=11 // pred_check_branch
        %480 = sbr.rel (%p478) target = $region56
      $region55: #{sfno_forward.5} parent=11 // pred_region
        _
      $region56: #{sfno_forward.5} parent=11 // pred_fallthru
        _
      // Predicated region
      $region57: #{sfno_forward.5} parent=11 // pred_check
        %p481 = pneg %p302
      $region58: #{sfno_forward.5} parent=11 // pred_check_branch
        %483 = sbr.rel (%p481) target = $region60
      $region59: #{sfno_forward.5} parent=11 // pred_region
        _
      $region60: #{sfno_forward.5} parent=11 // pred_fallthru
        _
      // Predicated region
      $region61: #{sfno_forward.5} parent=11 // pred_check
        %p484 = pneg %p323
      $region62: #{sfno_forward.5} parent=11 // pred_check_branch
        %486 = sbr.rel (%p484) target = $region64
      $region63: #{sfno_forward.5} parent=11 // pred_region
        _
      $region64: #{sfno_forward.5} parent=11 // pred_fallthru
        _
      // Predicated region
      $region65: #{sfno_forward.5} parent=11 // pred_check
        %p487 = pneg %p344
      $region66: #{sfno_forward.5} parent=11 // pred_check_branch
        %489 = sbr.rel (%p487) target = $region68
      $region67: #{sfno_forward.5} parent=11 // pred_region
        _
      $region68: #{sfno_forward.5} parent=11 // pred_fallthru
        _
      // Predicated region
      $region69: #{sfno_forward.5} parent=11 // pred_check
        %p490 = pneg %p365
      $region70: #{sfno_forward.5} parent=11 // pred_check_branch
        %492 = sbr.rel (%p490) target = $region72
      $region71: #{sfno_forward.5} parent=11 // pred_region
        _
      $region72: #{sfno_forward.5} parent=11 // pred_fallthru
        _
      // Predicated region
      $region73: #{sfno_forward.5} parent=11 // pred_check
        %p493 = pneg %p386
      $region74: #{sfno_forward.5} parent=11 // pred_check_branch
        %495 = sbr.rel (%p493) target = $region76
      $region75: #{sfno_forward.5} parent=11 // pred_region
        _
      $region76: #{sfno_forward.5} parent=11 // pred_fallthru
        _
      // Predicated region
      $region77: #{sfno_forward.5} parent=11 // pred_check
        %p496 = pneg %p407
      $region78: #{sfno_forward.5} parent=11 // pred_check_branch
        %498 = sbr.rel (%p496) target = $region80
      $region79: #{sfno_forward.5} parent=11 // pred_region
        _
      $region80: #{sfno_forward.5} parent=11 // pred_fallthru
        _
    $region12: #{sfno_forward.5} parent=5 // pred_fallthru
      _
    %p499 = scmp.lt.s32.totalorder %s24, 2
    // Predicated region
    $region81: #{sfno_forward.5} parent=5 // pred_check
      %p500 = pneg %p499
    $region82: #{sfno_forward.5} parent=5 // pred_check_branch
      %502 = sbr.rel (%p500) target = $region84
    $region83: #{sfno_forward.5} parent=5 // pred_region
      // Predicated region
      $region85: #{sfno_forward.5} parent=83 // pred_check
        %p503 = pneg %p44
      $region86: #{sfno_forward.5} parent=83 // pred_check_branch
        %505 = sbr.rel (%p503) target = $region88
      $region87: #{sfno_forward.5} parent=83 // pred_region
        %p506 = scmp.lt.s32.totalorder %s24, 1
        %s507 = scalar_select %p506, %s24, 1
        %s508 = smul.addr %s507, 4
        %s509 = smul.addr %s508, 8
        %s510 = scalar_lea.vmem %s0, %s509
      $region88: #{sfno_forward.5} parent=83 // pred_fallthru
        _
    $region84: #{sfno_forward.5} parent=5 // pred_fallthru
      _
    %p511 = scmp.le.s32.totalorder 1, %s24
    %p512 = scmp.lt.s32.totalorder %s24, 3
    %p513 = pnand %p511, %p512
    %p514 = pneg %p513
    // Predicated region
    $region89: #{sfno_forward.5} parent=5 // pred_check
      _
    $region90: #{sfno_forward.5} parent=5 // pred_check_branch
      %516 = sbr.rel (%p513) target = $region92
    $region91: #{sfno_forward.5} parent=5 // pred_region
      %s517 = ssub.s32 %s24, 1
      %p518 = scmp.lt.s32.totalorder %s29, 1
      %s519 = scalar_select %p518, %s29, 1
      %s520 = smul.addr %s519, 4
      %s521 = smul.addr %s520, 8
      %s522 = scalar_lea.vmem %s0, %s521
      %p523 = pneg %p50
      %p524 = pneg %p47
      %p525 = pneg %p71
      %p526 = pneg %p68
      %p527 = pneg %p92
      %p528 = pneg %p89
      %p529 = pneg %p113
      %p530 = pneg %p110
      %p531 = pneg %p134
      %p532 = pneg %p131
      %p533 = pneg %p155
      %p534 = pneg %p152
      %p535 = pneg %p176
      %p536 = pneg %p173
      %p537 = pneg %p197
      %p538 = pneg %p194
      %p539 = pneg %p218
      %p540 = pneg %p215
      %p541 = pneg %p239
      %p542 = pneg %p236
      %p543 = pneg %p260
      %p544 = pneg %p257
      %p545 = pneg %p281
      %p546 = pneg %p278
      %p547 = pneg %p302
      %p548 = pneg %p299
      %p549 = pneg %p323
      %p550 = pneg %p320
      %p551 = pneg %p344
      %p552 = pneg %p341
      %p553 = pneg %p365
      %p554 = pneg %p362
      %p555 = pneg %p386
      %p556 = pneg %p383
      %p557 = pneg %p407
      %p558 = pneg %p404
      %p559 = pneg %p433
      %p560 = pneg %p430
      %p561 = scmp.lt.s32.totalorder %s29, 1
      %s562 = scalar_select %p561, %s29, 1
      %s563 = smul.addr %s562, 4
      %s564 = smul.addr %s563, 8
      %s565 = scalar_lea.vmem %s18, %s564
      %p566 = scmp.lt.s32.totalorder %s29, 1
      %s567 = scalar_select %p566, %s29, 1
      %s568 = smul.addr %s567, 4
      %s569 = smul.addr %s568, 8
      %s570 = scalar_lea.vmem %s0, %s569
      %p571 = scmp.lt.s32.totalorder %s29, 1
      %s572 = scalar_select %p571, %s29, 1
      %s573 = smul.addr %s572, 4
      %s574 = smul.addr %s573, 8
      %s575 = scalar_lea.vmem %s18, %s574
      %v576 = vld [vmem:[%s570] sm:$0xff]
      %v577 = vld [vmem:[%s570 + $0x8] sm:$0xff]
      %v578 = vld [vmem:[%s570 + $0x10] sm:$0xff]
      %v579 = vld [vmem:[%s570 + $0x18] sm:$0xff]
      %v580 = vld [vmem:[%s1] sm:$0xff]
      %v581 = vld [vmem:[%s1 + $0x8] sm:$0xff]
      %v582 = vld [vmem:[%s2] sm:$0xff]
      %v583 = vld [vmem:[%s2 + $0x8] sm:$0xff]
      %v584 = vadd.f32 %v576, %v577
      %585 = vadd.xlane.f32.xlu0 %v584
      %v586 = vpop.xlane.xlu0 %585
      %v587 = vadd.f32 %v578, %v579
      %588 = vadd.xlane.f32.xlu0 %v587
      %v589 = vpop.xlane.xlu0 %588
      %v590 = vrcp.pop 256.0
      %v591 = vmul.f32 %v586, %v590
      %v592 = vmul.f32 %v589, %v590
      %v593 = vsub.f32 %v576, %v591
      %v594 = vsub.f32 %v577, %v591
      %v595 = vsub.f32 %v578, %v592
      %v596 = vsub.f32 %v579, %v592
      %v597 = vmul.f32 %v593, %v593
      %v598 = vmul.f32 %v594, %v594
      %v599 = vmul.f32 %v595, %v595
      %v600 = vmul.f32 %v596, %v596
      %v601 = vadd.f32 %v597, %v598
      %602 = vadd.xlane.f32.xlu0 %v601
      %v603 = vpop.xlane.xlu0 %602
      %v604 = vadd.f32 %v599, %v600
      %605 = vadd.xlane.f32.xlu0 %v604
      %v606 = vpop.xlane.xlu0 %605
      %v607 = vmul.f32 %v603, %v590
      %v608 = vmul.f32 %v606, %v590
      %v609 = vadd.f32 %v607, 1e-06
      %v610 = vadd.f32 %v608, 1e-06
      %v611 = vrsqrt.pop %v609
      %v612 = vrsqrt.pop %v610
      %v613 = vmul.f32 %v593, %v611
      %v614 = vmul.f32 %v594, %v611
      %v615 = vmul.f32 %v595, %v612
      %v616 = vmul.f32 %v596, %v612
      %618 = vset.pattern.permute.xlu0 0
      %619 = vperm.xlu0 %618, %v580
      %v620 = vpop.permute.xlu0 %619
      %623 = vset.pattern.permute.xlu0 0
      %624 = vperm.xlu0 %623, %v581
      %v625 = vpop.permute.xlu0 %624
      %v627 = vmul.f32 %v613, %v620
      %v628 = vmul.f32 %v614, %v620
      %v629 = vmul.f32 %v615, %v625
      %v630 = vmul.f32 %v616, %v625
      %632 = vset.pattern.permute.xlu0 0
      %633 = vperm.xlu0 %632, %v582
      %v634 = vpop.permute.xlu0 %633
      %637 = vset.pattern.permute.xlu0 0
      %638 = vperm.xlu0 %637, %v583
      %v639 = vpop.permute.xlu0 %638
      %v641 = vadd.f32 %v627, %v634
      %v642 = vadd.f32 %v628, %v634
      %v643 = vadd.f32 %v629, %v639
      %v644 = vadd.f32 %v630, %v639
      %v645 = vld [vmem:[%s14] sm:$0xff]
      %v646 = vld [vmem:[%s14 + $0x8] sm:$0xff]
      %v647 = vld [vmem:[%s14 + $0x10] sm:$0xff]
      %v648 = vld [vmem:[%s14 + $0x18] sm:$0xff]
      %v649 = vld [vmem:[%s14 + $0x20] sm:$0xff]
      %v650 = vld [vmem:[%s14 + $0x28] sm:$0xff]
      %v651 = vld [vmem:[%s14 + $0x30] sm:$0xff]
      %v652 = vld [vmem:[%s14 + $0x38] sm:$0xff]
      %v653 = vld [vmem:[%s14 + $0x40] sm:$0xff]
      %v654 = vld [vmem:[%s14 + $0x48] sm:$0xff]
      %v655 = vld [vmem:[%s14 + $0x50] sm:$0xff]
      %v656 = vld [vmem:[%s14 + $0x58] sm:$0xff]
      %v657 = vld [vmem:[%s14 + $0x60] sm:$0xff]
      %v658 = vld [vmem:[%s14 + $0x68] sm:$0xff]
      %v659 = vld [vmem:[%s14 + $0x70] sm:$0xff]
      %v660 = vld [vmem:[%s14 + $0x78] sm:$0xff]
      %v661 = vld [vmem:[%s14 + $0x80] sm:$0xff]
      %v662 = vld [vmem:[%s14 + $0x88] sm:$0xff]
      %v663 = vld [vmem:[%s14 + $0x90] sm:$0xff]
      %v664 = vld [vmem:[%s14 + $0x98] sm:$0xff]
      %v665 = vld [vmem:[%s14 + $0xa0] sm:$0xff]
      %v666 = vld [vmem:[%s14 + $0xa8] sm:$0xff]
      %v667 = vld [vmem:[%s14 + $0xb0] sm:$0xff]
      %v668 = vld [vmem:[%s14 + $0xb8] sm:$0xff]
      %v669 = vld [vmem:[%s14 + $0xc0] sm:$0xff]
      %v670 = vld [vmem:[%s14 + $0xc8] sm:$0xff]
      %v671 = vld [vmem:[%s14 + $0xd0] sm:$0xff]
      %v672 = vld [vmem:[%s14 + $0xd8] sm:$0xff]
      %v673 = vld [vmem:[%s14 + $0xe0] sm:$0xff]
      %v674 = vld [vmem:[%s14 + $0xe8] sm:$0xff]
      %v675 = vld [vmem:[%s14 + $0xf0] sm:$0xff]
      %v676 = vld [vmem:[%s14 + $0xf8] sm:$0xff]
      %v677 = vld [vmem:[%s14 + $0x100] sm:$0xff]
      %v678 = vld [vmem:[%s14 + $0x108] sm:$0xff]
      %v679 = vld [vmem:[%s14 + $0x110] sm:$0xff]
      %v680 = vld [vmem:[%s14 + $0x118] sm:$0xff]
      %v681 = vld [vmem:[%s14 + $0x120] sm:$0xff]
      %v682 = vld [vmem:[%s14 + $0x128] sm:$0xff]
      %v683 = vld [vmem:[%s14 + $0x130] sm:$0xff]
      %v684 = vld [vmem:[%s14 + $0x138] sm:$0xff]
      %v685 = vld [vmem:[%s14 + $0x140] sm:$0xff]
      %v686 = vld [vmem:[%s14 + $0x148] sm:$0xff]
      %v687 = vld [vmem:[%s14 + $0x150] sm:$0xff]
      %v688 = vld [vmem:[%s14 + $0x158] sm:$0xff]
      %v689 = vld [vmem:[%s14 + $0x160] sm:$0xff]
      %v690 = vld [vmem:[%s14 + $0x168] sm:$0xff]
      %v691 = vld [vmem:[%s14 + $0x170] sm:$0xff]
      %v692 = vld [vmem:[%s14 + $0x178] sm:$0xff]
      %v693 = vld [vmem:[%s14 + $0x180] sm:$0xff]
      %v694 = vld [vmem:[%s14 + $0x188] sm:$0xff]
      %v695 = vld [vmem:[%s14 + $0x190] sm:$0xff]
      %v696 = vld [vmem:[%s14 + $0x198] sm:$0xff]
      %v697 = vld [vmem:[%s14 + $0x1a0] sm:$0xff]
      %v698 = vld [vmem:[%s14 + $0x1a8] sm:$0xff]
      %v699 = vld [vmem:[%s14 + $0x1b0] sm:$0xff]
      %v700 = vld [vmem:[%s14 + $0x1b8] sm:$0xff]
      %v701 = vld [vmem:[%s14 + $0x1c0] sm:$0xff]
      %v702 = vld [vmem:[%s14 + $0x1c8] sm:$0xff]
      %v703 = vld [vmem:[%s14 + $0x1d0] sm:$0xff]
      %v704 = vld [vmem:[%s14 + $0x1d8] sm:$0xff]
      %v705 = vld [vmem:[%s14 + $0x1e0] sm:$0xff]
      %v706 = vld [vmem:[%s14 + $0x1e8] sm:$0xff]
      %v707 = vld [vmem:[%s14 + $0x1f0] sm:$0xff]
      %v708 = vld [vmem:[%s14 + $0x1f8] sm:$0xff]
      %709 = vmatprep.subr.mxu0 %v646
      %710 = vmatpush1.msra.mxu0 %v645
      %711 = vmatprep.subr.mxu0 %v648
      %712 = vmatpush1.msra.mxu0 %v647
      %713 = vmatprep.subr.mxu0 %v650
      %714 = vmatpush1.msra.mxu0 %v649
      %715 = vmatprep.subr.mxu0 %v652
      %716 = vmatpush1.msra.mxu0 %v651
      %717 = vmatprep.subr.mxu0 %v654
      %718 = vmatpush1.msra.mxu0 %v653
      %719 = vmatprep.subr.mxu0 %v656
      %720 = vmatpush1.msra.mxu0 %v655
      %721 = vmatprep.subr.mxu0 %v658
      %722 = vmatpush1.msra.mxu0 %v657
      %723 = vmatprep.subr.mxu0 %v660
      %724 = vmatpush1.msra.mxu0 %v659
      %725 = vmatprep.subr.mxu0 %v662
      %726 = vmatpush1.msra.mxu0 %v661
      %727 = vmatprep.subr.mxu0 %v664
      %728 = vmatpush1.msra.mxu0 %v663
      %729 = vmatprep.subr.mxu0 %v666
      %730 = vmatpush1.msra.mxu0 %v665
      %731 = vmatprep.subr.mxu0 %v668
      %732 = vmatpush1.msra.mxu0 %v667
      %733 = vmatprep.subr.mxu0 %v670
      %734 = vmatpush1.msra.mxu0 %v669
      %735 = vmatprep.subr.mxu0 %v672
      %736 = vmatpush1.msra.mxu0 %v671
      %737 = vmatprep.subr.mxu0 %v674
      %738 = vmatpush1.msra.mxu0 %v673
      %739 = vmatprep.subr.mxu0 %v676
      %740 = vmatpush1.msra.mxu0 %v675
      %741 = vmatprep.subr.mxu0 %v678
      %742 = vmatpush1.msra.mxu0 %v677
      %743 = vmatprep.subr.mxu0 %v680
      %744 = vmatpush1.msra.mxu0 %v679
      %745 = vmatprep.subr.mxu0 %v682
      %746 = vmatpush1.msra.mxu0 %v681
      %747 = vmatprep.subr.mxu0 %v684
      %748 = vmatpush1.msra.mxu0 %v683
      %749 = vmatprep.subr.mxu0 %v686
      %750 = vmatpush1.msra.mxu0 %v685
      %751 = vmatprep.subr.mxu0 %v688
      %752 = vmatpush1.msra.mxu0 %v687
      %753 = vmatprep.subr.mxu0 %v690
      %754 = vmatpush1.msra.mxu0 %v689
      %755 = vmatprep.subr.mxu0 %v692
      %756 = vmatpush1.msra.mxu0 %v691
      %757 = vmatprep.subr.mxu0 %v694
      %758 = vmatpush1.msra.mxu0 %v693
      %759 = vmatprep.subr.mxu0 %v696
      %760 = vmatpush1.msra.mxu0 %v695
      %761 = vmatprep.subr.mxu0 %v698
      %762 = vmatpush1.msra.mxu0 %v697
      %763 = vmatprep.subr.mxu0 %v700
      %764 = vmatpush1.msra.mxu0 %v699
      %765 = vmatprep.subr.mxu0 %v702
      %766 = vmatpush1.msra.mxu0 %v701
      %767 = vmatprep.subr.mxu0 %v704
      %768 = vmatpush1.msra.mxu0 %v703
      %769 = vmatprep.subr.mxu0 %v706
      %770 = vmatpush1.msra.mxu0 %v705
      %771 = vmatprep.subr.mxu0 %v708
      %772 = vmatpush1.msra.mxu0 %v707
      %773 = vmatprep.mubr.f32.mxu0 %v642
      %774 = vmatmul.mubr.f32.gmra.mrb[0].mxu0 %v641
      %v775 = vpop.f32.mrb[0].mxu0
      %v776 = vadd.f32 0.0, %v775
      %v777 = vpop.f32.mrb[0].mxu0
      %v778 = vadd.f32 0.0, %v777
      %779 = vmatprep.mubr.f32.mxu0 %v644
      %780 = vmatmul.mubr.f32.gmra.mrb[0].mxu0 %v643
      %v781 = vpop.f32.mrb[0].mxu0
      %v782 = vadd.f32 0.0, %v781
      %v783 = vpop.f32.mrb[0].mxu0
      %v784 = vadd.f32 0.0, %v783
      %785 = vdwg.mxu0
      %v786 = vld [vmem:[%s15] sm:$0xff]
      %v787 = vld [vmem:[%s15 + $0x8] sm:$0xff]
      %v788 = vld [vmem:[%s15 + $0x10] sm:$0xff]
      %v789 = vld [vmem:[%s15 + $0x18] sm:$0xff]
      %v790 = vld [vmem:[%s15 + $0x20] sm:$0xff]
      %v791 = vld [vmem:[%s15 + $0x28] sm:$0xff]
      %v792 = vld [vmem:[%s15 + $0x30] sm:$0xff]
      %v793 = vld [vmem:[%s15 + $0x38] sm:$0xff]
      %v794 = vld [vmem:[%s15 + $0x40] sm:$0xff]
      %v795 = vld [vmem:[%s15 + $0x48] sm:$0xff]
      %v796 = vld [vmem:[%s15 + $0x50] sm:$0xff]
      %v797 = vld [vmem:[%s15 + $0x58] sm:$0xff]
      %v798 = vld [vmem:[%s15 + $0x60] sm:$0xff]
      %v799 = vld [vmem:[%s15 + $0x68] sm:$0xff]
      %v800 = vld [vmem:[%s15 + $0x70] sm:$0xff]
      %v801 = vld [vmem:[%s15 + $0x78] sm:$0xff]
      %v802 = vld [vmem:[%s15 + $0x80] sm:$0xff]
      %v803 = vld [vmem:[%s15 + $0x88] sm:$0xff]
      %v804 = vld [vmem:[%s15 + $0x90] sm:$0xff]
      %v805 = vld [vmem:[%s15 + $0x98] sm:$0xff]
      %v806 = vld [vmem:[%s15 + $0xa0] sm:$0xff]
      %v807 = vld [vmem:[%s15 + $0xa8] sm:$0xff]
      %v808 = vld [vmem:[%s15 + $0xb0] sm:$0xff]
      %v809 = vld [vmem:[%s15 + $0xb8] sm:$0xff]
      %v810 = vld [vmem:[%s15 + $0xc0] sm:$0xff]
      %v811 = vld [vmem:[%s15 + $0xc8] sm:$0xff]
      %v812 = vld [vmem:[%s15 + $0xd0] sm:$0xff]
      %v813 = vld [vmem:[%s15 + $0xd8] sm:$0xff]
      %v814 = vld [vmem:[%s15 + $0xe0] sm:$0xff]
      %v815 = vld [vmem:[%s15 + $0xe8] sm:$0xff]
      %v816 = vld [vmem:[%s15 + $0xf0] sm:$0xff]
      %v817 = vld [vmem:[%s15 + $0xf8] sm:$0xff]
      %v818 = vld [vmem:[%s15 + $0x100] sm:$0xff]
      %v819 = vld [vmem:[%s15 + $0x108] sm:$0xff]
      %v820 = vld [vmem:[%s15 + $0x110] sm:$0xff]
      %v821 = vld [vmem:[%s15 + $0x118] sm:$0xff]
      %v822 = vld [vmem:[%s15 + $0x120] sm:$0xff]
      %v823 = vld [vmem:[%s15 + $0x128] sm:$0xff]
      %v824 = vld [vmem:[%s15 + $0x130] sm:$0xff]
      %v825 = vld [vmem:[%s15 + $0x138] sm:$0xff]
      %v826 = vld [vmem:[%s15 + $0x140] sm:$0xff]
      %v827 = vld [vmem:[%s15 + $0x148] sm:$0xff]
      %v828 = vld [vmem:[%s15 + $0x150] sm:$0xff]
      %v829 = vld [vmem:[%s15 + $0x158] sm:$0xff]
      %v830 = vld [vmem:[%s15 + $0x160] sm:$0xff]
      %v831 = vld [vmem:[%s15 + $0x168] sm:$0xff]
      %v832 = vld [vmem:[%s15 + $0x170] sm:$0xff]
      %v833 = vld [vmem:[%s15 + $0x178] sm:$0xff]
      %v834 = vld [vmem:[%s15 + $0x180] sm:$0xff]
      %v835 = vld [vmem:[%s15 + $0x188] sm:$0xff]
      %v836 = vld [vmem:[%s15 + $0x190] sm:$0xff]
      %v837 = vld [vmem:[%s15 + $0x198] sm:$0xff]
      %v838 = vld [vmem:[%s15 + $0x1a0] sm:$0xff]
      %v839 = vld [vmem:[%s15 + $0x1a8] sm:$0xff]
      %v840 = vld [vmem:[%s15 + $0x1b0] sm:$0xff]
      %v841 = vld [vmem:[%s15 + $0x1b8] sm:$0xff]
      %v842 = vld [vmem:[%s15 + $0x1c0] sm:$0xff]
      %v843 = vld [vmem:[%s15 + $0x1c8] sm:$0xff]
      %v844 = vld [vmem:[%s15 + $0x1d0] sm:$0xff]
      %v845 = vld [vmem:[%s15 + $0x1d8] sm:$0xff]
      %v846 = vld [vmem:[%s15 + $0x1e0] sm:$0xff]
      %v847 = vld [vmem:[%s15 + $0x1e8] sm:$0xff]
      %v848 = vld [vmem:[%s15 + $0x1f0] sm:$0xff]
      %v849 = vld [vmem:[%s15 + $0x1f8] sm:$0xff]
      %850 = vmatprep.subr.mxu0 %v787
      %851 = vmatpush1.msra.mxu0 %v786
      %852 = vmatprep.subr.mxu0 %v789
      %853 = vmatpush1.msra.mxu0 %v788
      %854 = vmatprep.subr.mxu0 %v791
      %855 = vmatpush1.msra.mxu0 %v790
      %856 = vmatprep.subr.mxu0 %v793
      %857 = vmatpush1.msra.mxu0 %v792
      %858 = vmatprep.subr.mxu0 %v795
      %859 = vmatpush1.msra.mxu0 %v794
      %860 = vmatprep.subr.mxu0 %v797
      %861 = vmatpush1.msra.mxu0 %v796
      %862 = vmatprep.subr.mxu0 %v799
      %863 = vmatpush1.msra.mxu0 %v798
      %864 = vmatprep.subr.mxu0 %v801
      %865 = vmatpush1.msra.mxu0 %v800
      %866 = vmatprep.subr.mxu0 %v803
      %867 = vmatpush1.msra.mxu0 %v802
      %868 = vmatprep.subr.mxu0 %v805
      %869 = vmatpush1.msra.mxu0 %v804
      %870 = vmatprep.subr.mxu0 %v807
      %871 = vmatpush1.msra.mxu0 %v806
      %872 = vmatprep.subr.mxu0 %v809
      %873 = vmatpush1.msra.mxu0 %v808
      %874 = vmatprep.subr.mxu0 %v811
      %875 = vmatpush1.msra.mxu0 %v810
      %876 = vmatprep.subr.mxu0 %v813
      %877 = vmatpush1.msra.mxu0 %v812
      %878 = vmatprep.subr.mxu0 %v815
      %879 = vmatpush1.msra.mxu0 %v814
      %880 = vmatprep.subr.mxu0 %v817
      %881 = vmatpush1.msra.mxu0 %v816
      %882 = vmatprep.subr.mxu0 %v819
      %883 = vmatpush1.msra.mxu0 %v818
      %884 = vmatprep.subr.mxu0 %v821
      %885 = vmatpush1.msra.mxu0 %v820
      %886 = vmatprep.subr.mxu0 %v823
      %887 = vmatpush1.msra.mxu0 %v822
      %888 = vmatprep.subr.mxu0 %v825
      %889 = vmatpush1.msra.mxu0 %v824
      %890 = vmatprep.subr.mxu0 %v827
      %891 = vmatpush1.msra.mxu0 %v826
      %892 = vmatprep.subr.mxu0 %v829
      %893 = vmatpush1.msra.mxu0 %v828
      %894 = vmatprep.subr.mxu0 %v831
      %895 = vmatpush1.msra.mxu0 %v830
      %896 = vmatprep.subr.mxu0 %v833
      %897 = vmatpush1.msra.mxu0 %v832
      %898 = vmatprep.subr.mxu0 %v835
      %899 = vmatpush1.msra.mxu0 %v834
      %900 = vmatprep.subr.mxu0 %v837
      %901 = vmatpush1.msra.mxu0 %v836
      %902 = vmatprep.subr.mxu0 %v839
      %903 = vmatpush1.msra.mxu0 %v838
      %904 = vmatprep.subr.mxu0 %v841
      %905 = vmatpush1.msra.mxu0 %v840
      %906 = vmatprep.subr.mxu0 %v843
      %907 = vmatpush1.msra.mxu0 %v842
      %908 = vmatprep.subr.mxu0 %v845
      %909 = vmatpush1.msra.mxu0 %v844
      %910 = vmatprep.subr.mxu0 %v847
      %911 = vmatpush1.msra.mxu0 %v846
      %912 = vmatprep.subr.mxu0 %v849
      %913 = vmatpush1.msra.mxu0 %v848
      %914 = vmatprep.mubr.f32.mxu0 %v642
      %915 = vmatmul.mubr.f32.gmra.mrb[0].mxu0 %v641
      %v916 = vpop.f32.mrb[0].mxu0
      %v917 = vadd.f32 0.0, %v916
      %v918 = vpop.f32.mrb[0].mxu0
      %v919 = vadd.f32 0.0, %v918
      %920 = vmatprep.mubr.f32.mxu0 %v644
      %921 = vmatmul.mubr.f32.gmra.mrb[0].mxu0 %v643
      %v922 = vpop.f32.mrb[0].mxu0
      %v923 = vadd.f32 0.0, %v922
      %v924 = vpop.f32.mrb[0].mxu0
      %v925 = vadd.f32 0.0, %v924
      %926 = vdwg.mxu0
      %v927 = vld [vmem:[%s3] sm:$0xff]
      %v928 = vld [vmem:[%s3 + $0x8] sm:$0xff]
      %v929 = vld [vmem:[%s3 + $0x10] sm:$0xff]
      %v930 = vld [vmem:[%s3 + $0x18] sm:$0xff]
      %v931 = vld [vmem:[%s3 + $0x20] sm:$0xff]
      %v932 = vld [vmem:[%s3 + $0x28] sm:$0xff]
      %v933 = vld [vmem:[%s3 + $0x30] sm:$0xff]
      %v934 = vld [vmem:[%s3 + $0x38] sm:$0xff]
      %v935 = vld [vmem:[%s3 + $0x40] sm:$0xff]
      %v936 = vld [vmem:[%s3 + $0x48] sm:$0xff]
      %v937 = vld [vmem:[%s3 + $0x50] sm:$0xff]
      %v938 = vld [vmem:[%s3 + $0x58] sm:$0xff]
      %v939 = vld [vmem:[%s3 + $0x60] sm:$0xff]
      %v940 = vld [vmem:[%s3 + $0x68] sm:$0xff]
      %v941 = vld [vmem:[%s3 + $0x70] sm:$0xff]
      %v942 = vld [vmem:[%s3 + $0x78] sm:$0xff]
      %v943 = vld [vmem:[%s3 + $0x80] sm:$0xff]
      %v944 = vld [vmem:[%s3 + $0x88] sm:$0xff]
      %v945 = vld [vmem:[%s3 + $0x90] sm:$0xff]
      %v946 = vld [vmem:[%s3 + $0x98] sm:$0xff]
      %v947 = vld [vmem:[%s3 + $0xa0] sm:$0xff]
      %v948 = vld [vmem:[%s3 + $0xa8] sm:$0xff]
      %v949 = vld [vmem:[%s3 + $0xb0] sm:$0xff]
      %v950 = vld [vmem:[%s3 + $0xb8] sm:$0xff]
      %v951 = vld [vmem:[%s3 + $0xc0] sm:$0xff]
      %v952 = vld [vmem:[%s3 + $0xc8] sm:$0xff]
      %v953 = vld [vmem:[%s3 + $0xd0] sm:$0xff]
      %v954 = vld [vmem:[%s3 + $0xd8] sm:$0xff]
      %v955 = vld [vmem:[%s3 + $0xe0] sm:$0xff]
      %v956 = vld [vmem:[%s3 + $0xe8] sm:$0xff]
      %v957 = vld [vmem:[%s3 + $0xf0] sm:$0xff]
      %v958 = vld [vmem:[%s3 + $0xf8] sm:$0xff]
      %v959 = vld [vmem:[%s3 + $0x100] sm:$0xff]
      %v960 = vld [vmem:[%s3 + $0x108] sm:$0xff]
      %v961 = vld [vmem:[%s3 + $0x110] sm:$0xff]
      %v962 = vld [vmem:[%s3 + $0x118] sm:$0xff]
      %v963 = vld [vmem:[%s3 + $0x120] sm:$0xff]
      %v964 = vld [vmem:[%s3 + $0x128] sm:$0xff]
      %v965 = vld [vmem:[%s3 + $0x130] sm:$0xff]
      %v966 = vld [vmem:[%s3 + $0x138] sm:$0xff]
      %v967 = vld [vmem:[%s3 + $0x140] sm:$0xff]
      %v968 = vld [vmem:[%s3 + $0x148] sm:$0xff]
      %v969 = vld [vmem:[%s3 + $0x150] sm:$0xff]
      %v970 = vld [vmem:[%s3 + $0x158] sm:$0xff]
      %v971 = vld [vmem:[%s3 + $0x160] sm:$0xff]
      %v972 = vld [vmem:[%s3 + $0x168] sm:$0xff]
      %v973 = vld [vmem:[%s3 + $0x170] sm:$0xff]
      %v974 = vld [vmem:[%s3 + $0x178] sm:$0xff]
      %v975 = vld [vmem:[%s3 + $0x180] sm:$0xff]
      %v976 = vld [vmem:[%s3 + $0x188] sm:$0xff]
      %v977 = vld [vmem:[%s3 + $0x190] sm:$0xff]
      %v978 = vld [vmem:[%s3 + $0x198] sm:$0xff]
      %v979 = vld [vmem:[%s3 + $0x1a0] sm:$0xff]
      %v980 = vld [vmem:[%s3 + $0x1a8] sm:$0xff]
      %v981 = vld [vmem:[%s3 + $0x1b0] sm:$0xff]
      %v982 = vld [vmem:[%s3 + $0x1b8] sm:$0xff]
      %v983 = vld [vmem:[%s3 + $0x1c0] sm:$0xff]
      %v984 = vld [vmem:[%s3 + $0x1c8] sm:$0xff]
      %v985 = vld [vmem:[%s3 + $0x1d0] sm:$0xff]
      %v986 = vld [vmem:[%s3 + $0x1d8] sm:$0xff]
      %v987 = vld [vmem:[%s3 + $0x1e0] sm:$0xff]
      %v988 = vld [vmem:[%s3 + $0x1e8] sm:$0xff]
      %v989 = vld [vmem:[%s3 + $0x1f0] sm:$0xff]
      %v990 = vld [vmem:[%s3 + $0x1f8] sm:$0xff]
      %v991 = vld [vmem:[%s4] sm:$0xff]
      %v992 = vld [vmem:[%s4 + $0x8] sm:$0xff]
      %v993 = vld [vmem:[%s4 + $0x10] sm:$0xff]
      %v994 = vld [vmem:[%s4 + $0x18] sm:$0xff]
      %v995 = vld [vmem:[%s4 + $0x20] sm:$0xff]
      %v996 = vld [vmem:[%s4 + $0x28] sm:$0xff]
      %v997 = vld [vmem:[%s4 + $0x30] sm:$0xff]
      %v998 = vld [vmem:[%s4 + $0x38] sm:$0xff]
      %v999 = vld [vmem:[%s4 + $0x40] sm:$0xff]
      %v1000 = vld [vmem:[%s4 + $0x48] sm:$0xff]
      %v1001 = vld [vmem:[%s4 + $0x50] sm:$0xff]
      %v1002 = vld [vmem:[%s4 + $0x58] sm:$0xff]
      %v1003 = vld [vmem:[%s4 + $0x60] sm:$0xff]
      %v1004 = vld [vmem:[%s4 + $0x68] sm:$0xff]
      %v1005 = vld [vmem:[%s4 + $0x70] sm:$0xff]
      %v1006 = vld [vmem:[%s4 + $0x78] sm:$0xff]
      %v1007 = vld [vmem:[%s4 + $0x80] sm:$0xff]
      %v1008 = vld [vmem:[%s4 + $0x88] sm:$0xff]
      %v1009 = vld [vmem:[%s4 + $0x90] sm:$0xff]
      %v1010 = vld [vmem:[%s4 + $0x98] sm:$0xff]
      %v1011 = vld [vmem:[%s4 + $0xa0] sm:$0xff]
      %v1012 = vld [vmem:[%s4 + $0xa8] sm:$0xff]
      %v1013 = vld [vmem:[%s4 + $0xb0] sm:$0xff]
      %v1014 = vld [vmem:[%s4 + $0xb8] sm:$0xff]
      %v1015 = vld [vmem:[%s4 + $0xc0] sm:$0xff]
      %v1016 = vld [vmem:[%s4 + $0xc8] sm:$0xff]
      %v1017 = vld [vmem:[%s4 + $0xd0] sm:$0xff]
      %v1018 = vld [vmem:[%s4 + $0xd8] sm:$0xff]
      %v1019 = vld [vmem:[%s4 + $0xe0] sm:$0xff]
      %v1020 = vld [vmem:[%s4 + $0xe8] sm:$0xff]
      %v1021 = vld [vmem:[%s4 + $0xf0] sm:$0xff]
      %v1022 = vld [vmem:[%s4 + $0xf8] sm:$0xff]
      %v1023 = vld [vmem:[%s4 + $0x100] sm:$0xff]
      %v1024 = vld [vmem:[%s4 + $0x108] sm:$0xff]
      %v1025 = vld [vmem:[%s4 + $0x110] sm:$0xff]
      %v1026 = vld [vmem:[%s4 + $0x118] sm:$0xff]
      %v1027 = vld [vmem:[%s4 + $0x120] sm:$0xff]
      %v1028 = vld [vmem:[%s4 + $0x128] sm:$0xff]
      %v1029 = vld [vmem:[%s4 + $0x130] sm:$0xff]
      %v1030 = vld [vmem:[%s4 + $0x138] sm:$0xff]
      %v1031 = vld [vmem:[%s4 + $0x140] sm:$0xff]
      %v1032 = vld [vmem:[%s4 + $0x148] sm:$0xff]
      %v1033 = vld [vmem:[%s4 + $0x150] sm:$0xff]
      %v1034 = vld [vmem:[%s4 + $0x158] sm:$0xff]
      %v1035 = vld [vmem:[%s4 + $0x160] sm:$0xff]
      %v1036 = vld [vmem:[%s4 + $0x168] sm:$0xff]
      %v1037 = vld [vmem:[%s4 + $0x170] sm:$0xff]
      %v1038 = vld [vmem:[%s4 + $0x178] sm:$0xff]
      %v1039 = vld [vmem:[%s4 + $0x180] sm:$0xff]
      %v1040 = vld [vmem:[%s4 + $0x188] sm:$0xff]
      %v1041 = vld [vmem:[%s4 + $0x190] sm:$0xff]
      %v1042 = vld [vmem:[%s4 + $0x198] sm:$0xff]
      %v1043 = vld [vmem:[%s4 + $0x1a0] sm:$0xff]
      %v1044 = vld [vmem:[%s4 + $0x1a8] sm:$0xff]
      %v1045 = vld [vmem:[%s4 + $0x1b0] sm:$0xff]
      %v1046 = vld [vmem:[%s4 + $0x1b8] sm:$0xff]
      %v1047 = vld [vmem:[%s4 + $0x1c0] sm:$0xff]
      %v1048 = vld [vmem:[%s4 + $0x1c8] sm:$0xff]
      %v1049 = vld [vmem:[%s4 + $0x1d0] sm:$0xff]
      %v1050 = vld [vmem:[%s4 + $0x1d8] sm:$0xff]
      %v1051 = vld [vmem:[%s4 + $0x1e0] sm:$0xff]
      %v1052 = vld [vmem:[%s4 + $0x1e8] sm:$0xff]
      %v1053 = vld [vmem:[%s4 + $0x1f0] sm:$0xff]
      %v1054 = vld [vmem:[%s4 + $0x1f8] sm:$0xff]
      %v1059 = vcombine.low %v776, %v778
      %v1060 = vcombine.high %v776, %v778
      %v1062 = vunpack.c.l.s4 1966171168
      %v1063 = vunpack.c.0.s8 %v1062
      %v1064 = vlaneseq
      %v1065 = vshrl.u32 %v1064, 7
      %v1066 = vsub.s32 %v1063, %v1065
      %v1067 = vrot.slane %v1059, %v1066
      %v1069 = vunpack.c.l.s4 1966171168
      %v1070 = vunpack.c.0.s8 %v1069
      %v1071 = vlaneseq
      %v1072 = vshrl.u32 %v1071, 7
      %v1073 = vsub.s32 %v1070, %v1072
      %v1074 = vrot.slane %v1060, %v1073
      %v1075 = vcombine.high %v1067, %v1067
      %v1076 = vcombine.high %v1074, %v1074
      %v1078 = vunpack.c.l.s4 1966171168
      %v1079 = vunpack.c.0.s8 %v1078
      %v1080 = vlaneseq
      %v1081 = vshrl.u32 %v1080, 7
      %v1082 = vsub.s32 %v1079, %v1081
      %v1083 = vrot.slane %v1067, %v1082
      %v1085 = vunpack.c.l.s4 1966171168
      %v1086 = vunpack.c.0.s8 %v1085
      %v1087 = vlaneseq
      %v1088 = vshrl.u32 %v1087, 7
      %v1089 = vsub.s32 %v1086, %v1088
      %v1090 = vrot.slane %v1074, %v1089
      %v1092 = vunpack.c.l.s4 1966171168
      %v1093 = vunpack.c.0.s8 %v1092
      %v1094 = vlaneseq
      %v1095 = vshrl.u32 %v1094, 7
      %v1096 = vsub.s32 %v1093, %v1095
      %v1097 = vrot.slane %v1075, %v1096
      %v1099 = vunpack.c.l.s4 1966171168
      %v1100 = vunpack.c.0.s8 %v1099
      %v1101 = vlaneseq
      %v1102 = vshrl.u32 %v1101, 7
      %v1103 = vsub.s32 %v1100, %v1102
      %v1104 = vrot.slane %v1076, %v1103
      %v1105 = vcombine.high %v1083, %v1083
      %v1106 = vcombine.high %v1090, %v1090
      %v1107 = vcombine.high %v1097, %v1097
      %v1108 = vcombine.high %v1104, %v1104
      %v1109 = vcombine.low %v782, %v784
      %v1110 = vcombine.high %v782, %v784
      %v1112 = vunpack.c.l.s4 1966171168
      %v1113 = vunpack.c.0.s8 %v1112
      %v1114 = vlaneseq
      %v1115 = vshrl.u32 %v1114, 7
      %v1116 = vsub.s32 %v1113, %v1115
      %v1117 = vrot.slane %v1109, %v1116
      %v1119 = vunpack.c.l.s4 1966171168
      %v1120 = vunpack.c.0.s8 %v1119
      %v1121 = vlaneseq
      %v1122 = vshrl.u32 %v1121, 7
      %v1123 = vsub.s32 %v1120, %v1122
      %v1124 = vrot.slane %v1110, %v1123
      %v1125 = vcombine.high %v1117, %v1117
      %v1126 = vcombine.high %v1124, %v1124
      %v1128 = vunpack.c.l.s4 1966171168
      %v1129 = vunpack.c.0.s8 %v1128
      %v1130 = vlaneseq
      %v1131 = vshrl.u32 %v1130, 7
      %v1132 = vsub.s32 %v1129, %v1131
      %v1133 = vrot.slane %v1117, %v1132
      %v1135 = vunpack.c.l.s4 1966171168
      %v1136 = vunpack.c.0.s8 %v1135
      %v1137 = vlaneseq
      %v1138 = vshrl.u32 %v1137, 7
      %v1139 = vsub.s32 %v1136, %v1138
      %v1140 = vrot.slane %v1124, %v1139
      %v1142 = vunpack.c.l.s4 1966171168
      %v1143 = vunpack.c.0.s8 %v1142
      %v1144 = vlaneseq
      %v1145 = vshrl.u32 %v1144, 7
      %v1146 = vsub.s32 %v1143, %v1145
      %v1147 = vrot.slane %v1125, %v1146
      %v1149 = vunpack.c.l.s4 1966171168
      %v1150 = vunpack.c.0.s8 %v1149
      %v1151 = vlaneseq
      %v1152 = vshrl.u32 %v1151, 7
      %v1153 = vsub.s32 %v1150, %v1152
      %v1154 = vrot.slane %v1126, %v1153
      %v1155 = vcombine.high %v1133, %v1133
      %v1156 = vcombine.high %v1140, %v1140
      %v1157 = vcombine.high %v1147, %v1147
      %v1158 = vcombine.high %v1154, %v1154
      %v1163 = vcombine.low %v917, %v919
      %v1164 = vcombine.high %v917, %v919
      %v1166 = vunpack.c.l.s4 1966171168
      %v1167 = vunpack.c.0.s8 %v1166
      %v1168 = vlaneseq
      %v1169 = vshrl.u32 %v1168, 7
      %v1170 = vsub.s32 %v1167, %v1169
      %v1171 = vrot.slane %v1163, %v1170
      %v1173 = vunpack.c.l.s4 1966171168
      %v1174 = vunpack.c.0.s8 %v1173
      %v1175 = vlaneseq
      %v1176 = vshrl.u32 %v1175, 7
      %v1177 = vsub.s32 %v1174, %v1176
      %v1178 = vrot.slane %v1164, %v1177
      %v1179 = vcombine.high %v1171, %v1171
      %v1180 = vcombine.high %v1178, %v1178
      %v1182 = vunpack.c.l.s4 1966171168
      %v1183 = vunpack.c.0.s8 %v1182
      %v1184 = vlaneseq
      %v1185 = vshrl.u32 %v1184, 7
      %v1186 = vsub.s32 %v1183, %v1185
      %v1187 = vrot.slane %v1171, %v1186
      %v1189 = vunpack.c.l.s4 1966171168
      %v1190 = vunpack.c.0.s8 %v1189
      %v1191 = vlaneseq
      %v1192 = vshrl.u32 %v1191, 7
      %v1193 = vsub.s32 %v1190, %v1192
      %v1194 = vrot.slane %v1178, %v1193
      %v1196 = vunpack.c.l.s4 1966171168
      %v1197 = vunpack.c.0.s8 %v1196
      %v1198 = vlaneseq
      %v1199 = vshrl.u32 %v1198, 7
      %v1200 = vsub.s32 %v1197, %v1199
      %v1201 = vrot.slane %v1179, %v1200
      %v1203 = vunpack.c.l.s4 1966171168
      %v1204 = vunpack.c.0.s8 %v1203
      %v1205 = vlaneseq
      %v1206 = vshrl.u32 %v1205, 7
      %v1207 = vsub.s32 %v1204, %v1206
      %v1208 = vrot.slane %v1180, %v1207
      %v1209 = vcombine.high %v1187, %v1187
      %v1210 = vcombine.high %v1194, %v1194
      %v1211 = vcombine.high %v1201, %v1201
      %v1212 = vcombine.high %v1208, %v1208
      %v1213 = vcombine.low %v923, %v925
      %v1214 = vcombine.high %v923, %v925
      %v1216 = vunpack.c.l.s4 1966171168
      %v1217 = vunpack.c.0.s8 %v1216
      %v1218 = vlaneseq
      %v1219 = vshrl.u32 %v1218, 7
      %v1220 = vsub.s32 %v1217, %v1219
      %v1221 = vrot.slane %v1213, %v1220
      %v1223 = vunpack.c.l.s4 1966171168
      %v1224 = vunpack.c.0.s8 %v1223
      %v1225 = vlaneseq
      %v1226 = vshrl.u32 %v1225, 7
      %v1227 = vsub.s32 %v1224, %v1226
      %v1228 = vrot.slane %v1214, %v1227
      %v1229 = vcombine.high %v1221, %v1221
      %v1230 = vcombine.high %v1228, %v1228
      %v1232 = vunpack.c.l.s4 1966171168
      %v1233 = vunpack.c.0.s8 %v1232
      %v1234 = vlaneseq
      %v1235 = vshrl.u32 %v1234, 7
      %v1236 = vsub.s32 %v1233, %v1235
      %v1237 = vrot.slane %v1221, %v1236
      %v1239 = vunpack.c.l.s4 1966171168
      %v1240 = vunpack.c.0.s8 %v1239
      %v1241 = vlaneseq
      %v1242 = vshrl.u32 %v1241, 7
      %v1243 = vsub.s32 %v1240, %v1242
      %v1244 = vrot.slane %v1228, %v1243
      %v1246 = vunpack.c.l.s4 1966171168
      %v1247 = vunpack.c.0.s8 %v1246
      %v1248 = vlaneseq
      %v1249 = vshrl.u32 %v1248, 7
      %v1250 = vsub.s32 %v1247, %v1249
      %v1251 = vrot.slane %v1229, %v1250
      %v1253 = vunpack.c.l.s4 1966171168
      %v1254 = vunpack.c.0.s8 %v1253
      %v1255 = vlaneseq
      %v1256 = vshrl.u32 %v1255, 7
      %v1257 = vsub.s32 %v1254, %v1256
      %v1258 = vrot.slane %v1230, %v1257
      %v1259 = vcombine.high %v1237, %v1237
      %v1260 = vcombine.high %v1244, %v1244
      %v1261 = vcombine.high %v1251, %v1251
      %v1262 = vcombine.high %v1258, %v1258
      %v1263 = vlaneseq
      %v1264 = vshrl.u32 %v1263, 7
      %v1265 = vsub.s32 0, %v1264
      %v1266 = vrot.slane %v1083, %v1265
      %v1267 = vlaneseq
      %v1268 = vshrl.u32 %v1267, 7
      %v1269 = vsub.s32 1, %v1268
      %v1270 = vrot.slane %v1083, %v1269
      %v1271 = vlaneseq
      %v1272 = vshrl.u32 %v1271, 7
      %v1273 = vsub.s32 0, %v1272
      %v1274 = vrot.slane %v1097, %v1273
      %v1275 = vlaneseq
      %v1276 = vshrl.u32 %v1275, 7
      %v1277 = vsub.s32 1, %v1276
      %v1278 = vrot.slane %v1097, %v1277
      %v1279 = vlaneseq
      %v1280 = vshrl.u32 %v1279, 7
      %v1281 = vsub.s32 0, %v1280
      %v1282 = vrot.slane %v1105, %v1281
      %v1283 = vlaneseq
      %v1284 = vshrl.u32 %v1283, 7
      %v1285 = vsub.s32 1, %v1284
      %v1286 = vrot.slane %v1105, %v1285
      %v1287 = vlaneseq
      %v1288 = vshrl.u32 %v1287, 7
      %v1289 = vsub.s32 0, %v1288
      %v1290 = vrot.slane %v1107, %v1289
      %v1291 = vlaneseq
      %v1292 = vshrl.u32 %v1291, 7
      %v1293 = vsub.s32 1, %v1292
      %v1294 = vrot.slane %v1107, %v1293
      %v1295 = vlaneseq
      %v1296 = vshrl.u32 %v1295, 7
      %v1297 = vsub.s32 0, %v1296
      %v1298 = vrot.slane %v1090, %v1297
      %v1299 = vlaneseq
      %v1300 = vshrl.u32 %v1299, 7
      %v1301 = vsub.s32 1, %v1300
      %v1302 = vrot.slane %v1090, %v1301
      %v1303 = vlaneseq
      %v1304 = vshrl.u32 %v1303, 7
      %v1305 = vsub.s32 0, %v1304
      %v1306 = vrot.slane %v1104, %v1305
      %v1307 = vlaneseq
      %v1308 = vshrl.u32 %v1307, 7
      %v1309 = vsub.s32 1, %v1308
      %v1310 = vrot.slane %v1104, %v1309
      %v1311 = vlaneseq
      %v1312 = vshrl.u32 %v1311, 7
      %v1313 = vsub.s32 0, %v1312
      %v1314 = vrot.slane %v1106, %v1313
      %v1315 = vlaneseq
      %v1316 = vshrl.u32 %v1315, 7
      %v1317 = vsub.s32 1, %v1316
      %v1318 = vrot.slane %v1106, %v1317
      %v1319 = vlaneseq
      %v1320 = vshrl.u32 %v1319, 7
      %v1321 = vsub.s32 0, %v1320
      %v1322 = vrot.slane %v1108, %v1321
      %v1323 = vlaneseq
      %v1324 = vshrl.u32 %v1323, 7
      %v1325 = vsub.s32 1, %v1324
      %v1326 = vrot.slane %v1108, %v1325
      %v1327 = vlaneseq
      %v1328 = vshrl.u32 %v1327, 7
      %v1329 = vsub.s32 0, %v1328
      %v1330 = vrot.slane %v1133, %v1329
      %v1331 = vlaneseq
      %v1332 = vshrl.u32 %v1331, 7
      %v1333 = vsub.s32 1, %v1332
      %v1334 = vrot.slane %v1133, %v1333
      %v1335 = vlaneseq
      %v1336 = vshrl.u32 %v1335, 7
      %v1337 = vsub.s32 0, %v1336
      %v1338 = vrot.slane %v1147, %v1337
      %v1339 = vlaneseq
      %v1340 = vshrl.u32 %v1339, 7
      %v1341 = vsub.s32 1, %v1340
      %v1342 = vrot.slane %v1147, %v1341
      %v1343 = vlaneseq
      %v1344 = vshrl.u32 %v1343, 7
      %v1345 = vsub.s32 0, %v1344
      %v1346 = vrot.slane %v1155, %v1345
      %v1347 = vlaneseq
      %v1348 = vshrl.u32 %v1347, 7
      %v1349 = vsub.s32 1, %v1348
      %v1350 = vrot.slane %v1155, %v1349
      %v1351 = vlaneseq
      %v1352 = vshrl.u32 %v1351, 7
      %v1353 = vsub.s32 0, %v1352
      %v1354 = vrot.slane %v1157, %v1353
      %v1355 = vlaneseq
      %v1356 = vshrl.u32 %v1355, 7
      %v1357 = vsub.s32 1, %v1356
      %v1358 = vrot.slane %v1157, %v1357
      %v1359 = vlaneseq
      %v1360 = vshrl.u32 %v1359, 7
      %v1361 = vsub.s32 0, %v1360
      %v1362 = vrot.slane %v1140, %v1361
      %v1363 = vlaneseq
      %v1364 = vshrl.u32 %v1363, 7
      %v1365 = vsub.s32 1, %v1364
      %v1366 = vrot.slane %v1140, %v1365
      %v1367 = vlaneseq
      %v1368 = vshrl.u32 %v1367, 7
      %v1369 = vsub.s32 0, %v1368
      %v1370 = vrot.slane %v1154, %v1369
      %v1371 = vlaneseq
      %v1372 = vshrl.u32 %v1371, 7
      %v1373 = vsub.s32 1, %v1372
      %v1374 = vrot.slane %v1154, %v1373
      %v1375 = vlaneseq
      %v1376 = vshrl.u32 %v1375, 7
      %v1377 = vsub.s32 0, %v1376
      %v1378 = vrot.slane %v1156, %v1377
      %v1379 = vlaneseq
      %v1380 = vshrl.u32 %v1379, 7
      %v1381 = vsub.s32 1, %v1380
      %v1382 = vrot.slane %v1156, %v1381
      %v1383 = vlaneseq
      %v1384 = vshrl.u32 %v1383, 7
      %v1385 = vsub.s32 0, %v1384
      %v1386 = vrot.slane %v1158, %v1385
      %v1387 = vlaneseq
      %v1388 = vshrl.u32 %v1387, 7
      %v1389 = vsub.s32 1, %v1388
      %v1390 = vrot.slane %v1158, %v1389
      %v1423 = vmul.f32 %v1266, %v927
      %v1424 = vmul.f32 %v1270, %v928
      %v1425 = vmul.f32 %v1266, %v929
      %v1426 = vmul.f32 %v1270, %v930
      %v1427 = vmul.f32 %v1274, %v931
      %v1428 = vmul.f32 %v1278, %v932
      %v1429 = vmul.f32 %v1274, %v933
      %v1430 = vmul.f32 %v1278, %v934
      %v1431 = vmul.f32 %v1282, %v935
      %v1432 = vmul.f32 %v1286, %v936
      %v1433 = vmul.f32 %v1282, %v937
      %v1434 = vmul.f32 %v1286, %v938
      %v1435 = vmul.f32 %v1290, %v939
      %v1436 = vmul.f32 %v1294, %v940
      %v1437 = vmul.f32 %v1290, %v941
      %v1438 = vmul.f32 %v1294, %v942
      %v1439 = vmul.f32 %v1298, %v943
      %v1440 = vmul.f32 %v1302, %v944
      %v1441 = vmul.f32 %v1298, %v945
      %v1442 = vmul.f32 %v1302, %v946
      %v1443 = vmul.f32 %v1306, %v947
      %v1444 = vmul.f32 %v1310, %v948
      %v1445 = vmul.f32 %v1306, %v949
      %v1446 = vmul.f32 %v1310, %v950
      %v1447 = vmul.f32 %v1314, %v951
      %v1448 = vmul.f32 %v1318, %v952
      %v1449 = vmul.f32 %v1314, %v953
      %v1450 = vmul.f32 %v1318, %v954
      %v1451 = vmul.f32 %v1322, %v955
      %v1452 = vmul.f32 %v1326, %v956
      %v1453 = vmul.f32 %v1322, %v957
      %v1454 = vmul.f32 %v1326, %v958
      %v1455 = vmul.f32 %v1330, %v959
      %v1456 = vmul.f32 %v1334, %v960
      %v1457 = vmul.f32 %v1330, %v961
      %v1458 = vmul.f32 %v1334, %v962
      %v1459 = vmul.f32 %v1338, %v963
      %v1460 = vmul.f32 %v1342, %v964
      %v1461 = vmul.f32 %v1338, %v965
      %v1462 = vmul.f32 %v1342, %v966
      %v1463 = vmul.f32 %v1346, %v967
      %v1464 = vmul.f32 %v1350, %v968
      %v1465 = vmul.f32 %v1346, %v969
      %v1466 = vmul.f32 %v1350, %v970
      %v1467 = vmul.f32 %v1354, %v971
      %v1468 = vmul.f32 %v1358, %v972
      %v1469 = vmul.f32 %v1354, %v973
      %v1470 = vmul.f32 %v1358, %v974
      %v1471 = vmul.f32 %v1362, %v975
      %v1472 = vmul.f32 %v1366, %v976
      %v1473 = vmul.f32 %v1362, %v977
      %v1474 = vmul.f32 %v1366, %v978
      %v1475 = vmul.f32 %v1370, %v979
      %v1476 = vmul.f32 %v1374, %v980
      %v1477 = vmul.f32 %v1370, %v981
      %v1478 = vmul.f32 %v1374, %v982
      %v1479 = vmul.f32 %v1378, %v983
      %v1480 = vmul.f32 %v1382, %v984
      %v1481 = vmul.f32 %v1378, %v985
      %v1482 = vmul.f32 %v1382, %v986
      %v1483 = vmul.f32 %v1386, %v987
      %v1484 = vmul.f32 %v1390, %v988
      %v1485 = vmul.f32 %v1386, %v989
      %v1486 = vmul.f32 %v1390, %v990
      %v1487 = vlaneseq
      %v1488 = vshrl.u32 %v1487, 7
      %v1489 = vsub.s32 0, %v1488
      %v1490 = vrot.slane %v1187, %v1489
      %v1491 = vlaneseq
      %v1492 = vshrl.u32 %v1491, 7
      %v1493 = vsub.s32 1, %v1492
      %v1494 = vrot.slane %v1187, %v1493
      %v1495 = vlaneseq
      %v1496 = vshrl.u32 %v1495, 7
      %v1497 = vsub.s32 0, %v1496
      %v1498 = vrot.slane %v1201, %v1497
      %v1499 = vlaneseq
      %v1500 = vshrl.u32 %v1499, 7
      %v1501 = vsub.s32 1, %v1500
      %v1502 = vrot.slane %v1201, %v1501
      %v1503 = vlaneseq
      %v1504 = vshrl.u32 %v1503, 7
      %v1505 = vsub.s32 0, %v1504
      %v1506 = vrot.slane %v1209, %v1505
      %v1507 = vlaneseq
      %v1508 = vshrl.u32 %v1507, 7
      %v1509 = vsub.s32 1, %v1508
      %v1510 = vrot.slane %v1209, %v1509
      %v1511 = vlaneseq
      %v1512 = vshrl.u32 %v1511, 7
      %v1513 = vsub.s32 0, %v1512
      %v1514 = vrot.slane %v1211, %v1513
      %v1515 = vlaneseq
      %v1516 = vshrl.u32 %v1515, 7
      %v1517 = vsub.s32 1, %v1516
      %v1518 = vrot.slane %v1211, %v1517
      %v1519 = vlaneseq
      %v1520 = vshrl.u32 %v1519, 7
      %v1521 = vsub.s32 0, %v1520
      %v1522 = vrot.slane %v1194, %v1521
      %v1523 = vlaneseq
      %v1524 = vshrl.u32 %v1523, 7
      %v1525 = vsub.s32 1, %v1524
      %v1526 = vrot.slane %v1194, %v1525
      %v1527 = vlaneseq
      %v1528 = vshrl.u32 %v1527, 7
      %v1529 = vsub.s32 0, %v1528
      %v1530 = vrot.slane %v1208, %v1529
      %v1531 = vlaneseq
      %v1532 = vshrl.u32 %v1531, 7
      %v1533 = vsub.s32 1, %v1532
      %v1534 = vrot.slane %v1208, %v1533
      %v1535 = vlaneseq
      %v1536 = vshrl.u32 %v1535, 7
      %v1537 = vsub.s32 0, %v1536
      %v1538 = vrot.slane %v1210, %v1537
      %v1539 = vlaneseq
      %v1540 = vshrl.u32 %v1539, 7
      %v1541 = vsub.s32 1, %v1540
      %v1542 = vrot.slane %v1210, %v1541
      %v1543 = vlaneseq
      %v1544 = vshrl.u32 %v1543, 7
      %v1545 = vsub.s32 0, %v1544
      %v1546 = vrot.slane %v1212, %v1545
      %v1547 = vlaneseq
      %v1548 = vshrl.u32 %v1547, 7
      %v1549 = vsub.s32 1, %v1548
      %v1550 = vrot.slane %v1212, %v1549
      %v1551 = vlaneseq
      %v1552 = vshrl.u32 %v1551, 7
      %v1553 = vsub.s32 0, %v1552
      %v1554 = vrot.slane %v1237, %v1553
      %v1555 = vlaneseq
      %v1556 = vshrl.u32 %v1555, 7
      %v1557 = vsub.s32 1, %v1556
      %v1558 = vrot.slane %v1237, %v1557
      %v1559 = vlaneseq
      %v1560 = vshrl.u32 %v1559, 7
      %v1561 = vsub.s32 0, %v1560
      %v1562 = vrot.slane %v1251, %v1561
      %v1563 = vlaneseq
      %v1564 = vshrl.u32 %v1563, 7
      %v1565 = vsub.s32 1, %v1564
      %v1566 = vrot.slane %v1251, %v1565
      %v1567 = vlaneseq
      %v1568 = vshrl.u32 %v1567, 7
      %v1569 = vsub.s32 0, %v1568
      %v1570 = vrot.slane %v1259, %v1569
      %v1571 = vlaneseq
      %v1572 = vshrl.u32 %v1571, 7
      %v1573 = vsub.s32 1, %v1572
      %v1574 = vrot.slane %v1259, %v1573
      %v1575 = vlaneseq
      %v1576 = vshrl.u32 %v1575, 7
      %v1577 = vsub.s32 0, %v1576
      %v1578 = vrot.slane %v1261, %v1577
      %v1579 = vlaneseq
      %v1580 = vshrl.u32 %v1579, 7
      %v1581 = vsub.s32 1, %v1580
      %v1582 = vrot.slane %v1261, %v1581
      %v1583 = vlaneseq
      %v1584 = vshrl.u32 %v1583, 7
      %v1585 = vsub.s32 0, %v1584
      %v1586 = vrot.slane %v1244, %v1585
      %v1587 = vlaneseq
      %v1588 = vshrl.u32 %v1587, 7
      %v1589 = vsub.s32 1, %v1588
      %v1590 = vrot.slane %v1244, %v1589
      %v1591 = vlaneseq
      %v1592 = vshrl.u32 %v1591, 7
      %v1593 = vsub.s32 0, %v1592
      %v1594 = vrot.slane %v1258, %v1593
      %v1595 = vlaneseq
      %v1596 = vshrl.u32 %v1595, 7
      %v1597 = vsub.s32 1, %v1596
      %v1598 = vrot.slane %v1258, %v1597
      %v1599 = vlaneseq
      %v1600 = vshrl.u32 %v1599, 7
      %v1601 = vsub.s32 0, %v1600
      %v1602 = vrot.slane %v1260, %v1601
      %v1603 = vlaneseq
      %v1604 = vshrl.u32 %v1603, 7
      %v1605 = vsub.s32 1, %v1604
      %v1606 = vrot.slane %v1260, %v1605
      %v1607 = vlaneseq
      %v1608 = vshrl.u32 %v1607, 7
      %v1609 = vsub.s32 0, %v1608
      %v1610 = vrot.slane %v1262, %v1609
      %v1611 = vlaneseq
      %v1612 = vshrl.u32 %v1611, 7
      %v1613 = vsub.s32 1, %v1612
      %v1614 = vrot.slane %v1262, %v1613
      %v1647 = vmul.f32 %v1490, %v991
      %v1648 = vmul.f32 %v1494, %v992
      %v1649 = vmul.f32 %v1490, %v993
      %v1650 = vmul.f32 %v1494, %v994
      %v1651 = vmul.f32 %v1498, %v995
      %v1652 = vmul.f32 %v1502, %v996
      %v1653 = vmul.f32 %v1498, %v997
      %v1654 = vmul.f32 %v1502, %v998
      %v1655 = vmul.f32 %v1506, %v999
      %v1656 = vmul.f32 %v1510, %v1000
      %v1657 = vmul.f32 %v1506, %v1001
      %v1658 = vmul.f32 %v1510, %v1002
      %v1659 = vmul.f32 %v1514, %v1003
      %v1660 = vmul.f32 %v1518, %v1004
      %v1661 = vmul.f32 %v1514, %v1005
      %v1662 = vmul.f32 %v1518, %v1006
      %v1663 = vmul.f32 %v1522, %v1007
      %v1664 = vmul.f32 %v1526, %v1008
      %v1665 = vmul.f32 %v1522, %v1009
      %v1666 = vmul.f32 %v1526, %v1010
      %v1667 = vmul.f32 %v1530, %v1011
      %v1668 = vmul.f32 %v1534, %v1012
      %v1669 = vmul.f32 %v1530, %v1013
      %v1670 = vmul.f32 %v1534, %v1014
      %v1671 = vmul.f32 %v1538, %v1015
      %v1672 = vmul.f32 %v1542, %v1016
      %v1673 = vmul.f32 %v1538, %v1017
      %v1674 = vmul.f32 %v1542, %v1018
      %v1675 = vmul.f32 %v1546, %v1019
      %v1676 = vmul.f32 %v1550, %v1020
      %v1677 = vmul.f32 %v1546, %v1021
      %v1678 = vmul.f32 %v1550, %v1022
      %v1679 = vmul.f32 %v1554, %v1023
      %v1680 = vmul.f32 %v1558, %v1024
      %v1681 = vmul.f32 %v1554, %v1025
      %v1682 = vmul.f32 %v1558, %v1026
      %v1683 = vmul.f32 %v1562, %v1027
      %v1684 = vmul.f32 %v1566, %v1028
      %v1685 = vmul.f32 %v1562, %v1029
      %v1686 = vmul.f32 %v1566, %v1030
      %v1687 = vmul.f32 %v1570, %v1031
      %v1688 = vmul.f32 %v1574, %v1032
      %v1689 = vmul.f32 %v1570, %v1033
      %v1690 = vmul.f32 %v1574, %v1034
      %v1691 = vmul.f32 %v1578, %v1035
      %v1692 = vmul.f32 %v1582, %v1036
      %v1693 = vmul.f32 %v1578, %v1037
      %v1694 = vmul.f32 %v1582, %v1038
      %v1695 = vmul.f32 %v1586, %v1039
      %v1696 = vmul.f32 %v1590, %v1040
      %v1697 = vmul.f32 %v1586, %v1041
      %v1698 = vmul.f32 %v1590, %v1042
      %v1699 = vmul.f32 %v1594, %v1043
      %v1700 = vmul.f32 %v1598, %v1044
      %v1701 = vmul.f32 %v1594, %v1045
      %v1702 = vmul.f32 %v1598, %v1046
      %v1703 = vmul.f32 %v1602, %v1047
      %v1704 = vmul.f32 %v1606, %v1048
      %v1705 = vmul.f32 %v1602, %v1049
      %v1706 = vmul.f32 %v1606, %v1050
      %v1707 = vmul.f32 %v1610, %v1051
      %v1708 = vmul.f32 %v1614, %v1052
      %v1709 = vmul.f32 %v1610, %v1053
      %v1710 = vmul.f32 %v1614, %v1054
      %v1711 = vsub.f32 %v1423, %v1647
      %v1712 = vsub.f32 %v1424, %v1648
      %v1713 = vsub.f32 %v1425, %v1649
      %v1714 = vsub.f32 %v1426, %v1650
      %v1715 = vsub.f32 %v1427, %v1651
      %v1716 = vsub.f32 %v1428, %v1652
      %v1717 = vsub.f32 %v1429, %v1653
      %v1718 = vsub.f32 %v1430, %v1654
      %v1719 = vsub.f32 %v1431, %v1655
      %v1720 = vsub.f32 %v1432, %v1656
      %v1721 = vsub.f32 %v1433, %v1657
      %v1722 = vsub.f32 %v1434, %v1658
      %v1723 = vsub.f32 %v1435, %v1659
      %v1724 = vsub.f32 %v1436, %v1660
      %v1725 = vsub.f32 %v1437, %v1661
      %v1726 = vsub.f32 %v1438, %v1662
      %v1727 = vsub.f32 %v1439, %v1663
      %v1728 = vsub.f32 %v1440, %v1664
      %v1729 = vsub.f32 %v1441, %v1665
      %v1730 = vsub.f32 %v1442, %v1666
      %v1731 = vsub.f32 %v1443, %v1667
      %v1732 = vsub.f32 %v1444, %v1668
      %v1733 = vsub.f32 %v1445, %v1669
      %v1734 = vsub.f32 %v1446, %v1670
      %v1735 = vsub.f32 %v1447, %v1671
      %v1736 = vsub.f32 %v1448, %v1672
      %v1737 = vsub.f32 %v1449, %v1673
      %v1738 = vsub.f32 %v1450, %v1674
      %v1739 = vsub.f32 %v1451, %v1675
      %v1740 = vsub.f32 %v1452, %v1676
      %v1741 = vsub.f32 %v1453, %v1677
      %v1742 = vsub.f32 %v1454, %v1678
      %v1743 = vsub.f32 %v1455, %v1679
      %v1744 = vsub.f32 %v1456, %v1680
      %v1745 = vsub.f32 %v1457, %v1681
      %v1746 = vsub.f32 %v1458, %v1682
      %v1747 = vsub.f32 %v1459, %v1683
      %v1748 = vsub.f32 %v1460, %v1684
      %v1749 = vsub.f32 %v1461, %v1685
      %v1750 = vsub.f32 %v1462, %v1686
      %v1751 = vsub.f32 %v1463, %v1687
      %v1752 = vsub.f32 %v1464, %v1688
      %v1753 = vsub.f32 %v1465, %v1689
      %v1754 = vsub.f32 %v1466, %v1690
      %v1755 = vsub.f32 %v1467, %v1691
      %v1756 = vsub.f32 %v1468, %v1692
      %v1757 = vsub.f32 %v1469, %v1693
      %v1758 = vsub.f32 %v1470, %v1694
      %v1759 = vsub.f32 %v1471, %v1695
      %v1760 = vsub.f32 %v1472, %v1696
      %v1761 = vsub.f32 %v1473, %v1697
      %v1762 = vsub.f32 %v1474, %v1698
      %v1763 = vsub.f32 %v1475, %v1699
      %v1764 = vsub.f32 %v1476, %v1700
      %v1765 = vsub.f32 %v1477, %v1701
      %v1766 = vsub.f32 %v1478, %v1702
      %v1767 = vsub.f32 %v1479, %v1703
      %v1768 = vsub.f32 %v1480, %v1704
      %v1769 = vsub.f32 %v1481, %v1705
      %v1770 = vsub.f32 %v1482, %v1706
      %v1771 = vsub.f32 %v1483, %v1707
      %v1772 = vsub.f32 %v1484, %v1708
      %v1773 = vsub.f32 %v1485, %v1709
      %v1774 = vsub.f32 %v1486, %v1710
      %v1775 = vadd.f32 %v1711, %v1715
      %v1776 = vadd.f32 %v1775, %v1719
      %v1777 = vadd.f32 %v1776, %v1723
      %v1778 = vadd.f32 %v1777, %v1727
      %v1779 = vadd.f32 %v1778, %v1731
      %v1780 = vadd.f32 %v1779, %v1735
      %v1781 = vadd.f32 %v1780, %v1739
      %v1782 = vadd.f32 %v1781, %v1743
      %v1783 = vadd.f32 %v1782, %v1747
      %v1784 = vadd.f32 %v1783, %v1751
      %v1785 = vadd.f32 %v1784, %v1755
      %v1786 = vadd.f32 %v1785, %v1759
      %v1787 = vadd.f32 %v1786, %v1763
      %v1788 = vadd.f32 %v1787, %v1767
      %v1789 = vadd.f32 %v1788, %v1771
      %vm1790 = vcmask 130048
      %v1791 = vsel %vm1790, %v1712, 0.0
      %v1792 = vsel %vm1790, %v1716, 0.0
      %v1793 = vadd.f32 %v1791, %v1792
      %v1794 = vsel %vm1790, %v1720, 0.0
      %v1795 = vadd.f32 %v1793, %v1794
      %v1796 = vsel %vm1790, %v1724, 0.0
      %v1797 = vadd.f32 %v1795, %v1796
      %v1798 = vsel %vm1790, %v1728, 0.0
      %v1799 = vadd.f32 %v1797, %v1798
      %v1800 = vsel %vm1790, %v1732, 0.0
      %v1801 = vadd.f32 %v1799, %v1800
      %v1802 = vsel %vm1790, %v1736, 0.0
      %v1803 = vadd.f32 %v1801, %v1802
      %v1804 = vsel %vm1790, %v1740, 0.0
      %v1805 = vadd.f32 %v1803, %v1804
      %v1806 = vsel %vm1790, %v1744, 0.0
      %v1807 = vadd.f32 %v1805, %v1806
      %v1808 = vsel %vm1790, %v1748, 0.0
      %v1809 = vadd.f32 %v1807, %v1808
      %v1810 = vsel %vm1790, %v1752, 0.0
      %v1811 = vadd.f32 %v1809, %v1810
      %v1812 = vsel %vm1790, %v1756, 0.0
      %v1813 = vadd.f32 %v1811, %v1812
      %v1814 = vsel %vm1790, %v1760, 0.0
      %v1815 = vadd.f32 %v1813, %v1814
      %v1816 = vsel %vm1790, %v1764, 0.0
      %v1817 = vadd.f32 %v1815, %v1816
      %v1818 = vsel %vm1790, %v1768, 0.0
      %v1819 = vadd.f32 %v1817, %v1818
      %v1820 = vsel %vm1790, %v1772, 0.0
      %v1821 = vadd.f32 %v1819, %v1820
      %v1822 = vadd.f32 %v1713, %v1717
      %v1823 = vadd.f32 %v1822, %v1721
      %v1824 = vadd.f32 %v1823, %v1725
      %v1825 = vadd.f32 %v1824, %v1729
      %v1826 = vadd.f32 %v1825, %v1733
      %v1827 = vadd.f32 %v1826, %v1737
      %v1828 = vadd.f32 %v1827, %v1741
      %v1829 = vadd.f32 %v1828, %v1745
      %v1830 = vadd.f32 %v1829, %v1749
      %v1831 = vadd.f32 %v1830, %v1753
      %v1832 = vadd.f32 %v1831, %v1757
      %v1833 = vadd.f32 %v1832, %v1761
      %v1834 = vadd.f32 %v1833, %v1765
      %v1835 = vadd.f32 %v1834, %v1769
      %v1836 = vadd.f32 %v1835, %v1773
      %v1837 = vsel %vm1790, %v1714, 0.0
      %v1838 = vsel %vm1790, %v1718, 0.0
      %v1839 = vadd.f32 %v1837, %v1838
      %v1840 = vsel %vm1790, %v1722, 0.0
      %v1841 = vadd.f32 %v1839, %v1840
      %v1842 = vsel %vm1790, %v1726, 0.0
      %v1843 = vadd.f32 %v1841, %v1842
      %v1844 = vsel %vm1790, %v1730, 0.0
      %v1845 = vadd.f32 %v1843, %v1844
      %v1846 = vsel %vm1790, %v1734, 0.0
      %v1847 = vadd.f32 %v1845, %v1846
      %v1848 = vsel %vm1790, %v1738, 0.0
      %v1849 = vadd.f32 %v1847, %v1848
      %v1850 = vsel %vm1790, %v1742, 0.0
      %v1851 = vadd.f32 %v1849, %v1850
      %v1852 = vsel %vm1790, %v1746, 0.0
      %v1853 = vadd.f32 %v1851, %v1852
      %v1854 = vsel %vm1790, %v1750, 0.0
      %v1855 = vadd.f32 %v1853, %v1854
      %v1856 = vsel %vm1790, %v1754, 0.0
      %v1857 = vadd.f32 %v1855, %v1856
      %v1858 = vsel %vm1790, %v1758, 0.0
      %v1859 = vadd.f32 %v1857, %v1858
      %v1860 = vsel %vm1790, %v1762, 0.0
      %v1861 = vadd.f32 %v1859, %v1860
      %v1862 = vsel %vm1790, %v1766, 0.0
      %v1863 = vadd.f32 %v1861, %v1862
      %v1864 = vsel %vm1790, %v1770, 0.0
      %v1865 = vadd.f32 %v1863, %v1864
      %v1866 = vsel %vm1790, %v1774, 0.0
      %v1867 = vadd.f32 %v1865, %v1866
      %v1868 = vmul.f32 %v1266, %v991
      %v1869 = vmul.f32 %v1270, %v992
      %v1870 = vmul.f32 %v1266, %v993
      %v1871 = vmul.f32 %v1270, %v994
      %v1872 = vmul.f32 %v1274, %v995
      %v1873 = vmul.f32 %v1278, %v996
      %v1874 = vmul.f32 %v1274, %v997
      %v1875 = vmul.f32 %v1278, %v998
      %v1876 = vmul.f32 %v1282, %v999
      %v1877 = vmul.f32 %v1286, %v1000
      %v1878 = vmul.f32 %v1282, %v1001
      %v1879 = vmul.f32 %v1286, %v1002
      %v1880 = vmul.f32 %v1290, %v1003
      %v1881 = vmul.f32 %v1294, %v1004
      %v1882 = vmul.f32 %v1290, %v1005
      %v1883 = vmul.f32 %v1294, %v1006
      %v1884 = vmul.f32 %v1298, %v1007
      %v1885 = vmul.f32 %v1302, %v1008
      %v1886 = vmul.f32 %v1298, %v1009
      %v1887 = vmul.f32 %v1302, %v1010
      %v1888 = vmul.f32 %v1306, %v1011
      %v1889 = vmul.f32 %v1310, %v1012
      %v1890 = vmul.f32 %v1306, %v1013
      %v1891 = vmul.f32 %v1310, %v1014
      %v1892 = vmul.f32 %v1314, %v1015
      %v1893 = vmul.f32 %v1318, %v1016
      %v1894 = vmul.f32 %v1314, %v1017
      %v1895 = vmul.f32 %v1318, %v1018
      %v1896 = vmul.f32 %v1322, %v1019
      %v1897 = vmul.f32 %v1326, %v1020
      %v1898 = vmul.f32 %v1322, %v1021
      %v1899 = vmul.f32 %v1326, %v1022
      %v1900 = vmul.f32 %v1330, %v1023
      %v1901 = vmul.f32 %v1334, %v1024
      %v1902 = vmul.f32 %v1330, %v1025
      %v1903 = vmul.f32 %v1334, %v1026
      %v1904 = vmul.f32 %v1338, %v1027
      %v1905 = vmul.f32 %v1342, %v1028
      %v1906 = vmul.f32 %v1338, %v1029
      %v1907 = vmul.f32 %v1342, %v1030
      %v1908 = vmul.f32 %v1346, %v1031
      %v1909 = vmul.f32 %v1350, %v1032
      %v1910 = vmul.f32 %v1346, %v1033
      %v1911 = vmul.f32 %v1350, %v1034
      %v1912 = vmul.f32 %v1354, %v1035
      %v1913 = vmul.f32 %v1358, %v1036
      %v1914 = vmul.f32 %v1354, %v1037
      %v1915 = vmul.f32 %v1358, %v1038
      %v1916 = vmul.f32 %v1362, %v1039
      %v1917 = vmul.f32 %v1366, %v1040
      %v1918 = vmul.f32 %v1362, %v1041
      %v1919 = vmul.f32 %v1366, %v1042
      %v1920 = vmul.f32 %v1370, %v1043
      %v1921 = vmul.f32 %v1374, %v1044
      %v1922 = vmul.f32 %v1370, %v1045
      %v1923 = vmul.f32 %v1374, %v1046
      %v1924 = vmul.f32 %v1378, %v1047
      %v1925 = vmul.f32 %v1382, %v1048
      %v1926 = vmul.f32 %v1378, %v1049
      %v1927 = vmul.f32 %v1382, %v1050
      %v1928 = vmul.f32 %v1386, %v1051
      %v1929 = vmul.f32 %v1390, %v1052
      %v1930 = vmul.f32 %v1386, %v1053
      %v1931 = vmul.f32 %v1390, %v1054
      %v1932 = vmul.f32 %v1490, %v927
      %v1933 = vmul.f32 %v1494, %v928
      %v1934 = vmul.f32 %v1490, %v929
      %v1935 = vmul.f32 %v1494, %v930
      %v1936 = vmul.f32 %v1498, %v931
      %v1937 = vmul.f32 %v1502, %v932
      %v1938 = vmul.f32 %v1498, %v933
      %v1939 = vmul.f32 %v1502, %v934
      %v1940 = vmul.f32 %v1506, %v935
      %v1941 = vmul.f32 %v1510, %v936
      %v1942 = vmul.f32 %v1506, %v937
      %v1943 = vmul.f32 %v1510, %v938
      %v1944 = vmul.f32 %v1514, %v939
      %v1945 = vmul.f32 %v1518, %v940
      %v1946 = vmul.f32 %v1514, %v941
      %v1947 = vmul.f32 %v1518, %v942
      %v1948 = vmul.f32 %v1522, %v943
      %v1949 = vmul.f32 %v1526, %v944
      %v1950 = vmul.f32 %v1522, %v945
      %v1951 = vmul.f32 %v1526, %v946
      %v1952 = vmul.f32 %v1530, %v947
      %v1953 = vmul.f32 %v1534, %v948
      %v1954 = vmul.f32 %v1530, %v949
      %v1955 = vmul.f32 %v1534, %v950
      %v1956 = vmul.f32 %v1538, %v951
      %v1957 = vmul.f32 %v1542, %v952
      %v1958 = vmul.f32 %v1538, %v953
      %v1959 = vmul.f32 %v1542, %v954
      %v1960 = vmul.f32 %v1546, %v955
      %v1961 = vmul.f32 %v1550, %v956
      %v1962 = vmul.f32 %v1546, %v957
      %v1963 = vmul.f32 %v1550, %v958
      %v1964 = vmul.f32 %v1554, %v959
      %v1965 = vmul.f32 %v1558, %v960
      %v1966 = vmul.f32 %v1554, %v961
      %v1967 = vmul.f32 %v1558, %v962
      %v1968 = vmul.f32 %v1562, %v963
      %v1969 = vmul.f32 %v1566, %v964
      %v1970 = vmul.f32 %v1562, %v965
      %v1971 = vmul.f32 %v1566, %v966
      %v1972 = vmul.f32 %v1570, %v967
      %v1973 = vmul.f32 %v1574, %v968
      %v1974 = vmul.f32 %v1570, %v969
      %v1975 = vmul.f32 %v1574, %v970
      %v1976 = vmul.f32 %v1578, %v971
      %v1977 = vmul.f32 %v1582, %v972
      %v1978 = vmul.f32 %v1578, %v973
      %v1979 = vmul.f32 %v1582, %v974
      %v1980 = vmul.f32 %v1586, %v975
      %v1981 = vmul.f32 %v1590, %v976
      %v1982 = vmul.f32 %v1586, %v977
      %v1983 = vmul.f32 %v1590, %v978
      %v1984 = vmul.f32 %v1594, %v979
      %v1985 = vmul.f32 %v1598, %v980
      %v1986 = vmul.f32 %v1594, %v981
      %v1987 = vmul.f32 %v1598, %v982
      %v1988 = vmul.f32 %v1602, %v983
      %v1989 = vmul.f32 %v1606, %v984
      %v1990 = vmul.f32 %v1602, %v985
      %v1991 = vmul.f32 %v1606, %v986
      %v1992 = vmul.f32 %v1610, %v987
      %v1993 = vmul.f32 %v1614, %v988
      %v1994 = vmul.f32 %v1610, %v989
      %v1995 = vmul.f32 %v1614, %v990
      %v1996 = vadd.f32 %v1868, %v1932
      %v1997 = vadd.f32 %v1869, %v1933
      %v1998 = vadd.f32 %v1870, %v1934
      %v1999 = vadd.f32 %v1871, %v1935
      %v2000 = vadd.f32 %v1872, %v1936
      %v2001 = vadd.f32 %v1873, %v1937
      %v2002 = vadd.f32 %v1874, %v1938
      %v2003 = vadd.f32 %v1875, %v1939
      %v2004 = vadd.f32 %v1876, %v1940
      %v2005 = vadd.f32 %v1877, %v1941
      %v2006 = vadd.f32 %v1878, %v1942
      %v2007 = vadd.f32 %v1879, %v1943
      %v2008 = vadd.f32 %v1880, %v1944
      %v2009 = vadd.f32 %v1881, %v1945
      %v2010 = vadd.f32 %v1882, %v1946
      %v2011 = vadd.f32 %v1883, %v1947
      %v2012 = vadd.f32 %v1884, %v1948
      %v2013 = vadd.f32 %v1885, %v1949
      %v2014 = vadd.f32 %v1886, %v1950
      %v2015 = vadd.f32 %v1887, %v1951
      %v2016 = vadd.f32 %v1888, %v1952
      %v2017 = vadd.f32 %v1889, %v1953
      %v2018 = vadd.f32 %v1890, %v1954
      %v2019 = vadd.f32 %v1891, %v1955
      %v2020 = vadd.f32 %v1892, %v1956
      %v2021 = vadd.f32 %v1893, %v1957
      %v2022 = vadd.f32 %v1894, %v1958
      %v2023 = vadd.f32 %v1895, %v1959
      %v2024 = vadd.f32 %v1896, %v1960
      %v2025 = vadd.f32 %v1897, %v1961
      %v2026 = vadd.f32 %v1898, %v1962
      %v2027 = vadd.f32 %v1899, %v1963
      %v2028 = vadd.f32 %v1900, %v1964
      %v2029 = vadd.f32 %v1901, %v1965
      %v2030 = vadd.f32 %v1902, %v1966
      %v2031 = vadd.f32 %v1903, %v1967
      %v2032 = vadd.f32 %v1904, %v1968
      %v2033 = vadd.f32 %v1905, %v1969
      %v2034 = vadd.f32 %v1906, %v1970
      %v2035 = vadd.f32 %v1907, %v1971
      %v2036 = vadd.f32 %v1908, %v1972
      %v2037 = vadd.f32 %v1909, %v1973
      %v2038 = vadd.f32 %v1910, %v1974
      %v2039 = vadd.f32 %v1911, %v1975
      %v2040 = vadd.f32 %v1912, %v1976
      %v2041 = vadd.f32 %v1913, %v1977
      %v2042 = vadd.f32 %v1914, %v1978
      %v2043 = vadd.f32 %v1915, %v1979
      %v2044 = vadd.f32 %v1916, %v1980
      %v2045 = vadd.f32 %v1917, %v1981
      %v2046 = vadd.f32 %v1918, %v1982
      %v2047 = vadd.f32 %v1919, %v1983
      %v2048 = vadd.f32 %v1920, %v1984
      %v2049 = vadd.f32 %v1921, %v1985
      %v2050 = vadd.f32 %v1922, %v1986
      %v2051 = vadd.f32 %v1923, %v1987
      %v2052 = vadd.f32 %v1924, %v1988
      %v2053 = vadd.f32 %v1925, %v1989
      %v2054 = vadd.f32 %v1926, %v1990
      %v2055 = vadd.f32 %v1927, %v1991
      %v2056 = vadd.f32 %v1928, %v1992
      %v2057 = vadd.f32 %v1929, %v1993
      %v2058 = vadd.f32 %v1930, %v1994
      %v2059 = vadd.f32 %v1931, %v1995
      %v2060 = vadd.f32 %v1996, %v2000
      %v2061 = vadd.f32 %v2060, %v2004
      %v2062 = vadd.f32 %v2061, %v2008
      %v2063 = vadd.f32 %v2062, %v2012
      %v2064 = vadd.f32 %v2063, %v2016
      %v2065 = vadd.f32 %v2064, %v2020
      %v2066 = vadd.f32 %v2065, %v2024
      %v2067 = vadd.f32 %v2066, %v2028
      %v2068 = vadd.f32 %v2067, %v2032
      %v2069 = vadd.f32 %v2068, %v2036
      %v2070 = vadd.f32 %v2069, %v2040
      %v2071 = vadd.f32 %v2070, %v2044
      %v2072 = vadd.f32 %v2071, %v2048
      %v2073 = vadd.f32 %v2072, %v2052
      %v2074 = vadd.f32 %v2073, %v2056
      %v2075 = vsel %vm1790, %v1997, 0.0
      %v2076 = vsel %vm1790, %v2001, 0.0
      %v2077 = vadd.f32 %v2075, %v2076
      %v2078 = vsel %vm1790, %v2005, 0.0
      %v2079 = vadd.f32 %v2077, %v2078
      %v2080 = vsel %vm1790, %v2009, 0.0
      %v2081 = vadd.f32 %v2079, %v2080
      %v2082 = vsel %vm1790, %v2013, 0.0
      %v2083 = vadd.f32 %v2081, %v2082
      %v2084 = vsel %vm1790, %v2017, 0.0
      %v2085 = vadd.f32 %v2083, %v2084
      %v2086 = vsel %vm1790, %v2021, 0.0
      %v2087 = vadd.f32 %v2085, %v2086
      %v2088 = vsel %vm1790, %v2025, 0.0
      %v2089 = vadd.f32 %v2087, %v2088
      %v2090 = vsel %vm1790, %v2029, 0.0
      %v2091 = vadd.f32 %v2089, %v2090
      %v2092 = vsel %vm1790, %v2033, 0.0
      %v2093 = vadd.f32 %v2091, %v2092
      %v2094 = vsel %vm1790, %v2037, 0.0
      %v2095 = vadd.f32 %v2093, %v2094
      %v2096 = vsel %vm1790, %v2041, 0.0
      %v2097 = vadd.f32 %v2095, %v2096
      %v2098 = vsel %vm1790, %v2045, 0.0
      %v2099 = vadd.f32 %v2097, %v2098
      %v2100 = vsel %vm1790, %v2049, 0.0
      %v2101 = vadd.f32 %v2099, %v2100
      %v2102 = vsel %vm1790, %v2053, 0.0
      %v2103 = vadd.f32 %v2101, %v2102
      %v2104 = vsel %vm1790, %v2057, 0.0
      %v2105 = vadd.f32 %v2103, %v2104
      %v2106 = vadd.f32 %v1998, %v2002
      %v2107 = vadd.f32 %v2106, %v2006
      %v2108 = vadd.f32 %v2107, %v2010
      %v2109 = vadd.f32 %v2108, %v2014
      %v2110 = vadd.f32 %v2109, %v2018
      %v2111 = vadd.f32 %v2110, %v2022
      %v2112 = vadd.f32 %v2111, %v2026
      %v2113 = vadd.f32 %v2112, %v2030
      %v2114 = vadd.f32 %v2113, %v2034
      %v2115 = vadd.f32 %v2114, %v2038
      %v2116 = vadd.f32 %v2115, %v2042
      %v2117 = vadd.f32 %v2116, %v2046
      %v2118 = vadd.f32 %v2117, %v2050
      %v2119 = vadd.f32 %v2118, %v2054
      %v2120 = vadd.f32 %v2119, %v2058
      %v2121 = vsel %vm1790, %v1999, 0.0
      %v2122 = vsel %vm1790, %v2003, 0.0
      %v2123 = vadd.f32 %v2121, %v2122
      %v2124 = vsel %vm1790, %v2007, 0.0
      %v2125 = vadd.f32 %v2123, %v2124
      %v2126 = vsel %vm1790, %v2011, 0.0
      %v2127 = vadd.f32 %v2125, %v2126
      %v2128 = vsel %vm1790, %v2015, 0.0
      %v2129 = vadd.f32 %v2127, %v2128
      %v2130 = vsel %vm1790, %v2019, 0.0
      %v2131 = vadd.f32 %v2129, %v2130
      %v2132 = vsel %vm1790, %v2023, 0.0
      %v2133 = vadd.f32 %v2131, %v2132
      %v2134 = vsel %vm1790, %v2027, 0.0
      %v2135 = vadd.f32 %v2133, %v2134
      %v2136 = vsel %vm1790, %v2031, 0.0
      %v2137 = vadd.f32 %v2135, %v2136
      %v2138 = vsel %vm1790, %v2035, 0.0
      %v2139 = vadd.f32 %v2137, %v2138
      %v2140 = vsel %vm1790, %v2039, 0.0
      %v2141 = vadd.f32 %v2139, %v2140
      %v2142 = vsel %vm1790, %v2043, 0.0
      %v2143 = vadd.f32 %v2141, %v2142
      %v2144 = vsel %vm1790, %v2047, 0.0
      %v2145 = vadd.f32 %v2143, %v2144
      %v2146 = vsel %vm1790, %v2051, 0.0
      %v2147 = vadd.f32 %v2145, %v2146
      %v2148 = vsel %vm1790, %v2055, 0.0
      %v2149 = vadd.f32 %v2147, %v2148
      %v2150 = vsel %vm1790, %v2059, 0.0
      %v2151 = vadd.f32 %v2149, %v2150
      %v2152 = vld [vmem:[%s16] sm:$0xff]
      %v2153 = vld [vmem:[%s16 + $0x8] sm:$0xff]
      %v2154 = vld [vmem:[%s16 + $0x10] sm:$0xff]
      %v2155 = vld [vmem:[%s16 + $0x18] sm:$0xff]
      %v2156 = vld [vmem:[%s16 + $0x20] sm:$0xff]
      %v2157 = vld [vmem:[%s16 + $0x28] sm:$0xff]
      %v2158 = vld [vmem:[%s16 + $0x30] sm:$0xff]
      %v2159 = vld [vmem:[%s16 + $0x38] sm:$0xff]
      %v2160 = vld [vmem:[%s16 + $0x40] sm:$0xff]
      %v2161 = vld [vmem:[%s16 + $0x48] sm:$0xff]
      %v2162 = vld [vmem:[%s16 + $0x50] sm:$0xff]
      %v2163 = vld [vmem:[%s16 + $0x58] sm:$0xff]
      %v2164 = vld [vmem:[%s16 + $0x60] sm:$0xff]
      %v2165 = vld [vmem:[%s16 + $0x68] sm:$0xff]
      %v2166 = vld [vmem:[%s16 + $0x70] sm:$0xff]
      %v2167 = vld [vmem:[%s16 + $0x78] sm:$0xff]
      %v2168 = vld [vmem:[%s16 + $0x80] sm:$0xff]
      %v2169 = vld [vmem:[%s16 + $0x88] sm:$0xff]
      %v2170 = vld [vmem:[%s16 + $0x90] sm:$0xff]
      %v2171 = vld [vmem:[%s16 + $0x98] sm:$0xff]
      %v2172 = vld [vmem:[%s16 + $0xa0] sm:$0xff]
      %v2173 = vld [vmem:[%s16 + $0xa8] sm:$0xff]
      %v2174 = vld [vmem:[%s16 + $0xb0] sm:$0xff]
      %v2175 = vld [vmem:[%s16 + $0xb8] sm:$0xff]
      %v2176 = vld [vmem:[%s16 + $0xc0] sm:$0xff]
      %v2177 = vld [vmem:[%s16 + $0xc8] sm:$0xff]
      %v2178 = vld [vmem:[%s16 + $0xd0] sm:$0xff]
      %v2179 = vld [vmem:[%s16 + $0xd8] sm:$0xff]
      %v2180 = vld [vmem:[%s16 + $0xe0] sm:$0xff]
      %v2181 = vld [vmem:[%s16 + $0xe8] sm:$0xff]
      %v2182 = vld [vmem:[%s16 + $0xf0] sm:$0xff]
      %v2183 = vld [vmem:[%s16 + $0xf8] sm:$0xff]
      %v2184 = vld [vmem:[%s16 + $0x100] sm:$0xff]
      %v2185 = vld [vmem:[%s16 + $0x108] sm:$0xff]
      %v2186 = vld [vmem:[%s16 + $0x110] sm:$0xff]
      %v2187 = vld [vmem:[%s16 + $0x118] sm:$0xff]
      %v2188 = vld [vmem:[%s17] sm:$0xff]
      %v2189 = vld [vmem:[%s17 + $0x8] sm:$0xff]
      %v2190 = vld [vmem:[%s17 + $0x10] sm:$0xff]
      %v2191 = vld [vmem:[%s17 + $0x18] sm:$0xff]
      %v2192 = vld [vmem:[%s17 + $0x20] sm:$0xff]
      %v2193 = vld [vmem:[%s17 + $0x28] sm:$0xff]
      %v2194 = vld [vmem:[%s17 + $0x30] sm:$0xff]
      %v2195 = vld [vmem:[%s17 + $0x38] sm:$0xff]
      %v2196 = vld [vmem:[%s17 + $0x40] sm:$0xff]
      %v2197 = vld [vmem:[%s17 + $0x48] sm:$0xff]
      %v2198 = vld [vmem:[%s17 + $0x50] sm:$0xff]
      %v2199 = vld [vmem:[%s17 + $0x58] sm:$0xff]
      %v2200 = vld [vmem:[%s17 + $0x60] sm:$0xff]
      %v2201 = vld [vmem:[%s17 + $0x68] sm:$0xff]
      %v2202 = vld [vmem:[%s17 + $0x70] sm:$0xff]
      %v2203 = vld [vmem:[%s17 + $0x78] sm:$0xff]
      %v2204 = vld [vmem:[%s17 + $0x80] sm:$0xff]
      %v2205 = vld [vmem:[%s17 + $0x88] sm:$0xff]
      %v2206 = vld [vmem:[%s17 + $0x90] sm:$0xff]
      %v2207 = vld [vmem:[%s17 + $0x98] sm:$0xff]
      %v2208 = vld [vmem:[%s17 + $0xa0] sm:$0xff]
      %v2209 = vld [vmem:[%s17 + $0xa8] sm:$0xff]
      %v2210 = vld [vmem:[%s17 + $0xb0] sm:$0xff]
      %v2211 = vld [vmem:[%s17 + $0xb8] sm:$0xff]
      %v2212 = vld [vmem:[%s17 + $0xc0] sm:$0xff]
      %v2213 = vld [vmem:[%s17 + $0xc8] sm:$0xff]
      %v2214 = vld [vmem:[%s17 + $0xd0] sm:$0xff]
      %v2215 = vld [vmem:[%s17 + $0xd8] sm:$0xff]
      %v2216 = vld [vmem:[%s17 + $0xe0] sm:$0xff]
      %v2217 = vld [vmem:[%s17 + $0xe8] sm:$0xff]
      %v2218 = vld [vmem:[%s17 + $0xf0] sm:$0xff]
      %v2219 = vld [vmem:[%s17 + $0xf8] sm:$0xff]
      %v2220 = vld [vmem:[%s17 + $0x100] sm:$0xff]
      %v2221 = vld [vmem:[%s17 + $0x108] sm:$0xff]
      %v2222 = vld [vmem:[%s17 + $0x110] sm:$0xff]
      %v2223 = vld [vmem:[%s17 + $0x118] sm:$0xff]
      %v2225 = vsel %vm1790, %v2105, 0
      %v2228 = vsel %vm1790, %v2151, 0
      %2230 = vmatprep.subr.mxu0 %v2189
      %2231 = vmatpush1.msra.mxu0 %v2188
      %2232 = vmatprep.subr.mxu0 %v2191
      %2233 = vmatpush1.msra.mxu0 %v2190
      %2234 = vmatprep.subr.mxu0 %v2193
      %2235 = vmatpush1.msra.mxu0 %v2192
      %2236 = vmatprep.subr.mxu0 %v2195
      %2237 = vmatpush1.msra.mxu0 %v2194
      %2238 = vmatprep.subr.mxu0 %v2197
      %2239 = vmatpush1.msra.mxu0 %v2196
      %2240 = vmatprep.subr.mxu0 %v2199
      %2241 = vmatpush1.msra.mxu0 %v2198
      %2242 = vmatprep.subr.mxu0 %v2201
      %2243 = vmatpush1.msra.mxu0 %v2200
      %2244 = vmatprep.subr.mxu0 %v2203
      %2245 = vmatpush1.msra.mxu0 %v2202
      %2246 = vmatprep.subr.mxu0 %v2205
      %2247 = vmatpush1.msra.mxu0 %v2204
      %2248 = vmatprep.subr.mxu0 %v2207
      %2249 = vmatpush1.msra.mxu0 %v2206
      %2250 = vmatprep.subr.mxu0 %v2209
      %2251 = vmatpush1.msra.mxu0 %v2208
      %2252 = vmatprep.subr.mxu0 %v2211
      %2253 = vmatpush1.msra.mxu0 %v2210
      %2254 = vmatprep.subr.mxu0 %v2213
      %2255 = vmatpush1.msra.mxu0 %v2212
      %2256 = vmatprep.subr.mxu0 %v2215
      %2257 = vmatpush1.msra.mxu0 %v2214
      %2258 = vmatprep.subr.mxu0 %v2217
      %2259 = vmatpush1.msra.mxu0 %v2216
      %2260 = vmatprep.subr.mxu0 %v2219
      %2261 = vmatpush1.msra.mxu0 %v2218
      %2262 = vmatprep.subr.mxu0 %v2221
      %2263 = vmatpush1.msra.mxu0 %v2220
      %2264 = vmatprep.subr.mxu0 %v2223
      %2265 = vmatpush1.msra.mxu0 %v2222
      %2266 = vmatprep.subr.mxu0 0.0
      %2267 = vmatpush1.msra.mxu0 0.0
      %2268 = vmatprep.subr.mxu0 0.0
      %2269 = vmatpush1.msra.mxu0 0.0
      %2270 = vmatprep.subr.mxu0 0.0
      %2271 = vmatpush1.msra.mxu0 0.0
      %2272 = vmatprep.subr.mxu0 0.0
      %2273 = vmatpush1.msra.mxu0 0.0
      %2274 = vmatprep.subr.mxu0 0.0
      %2275 = vmatpush1.msra.mxu0 0.0
      %2276 = vmatprep.subr.mxu0 0.0
      %2277 = vmatpush1.msra.mxu0 0.0
      %2278 = vmatprep.subr.mxu0 0.0
      %2279 = vmatpush1.msra.mxu0 0.0
      %2280 = vmatprep.subr.mxu0 0.0
      %2281 = vmatpush1.msra.mxu0 0.0
      %2282 = vmatprep.subr.mxu0 0.0
      %2283 = vmatpush1.msra.mxu0 0.0
      %2284 = vmatprep.subr.mxu0 0.0
      %2285 = vmatpush1.msra.mxu0 0.0
      %2286 = vmatprep.subr.mxu0 0.0
      %2287 = vmatpush1.msra.mxu0 0.0
      %2288 = vmatprep.subr.mxu0 0.0
      %2289 = vmatpush1.msra.mxu0 0.0
      %2290 = vmatprep.subr.mxu0 0.0
      %2291 = vmatpush1.msra.mxu0 0.0
      %2292 = vmatprep.subr.mxu0 0.0
      %2293 = vmatpush1.msra.mxu0 0.0
      %2294 = vmatprep.mubr.f32.mxu0 %v2225
      %2295 = vmatmul.mubr.f32.gmra.mrb[0].mxu0 %v2074
      %v2296 = vpop.f32.mrb[0].mxu0
      %v2297 = vadd.f32 0.0, %v2296
      %v2298 = vpop.f32.mrb[0].mxu0
      %v2299 = vadd.f32 0.0, %v2298
      %2300 = vmatprep.mubr.f32.mxu0 %v2228
      %2301 = vmatmul.mubr.f32.gmra.mrb[0].mxu0 %v2120
      %v2302 = vpop.f32.mrb[0].mxu0
      %v2303 = vadd.f32 0.0, %v2302
      %v2304 = vpop.f32.mrb[0].mxu0
      %v2305 = vadd.f32 0.0, %v2304
      %2306 = vdwg.mxu0
      %v2308 = vsel %vm1790, %v1821, 0
      %v2311 = vsel %vm1790, %v1867, 0
      %2313 = vmatprep.subr.mxu0 %v2153
      %2314 = vmatpush1.msra.mxu0 %v2152
      %2315 = vmatprep.subr.mxu0 %v2155
      %2316 = vmatpush1.msra.mxu0 %v2154
      %2317 = vmatprep.subr.mxu0 %v2157
      %2318 = vmatpush1.msra.mxu0 %v2156
      %2319 = vmatprep.subr.mxu0 %v2159
      %2320 = vmatpush1.msra.mxu0 %v2158
      %2321 = vmatprep.subr.mxu0 %v2161
      %2322 = vmatpush1.msra.mxu0 %v2160
      %2323 = vmatprep.subr.mxu0 %v2163
      %2324 = vmatpush1.msra.mxu0 %v2162
      %2325 = vmatprep.subr.mxu0 %v2165
      %2326 = vmatpush1.msra.mxu0 %v2164
      %2327 = vmatprep.subr.mxu0 %v2167
      %2328 = vmatpush1.msra.mxu0 %v2166
      %2329 = vmatprep.subr.mxu0 %v2169
      %2330 = vmatpush1.msra.mxu0 %v2168
      %2331 = vmatprep.subr.mxu0 %v2171
      %2332 = vmatpush1.msra.mxu0 %v2170
      %2333 = vmatprep.subr.mxu0 %v2173
      %2334 = vmatpush1.msra.mxu0 %v2172
      %2335 = vmatprep.subr.mxu0 %v2175
      %2336 = vmatpush1.msra.mxu0 %v2174
      %2337 = vmatprep.subr.mxu0 %v2177
      %2338 = vmatpush1.msra.mxu0 %v2176
      %2339 = vmatprep.subr.mxu0 %v2179
      %2340 = vmatpush1.msra.mxu0 %v2178
      %2341 = vmatprep.subr.mxu0 %v2181
      %2342 = vmatpush1.msra.mxu0 %v2180
      %2343 = vmatprep.subr.mxu0 %v2183
      %2344 = vmatpush1.msra.mxu0 %v2182
      %2345 = vmatprep.subr.mxu0 %v2185
      %2346 = vmatpush1.msra.mxu0 %v2184
      %2347 = vmatprep.subr.mxu0 %v2187
      %2348 = vmatpush1.msra.mxu0 %v2186
      %2349 = vmatprep.subr.mxu0 0.0
      %2350 = vmatpush1.msra.mxu0 0.0
      %2351 = vmatprep.subr.mxu0 0.0
      %2352 = vmatpush1.msra.mxu0 0.0
      %2353 = vmatprep.subr.mxu0 0.0
      %2354 = vmatpush1.msra.mxu0 0.0
      %2355 = vmatprep.subr.mxu0 0.0
      %2356 = vmatpush1.msra.mxu0 0.0
      %2357 = vmatprep.subr.mxu0 0.0
      %2358 = vmatpush1.msra.mxu0 0.0
      %2359 = vmatprep.subr.mxu0 0.0
      %2360 = vmatpush1.msra.mxu0 0.0
      %2361 = vmatprep.subr.mxu0 0.0
      %2362 = vmatpush1.msra.mxu0 0.0
      %2363 = vmatprep.subr.mxu0 0.0
      %2364 = vmatpush1.msra.mxu0 0.0
      %2365 = vmatprep.subr.mxu0 0.0
      %2366 = vmatpush1.msra.mxu0 0.0
      %2367 = vmatprep.subr.mxu0 0.0
      %2368 = vmatpush1.msra.mxu0 0.0
      %2369 = vmatprep.subr.mxu0 0.0
      %2370 = vmatpush1.msra.mxu0 0.0
      %2371 = vmatprep.subr.mxu0 0.0
      %2372 = vmatpush1.msra.mxu0 0.0
      %2373 = vmatprep.subr.mxu0 0.0
      %2374 = vmatpush1.msra.mxu0 0.0
      %2375 = vmatprep.subr.mxu0 0.0
      %2376 = vmatpush1.msra.mxu0 0.0
      %2377 = vmatprep.mubr.f32.mxu0 %v2308
      %2378 = vmatmul.mubr.f32.gmra.mrb[0].mxu0 %v1789
      %v2379 = vpop.f32.mrb[0].mxu0
      %v2380 = vadd.f32 %v2297, %v2379
      %v2381 = vpop.f32.mrb[0].mxu0
      %v2382 = vadd.f32 %v2299, %v2381
      %2383 = vmatprep.mubr.f32.mxu0 %v2311
      %2384 = vmatmul.mubr.f32.gmra.mrb[0].mxu0 %v1836
      %v2385 = vpop.f32.mrb[0].mxu0
      %v2386 = vadd.f32 %v2303, %v2385
      %v2387 = vpop.f32.mrb[0].mxu0
      %v2388 = vadd.f32 %v2305, %v2387
      %2389 = vdwg.mxu0
      %v2390 = vld [vmem:[%s5] sm:$0xff]
      %v2391 = vld [vmem:[%s5 + $0x8] sm:$0xff]
      %2393 = vset.pattern.permute.xlu0 0
      %2394 = vperm.xlu0 %2393, %v2390
      %v2395 = vpop.permute.xlu0 %2394
      %2398 = vset.pattern.permute.xlu0 0
      %2399 = vperm.xlu0 %2398, %v2391
      %v2400 = vpop.permute.xlu0 %2399
      %v2402 = vadd.f32 %v2380, %v2395
      %v2403 = vadd.f32 %v2382, %v2395
      %v2404 = vadd.f32 %v2386, %v2400
      %v2405 = vadd.f32 %v2388, %v2400
      %v2406 = vld [vmem:[%s6] sm:$0xff]
      %v2407 = vld [vmem:[%s6 + $0x8] sm:$0xff]
      %v2409 = vsel %vm1790, %v2406, 0
      %v2412 = vsel %vm1790, %v2407, 0
      %2414 = vmatprep.subr.mxu0 %v642
      %2415 = vmatpush1.msra.mxu0 %v641
      %2416 = vmatprep.subr.mxu0 %v644
      %2417 = vmatpush1.msra.mxu0 %v643
      %2418 = vmatprep.subr.mxu0 0.0
      %2419 = vmatpush1.msra.mxu0 0.0
      %2420 = vmatprep.subr.mxu0 0.0
      %2421 = vmatpush1.msra.mxu0 0.0
      %2422 = vmatprep.subr.mxu0 0.0
      %2423 = vmatpush1.msra.mxu0 0.0
      %2424 = vmatprep.subr.mxu0 0.0
      %2425 = vmatpush1.msra.mxu0 0.0
      %2426 = vmatprep.subr.mxu0 0.0
      %2427 = vmatpush1.msra.mxu0 0.0
      %2428 = vmatprep.subr.mxu0 0.0
      %2429 = vmatpush1.msra.mxu0 0.0
      %2430 = vmatprep.subr.mxu0 0.0
      %2431 = vmatpush1.msra.mxu0 0.0
      %2432 = vmatprep.subr.mxu0 0.0
      %2433 = vmatpush1.msra.mxu0 0.0
      %2434 = vmatprep.subr.mxu0 0.0
      %2435 = vmatpush1.msra.mxu0 0.0
      %2436 = vmatprep.subr.mxu0 0.0
      %2437 = vmatpush1.msra.mxu0 0.0
      %2438 = vmatprep.subr.mxu0 0.0
      %2439 = vmatpush1.msra.mxu0 0.0
      %2440 = vmatprep.subr.mxu0 0.0
      %2441 = vmatpush1.msra.mxu0 0.0
      %2442 = vmatprep.subr.mxu0 0.0
      %2443 = vmatpush1.msra.mxu0 0.0
      %2444 = vmatprep.subr.mxu0 0.0
      %2445 = vmatpush1.msra.mxu0 0.0
      %2446 = vmatprep.subr.mxu0 0.0
      %2447 = vmatpush1.msra.mxu0 0.0
      %2448 = vmatprep.subr.mxu0 0.0
      %2449 = vmatpush1.msra.mxu0 0.0
      %2450 = vmatprep.subr.mxu0 0.0
      %2451 = vmatpush1.msra.mxu0 0.0
      %2452 = vmatprep.subr.mxu0 0.0
      %2453 = vmatpush1.msra.mxu0 0.0
      %2454 = vmatprep.subr.mxu0 0.0
      %2455 = vmatpush1.msra.mxu0 0.0
      %2456 = vmatprep.subr.mxu0 0.0
      %2457 = vmatpush1.msra.mxu0 0.0
      %2458 = vmatprep.subr.mxu0 0.0
      %2459 = vmatpush1.msra.mxu0 0.0
      %2460 = vmatprep.subr.mxu0 0.0
      %2461 = vmatpush1.msra.mxu0 0.0
      %2462 = vmatprep.subr.mxu0 0.0
      %2463 = vmatpush1.msra.mxu0 0.0
      %2464 = vmatprep.subr.mxu0 0.0
      %2465 = vmatpush1.msra.mxu0 0.0
      %2466 = vmatprep.subr.mxu0 0.0
      %2467 = vmatpush1.msra.mxu0 0.0
      %2468 = vmatprep.subr.mxu0 0.0
      %2469 = vmatpush1.msra.mxu0 0.0
      %2470 = vmatprep.subr.mxu0 0.0
      %2471 = vmatpush1.msra.mxu0 0.0
      %2472 = vmatprep.subr.mxu0 0.0
      %2473 = vmatpush1.msra.mxu0 0.0
      %2474 = vmatprep.subr.mxu0 0.0
      %2475 = vmatpush1.msra.mxu0 0.0
      %2476 = vmatprep.subr.mxu0 0.0
      %2477 = vmatpush1.msra.mxu0 0.0
      %2478 = vmatprep.mubr.f32.mxu0 0.0
      %2479 = vmatmul.mubr.f32.gmra.mrb[0].mxu0 %v2409
      %v2480 = vpop.f32.mrb[0].mxu0
      %v2481 = vadd.f32 0.0, %v2480
      %v2482 = vpop.f32.mrb[0].mxu0
      %v2483 = vadd.f32 0.0, %v2482
      %2484 = vmatprep.mubr.f32.mxu0 0.0
      %2485 = vmatmul.mubr.f32.gmra.mrb[0].mxu0 %v2412
      %v2486 = vpop.f32.mrb[0].mxu0
      %v2487 = vadd.f32 0.0, %v2486
      %v2488 = vpop.f32.mrb[0].mxu0
      %v2489 = vadd.f32 0.0, %v2488
      %2490 = vdwg.mxu0
      %v2491 = vadd.f32 %v2402, %v2481
      %v2492 = vadd.f32 %v2403, %v2483
      %v2493 = vadd.f32 %v2404, %v2487
      %v2494 = vadd.f32 %v2405, %v2489
      %v2495 = vld [vmem:[%s7] sm:$0xff]
      %v2496 = vld [vmem:[%s7 + $0x8] sm:$0xff]
      %2498 = vset.pattern.permute.xlu0 0
      %2499 = vperm.xlu0 %2498, %v2495
      %v2500 = vpop.permute.xlu0 %2499
      %2503 = vset.pattern.permute.xlu0 0
      %2504 = vperm.xlu0 %2503, %v2496
      %v2505 = vpop.permute.xlu0 %2504
      %v2507 = vadd.f32 %v2491, %v2500
      %v2508 = vadd.f32 %v2492, %v2500
      %v2509 = vadd.f32 %v2493, %v2505
      %v2510 = vadd.f32 %v2494, %v2505
      %v2511 = vmul.f32 %v2507, 0.5
      %v2512 = vmul.f32 %v2508, 0.5
      %v2513 = vmul.f32 %v2509, 0.5
      %v2514 = vmul.f32 %v2510, 0.5
      %v2515 = vmul.f32 %v2507, 0.70710677
      %v2516 = vmul.f32 %v2508, 0.70710677
      %v2517 = vmul.f32 %v2509, 0.70710677
      %v2518 = vmul.f32 %v2510, 0.70710677
      %vm2519 = vcmp.ge.f32.partialorder %v2515, 0.0
      %vm2520 = vcmp.ge.f32.partialorder %v2516, 0.0
      %vm2521 = vcmp.ge.f32.partialorder %v2517, 0.0
      %vm2522 = vcmp.ge.f32.partialorder %v2518, 0.0
      %v2523 = vsel %vm2519, 1.0, -1.0
      %v2524 = vsel %vm2520, 1.0, -1.0
      %v2525 = vsel %vm2521, 1.0, -1.0
      %v2526 = vsel %vm2522, 1.0, -1.0
      %v2527 = vand.u32 2147483647, %v2515
      %v2528 = vand.u32 2147483647, %v2516
      %v2529 = vand.u32 2147483647, %v2517
      %v2530 = vand.u32 2147483647, %v2518
      %v2531 = vmul.f32 %v2527, 0.3275911
      %v2532 = vmul.f32 %v2528, 0.3275911
      %v2533 = vmul.f32 %v2529, 0.3275911
      %v2534 = vmul.f32 %v2530, 0.3275911
      %v2535 = vadd.f32 %v2531, 1.0
      %v2536 = vadd.f32 %v2532, 1.0
      %v2537 = vadd.f32 %v2533, 1.0
      %v2538 = vadd.f32 %v2534, 1.0
      %v2539 = vrcp.pop %v2535
      %v2540 = vmul.f32 1.0, %v2539
      %v2541 = vrcp.pop %v2536
      %v2542 = vmul.f32 1.0, %v2541
      %v2543 = vrcp.pop %v2537
      %v2544 = vmul.f32 1.0, %v2543
      %v2545 = vrcp.pop %v2538
      %v2546 = vmul.f32 1.0, %v2545
      %v2547 = vmul.f32 %v2540, 1.0614054
      %v2548 = vmul.f32 %v2542, 1.0614054
      %v2549 = vmul.f32 %v2544, 1.0614054
      %v2550 = vmul.f32 %v2546, 1.0614054
      %v2551 = vadd.f32 %v2547, -1.4531521
      %v2552 = vadd.f32 %v2548, -1.4531521
      %v2553 = vadd.f32 %v2549, -1.4531521
      %v2554 = vadd.f32 %v2550, -1.4531521
      %v2555 = vmul.f32 %v2551, %v2540
      %v2556 = vmul.f32 %v2552, %v2542
      %v2557 = vmul.f32 %v2553, %v2544
      %v2558 = vmul.f32 %v2554, %v2546
      %v2559 = vadd.f32 %v2555, 1.4214138
      %v2560 = vadd.f32 %v2556, 1.4214138
      %v2561 = vadd.f32 %v2557, 1.4214138
      %v2562 = vadd.f32 %v2558, 1.4214138
      %v2563 = vmul.f32 %v2559, %v2540
      %v2564 = vmul.f32 %v2560, %v2542
      %v2565 = vmul.f32 %v2561, %v2544
      %v2566 = vmul.f32 %v2562, %v2546
      %v2567 = vadd.f32 %v2563, -0.28449672
      %v2568 = vadd.f32 %v2564, -0.28449672
      %v2569 = vadd.f32 %v2565, -0.28449672
      %v2570 = vadd.f32 %v2566, -0.28449672
      %v2571 = vmul.f32 %v2567, %v2540
      %v2572 = vmul.f32 %v2568, %v2542
      %v2573 = vmul.f32 %v2569, %v2544
      %v2574 = vmul.f32 %v2570, %v2546
      %v2575 = vadd.f32 %v2571, 0.2548296
      %v2576 = vadd.f32 %v2572, 0.2548296
      %v2577 = vadd.f32 %v2573, 0.2548296
      %v2578 = vadd.f32 %v2574, 0.2548296
      %v2579 = vmul.f32 %v2575, %v2540
      %v2580 = vmul.f32 %v2576, %v2542
      %v2581 = vmul.f32 %v2577, %v2544
      %v2582 = vmul.f32 %v2578, %v2546
      %v2583 = vsub.f32 0.0, %v2527
      %v2584 = vsub.f32 0.0, %v2528
      %v2585 = vsub.f32 0.0, %v2529
      %v2586 = vsub.f32 0.0, %v2530
      %v2587 = vmul.f32 %v2583, %v2527
      %v2588 = vmul.f32 %v2584, %v2528
      %v2589 = vmul.f32 %v2585, %v2529
      %v2590 = vmul.f32 %v2586, %v2530
      %v2591 = vmul.f32 %v2587, 1.442695
      %v2592 = vpow.pop %v2591
      %v2593 = vmul.f32 %v2588, 1.442695
      %v2594 = vpow.pop %v2593
      %v2595 = vmul.f32 %v2589, 1.442695
      %v2596 = vpow.pop %v2595
      %v2597 = vmul.f32 %v2590, 1.442695
      %v2598 = vpow.pop %v2597
      %v2599 = vmul.f32 %v2579, %v2592
      %v2600 = vmul.f32 %v2580, %v2594
      %v2601 = vmul.f32 %v2581, %v2596
      %v2602 = vmul.f32 %v2582, %v2598
      %v2603 = vsub.f32 1.0, %v2599
      %v2604 = vsub.f32 1.0, %v2600
      %v2605 = vsub.f32 1.0, %v2601
      %v2606 = vsub.f32 1.0, %v2602
      %v2607 = vmul.f32 %v2523, %v2603
      %v2608 = vmul.f32 %v2524, %v2604
      %v2609 = vmul.f32 %v2525, %v2605
      %v2610 = vmul.f32 %v2526, %v2606
      %v2611 = vadd.f32 %v2607, 1.0
      %v2612 = vadd.f32 %v2608, 1.0
      %v2613 = vadd.f32 %v2609, 1.0
      %v2614 = vadd.f32 %v2610, 1.0
      %v2615 = vmul.f32 %v2511, %v2611
      %v2616 = vmul.f32 %v2512, %v2612
      %v2617 = vmul.f32 %v2513, %v2613
      %v2618 = vmul.f32 %v2514, %v2614
      %v2619 = vld [vmem:[%s8] sm:$0xff]
      %v2620 = vld [vmem:[%s8 + $0x8] sm:$0xff]
      %v2621 = vld [vmem:[%s9] sm:$0xff]
      %v2622 = vld [vmem:[%s9 + $0x8] sm:$0xff]
      %v2623 = vadd.f32 %v2615, %v2616
      %2624 = vadd.xlane.f32.xlu0 %v2623
      %v2625 = vpop.xlane.xlu0 %2624
      %v2626 = vadd.f32 %v2617, %v2618
      %2627 = vadd.xlane.f32.xlu0 %v2626
      %v2628 = vpop.xlane.xlu0 %2627
      %v2629 = vmul.f32 %v2625, %v590
      %v2630 = vmul.f32 %v2628, %v590
      %v2631 = vsub.f32 %v2615, %v2629
      %v2632 = vsub.f32 %v2616, %v2629
      %v2633 = vsub.f32 %v2617, %v2630
      %v2634 = vsub.f32 %v2618, %v2630
      %v2635 = vmul.f32 %v2631, %v2631
      %v2636 = vmul.f32 %v2632, %v2632
      %v2637 = vmul.f32 %v2633, %v2633
      %v2638 = vmul.f32 %v2634, %v2634
      %v2639 = vadd.f32 %v2635, %v2636
      %2640 = vadd.xlane.f32.xlu0 %v2639
      %v2641 = vpop.xlane.xlu0 %2640
      %v2642 = vadd.f32 %v2637, %v2638
      %2643 = vadd.xlane.f32.xlu0 %v2642
      %v2644 = vpop.xlane.xlu0 %2643
      %v2645 = vmul.f32 %v2641, %v590
      %v2646 = vmul.f32 %v2644, %v590
      %v2647 = vadd.f32 %v2645, 1e-06
      %v2648 = vadd.f32 %v2646, 1e-06
      %v2649 = vrsqrt.pop %v2647
      %v2650 = vrsqrt.pop %v2648
      %v2651 = vmul.f32 %v2631, %v2649
      %v2652 = vmul.f32 %v2632, %v2649
      %v2653 = vmul.f32 %v2633, %v2650
      %v2654 = vmul.f32 %v2634, %v2650
      %2656 = vset.pattern.permute.xlu0 0
      %2657 = vperm.xlu0 %2656, %v2619
      %v2658 = vpop.permute.xlu0 %2657
      %2661 = vset.pattern.permute.xlu0 0
      %2662 = vperm.xlu0 %2661, %v2620
      %v2663 = vpop.permute.xlu0 %2662
      %v2665 = vmul.f32 %v2651, %v2658
      %v2666 = vmul.f32 %v2652, %v2658
      %v2667 = vmul.f32 %v2653, %v2663
      %v2668 = vmul.f32 %v2654, %v2663
      %2670 = vset.pattern.permute.xlu0 0
      %2671 = vperm.xlu0 %2670, %v2621
      %v2672 = vpop.permute.xlu0 %2671
      %2675 = vset.pattern.permute.xlu0 0
      %2676 = vperm.xlu0 %2675, %v2622
      %v2677 = vpop.permute.xlu0 %2676
      %v2679 = vadd.f32 %v2665, %v2672
      %v2680 = vadd.f32 %v2666, %v2672
      %v2681 = vadd.f32 %v2667, %v2677
      %v2682 = vadd.f32 %v2668, %v2677
      %v2683 = vld [vmem:[%s10] sm:$0xff]
      %v2684 = vld [vmem:[%s10 + $0x8] sm:$0xff]
      %v2685 = vld [vmem:[%s10 + $0x10] sm:$0xff]
      %v2686 = vld [vmem:[%s10 + $0x18] sm:$0xff]
      %v2687 = vld [vmem:[%s11] sm:$0xff]
      %v2688 = vld [vmem:[%s11 + $0x8] sm:$0xff]
      %v2689 = vld [vmem:[%s11 + $0x10] sm:$0xff]
      %v2690 = vld [vmem:[%s11 + $0x18] sm:$0xff]
      %2692 = vset.pattern.permute.xlu0 0
      %2693 = vperm.xlu0 %2692, %v2687
      %v2694 = vpop.permute.xlu0 %2693
      %2697 = vset.pattern.permute.xlu0 0
      %2698 = vperm.xlu0 %2697, %v2688
      %v2699 = vpop.permute.xlu0 %2698
      %2702 = vset.pattern.permute.xlu0 0
      %2703 = vperm.xlu0 %2702, %v2689
      %v2704 = vpop.permute.xlu0 %2703
      %2707 = vset.pattern.permute.xlu0 0
      %2708 = vperm.xlu0 %2707, %v2690
      %v2709 = vpop.permute.xlu0 %2708
      %v2712 = vsel %vm1790, %v2683, 0
      %v2715 = vsel %vm1790, %v2684, 0
      %v2718 = vsel %vm1790, %v2685, 0
      %v2721 = vsel %vm1790, %v2686, 0
      %2723 = vmatprep.subr.mxu0 %v2680
      %2724 = vmatpush1.msra.mxu0 %v2679
      %2725 = vmatprep.subr.mxu0 %v2682
      %2726 = vmatpush1.msra.mxu0 %v2681
      %2727 = vmatprep.subr.mxu0 0.0
      %2728 = vmatpush1.msra.mxu0 0.0
      %2729 = vmatprep.subr.mxu0 0.0
      %2730 = vmatpush1.msra.mxu0 0.0
      %2731 = vmatprep.subr.mxu0 0.0
      %2732 = vmatpush1.msra.mxu0 0.0
      %2733 = vmatprep.subr.mxu0 0.0
      %2734 = vmatpush1.msra.mxu0 0.0
      %2735 = vmatprep.subr.mxu0 0.0
      %2736 = vmatpush1.msra.mxu0 0.0
      %2737 = vmatprep.subr.mxu0 0.0
      %2738 = vmatpush1.msra.mxu0 0.0
      %2739 = vmatprep.subr.mxu0 0.0
      %2740 = vmatpush1.msra.mxu0 0.0
      %2741 = vmatprep.subr.mxu0 0.0
      %2742 = vmatpush1.msra.mxu0 0.0
      %2743 = vmatprep.subr.mxu0 0.0
      %2744 = vmatpush1.msra.mxu0 0.0
      %2745 = vmatprep.subr.mxu0 0.0
      %2746 = vmatpush1.msra.mxu0 0.0
      %2747 = vmatprep.subr.mxu0 0.0
      %2748 = vmatpush1.msra.mxu0 0.0
      %2749 = vmatprep.subr.mxu0 0.0
      %2750 = vmatpush1.msra.mxu0 0.0
      %2751 = vmatprep.subr.mxu0 0.0
      %2752 = vmatpush1.msra.mxu0 0.0
      %2753 = vmatprep.subr.mxu0 0.0
      %2754 = vmatpush1.msra.mxu0 0.0
      %2755 = vmatprep.subr.mxu0 0.0
      %2756 = vmatpush1.msra.mxu0 0.0
      %2757 = vmatprep.subr.mxu0 0.0
      %2758 = vmatpush1.msra.mxu0 0.0
      %2759 = vmatprep.subr.mxu0 0.0
      %2760 = vmatpush1.msra.mxu0 0.0
      %2761 = vmatprep.subr.mxu0 0.0
      %2762 = vmatpush1.msra.mxu0 0.0
      %2763 = vmatprep.subr.mxu0 0.0
      %2764 = vmatpush1.msra.mxu0 0.0
      %2765 = vmatprep.subr.mxu0 0.0
      %2766 = vmatpush1.msra.mxu0 0.0
      %2767 = vmatprep.subr.mxu0 0.0
      %2768 = vmatpush1.msra.mxu0 0.0
      %2769 = vmatprep.subr.mxu0 0.0
      %2770 = vmatpush1.msra.mxu0 0.0
      %2771 = vmatprep.subr.mxu0 0.0
      %2772 = vmatpush1.msra.mxu0 0.0
      %2773 = vmatprep.subr.mxu0 0.0
      %2774 = vmatpush1.msra.mxu0 0.0
      %2775 = vmatprep.subr.mxu0 0.0
      %2776 = vmatpush1.msra.mxu0 0.0
      %2777 = vmatprep.subr.mxu0 0.0
      %2778 = vmatpush1.msra.mxu0 0.0
      %2779 = vmatprep.subr.mxu0 0.0
      %2780 = vmatpush1.msra.mxu0 0.0
      %2781 = vmatprep.subr.mxu0 0.0
      %2782 = vmatpush1.msra.mxu0 0.0
      %2783 = vmatprep.subr.mxu0 0.0
      %2784 = vmatpush1.msra.mxu0 0.0
      %2785 = vmatprep.subr.mxu0 0.0
      %2786 = vmatpush1.msra.mxu0 0.0
      %2787 = vmatprep.mubr.f32.mxu0 0.0
      %2788 = vmatmul.mubr.f32.gmra.mrb[0].mxu0 %v2712
      %v2789 = vpop.f32.mrb[0].mxu0
      %v2790 = vadd.f32 %v2694, %v2789
      %v2791 = vpop.f32.mrb[0].mxu0
      %v2792 = vadd.f32 %v2694, %v2791
      %2793 = vmatprep.mubr.f32.mxu0 0.0
      %2794 = vmatmul.mubr.f32.gmra.mrb[0].mxu0 %v2715
      %v2795 = vpop.f32.mrb[0].mxu0
      %v2796 = vadd.f32 %v2699, %v2795
      %v2797 = vpop.f32.mrb[0].mxu0
      %v2798 = vadd.f32 %v2699, %v2797
      %2799 = vmatprep.mubr.f32.mxu0 0.0
      %2800 = vmatmul.mubr.f32.gmra.mrb[0].mxu0 %v2718
      %v2801 = vpop.f32.mrb[0].mxu0
      %v2802 = vadd.f32 %v2704, %v2801
      %v2803 = vpop.f32.mrb[0].mxu0
      %v2804 = vadd.f32 %v2704, %v2803
      %2805 = vmatprep.mubr.f32.mxu0 0.0
      %2806 = vmatmul.mubr.f32.gmra.mrb[0].mxu0 %v2721
      %v2807 = vpop.f32.mrb[0].mxu0
      %v2808 = vadd.f32 %v2709, %v2807
      %v2809 = vpop.f32.mrb[0].mxu0
      %v2810 = vadd.f32 %v2709, %v2809
      %2811 = vdwg.mxu0
      %v2812 = vmul.f32 %v2790, 0.5
      %v2813 = vmul.f32 %v2792, 0.5
      %v2814 = vmul.f32 %v2796, 0.5
      %v2815 = vmul.f32 %v2798, 0.5
      %v2816 = vmul.f32 %v2802, 0.5
      %v2817 = vmul.f32 %v2804, 0.5
      %v2818 = vmul.f32 %v2808, 0.5
      %v2819 = vmul.f32 %v2810, 0.5
      %v2820 = vmul.f32 %v2790, 0.70710677
      %v2821 = vmul.f32 %v2792, 0.70710677
      %v2822 = vmul.f32 %v2796, 0.70710677
      %v2823 = vmul.f32 %v2798, 0.70710677
      %v2824 = vmul.f32 %v2802, 0.70710677
      %v2825 = vmul.f32 %v2804, 0.70710677
      %v2826 = vmul.f32 %v2808, 0.70710677
      %v2827 = vmul.f32 %v2810, 0.70710677
      %vm2828 = vcmp.ge.f32.partialorder %v2820, 0.0
      %vm2829 = vcmp.ge.f32.partialorder %v2821, 0.0
      %vm2830 = vcmp.ge.f32.partialorder %v2822, 0.0
      %vm2831 = vcmp.ge.f32.partialorder %v2823, 0.0
      %vm2832 = vcmp.ge.f32.partialorder %v2824, 0.0
      %vm2833 = vcmp.ge.f32.partialorder %v2825, 0.0
      %vm2834 = vcmp.ge.f32.partialorder %v2826, 0.0
      %vm2835 = vcmp.ge.f32.partialorder %v2827, 0.0
      %v2836 = vsel %vm2828, 1.0, -1.0
      %v2837 = vsel %vm2829, 1.0, -1.0
      %v2838 = vsel %vm2830, 1.0, -1.0
      %v2839 = vsel %vm2831, 1.0, -1.0
      %v2840 = vsel %vm2832, 1.0, -1.0
      %v2841 = vsel %vm2833, 1.0, -1.0
      %v2842 = vsel %vm2834, 1.0, -1.0
      %v2843 = vsel %vm2835, 1.0, -1.0
      %v2844 = vand.u32 2147483647, %v2820
      %v2845 = vand.u32 2147483647, %v2821
      %v2846 = vand.u32 2147483647, %v2822
      %v2847 = vand.u32 2147483647, %v2823
      %v2848 = vand.u32 2147483647, %v2824
      %v2849 = vand.u32 2147483647, %v2825
      %v2850 = vand.u32 2147483647, %v2826
      %v2851 = vand.u32 2147483647, %v2827
      %v2852 = vmul.f32 %v2844, 0.3275911
      %v2853 = vmul.f32 %v2845, 0.3275911
      %v2854 = vmul.f32 %v2846, 0.3275911
      %v2855 = vmul.f32 %v2847, 0.3275911
      %v2856 = vmul.f32 %v2848, 0.3275911
      %v2857 = vmul.f32 %v2849, 0.3275911
      %v2858 = vmul.f32 %v2850, 0.3275911
      %v2859 = vmul.f32 %v2851, 0.3275911
      %v2860 = vadd.f32 %v2852, 1.0
      %v2861 = vadd.f32 %v2853, 1.0
      %v2862 = vadd.f32 %v2854, 1.0
      %v2863 = vadd.f32 %v2855, 1.0
      %v2864 = vadd.f32 %v2856, 1.0
      %v2865 = vadd.f32 %v2857, 1.0
      %v2866 = vadd.f32 %v2858, 1.0
      %v2867 = vadd.f32 %v2859, 1.0
      %v2868 = vrcp.pop %v2860
      %v2869 = vmul.f32 1.0, %v2868
      %v2870 = vrcp.pop %v2861
      %v2871 = vmul.f32 1.0, %v2870
      %v2872 = vrcp.pop %v2862
      %v2873 = vmul.f32 1.0, %v2872
      %v2874 = vrcp.pop %v2863
      %v2875 = vmul.f32 1.0, %v2874
      %v2876 = vrcp.pop %v2864
      %v2877 = vmul.f32 1.0, %v2876
      %v2878 = vrcp.pop %v2865
      %v2879 = vmul.f32 1.0, %v2878
      %v2880 = vrcp.pop %v2866
      %v2881 = vmul.f32 1.0, %v2880
      %v2882 = vrcp.pop %v2867
      %v2883 = vmul.f32 1.0, %v2882
      %v2884 = vmul.f32 %v2869, 1.0614054
      %v2885 = vmul.f32 %v2871, 1.0614054
      %v2886 = vmul.f32 %v2873, 1.0614054
      %v2887 = vmul.f32 %v2875, 1.0614054
      %v2888 = vmul.f32 %v2877, 1.0614054
      %v2889 = vmul.f32 %v2879, 1.0614054
      %v2890 = vmul.f32 %v2881, 1.0614054
      %v2891 = vmul.f32 %v2883, 1.0614054
      %v2892 = vadd.f32 %v2884, -1.4531521
      %v2893 = vadd.f32 %v2885, -1.4531521
      %v2894 = vadd.f32 %v2886, -1.4531521
      %v2895 = vadd.f32 %v2887, -1.4531521
      %v2896 = vadd.f32 %v2888, -1.4531521
      %v2897 = vadd.f32 %v2889, -1.4531521
      %v2898 = vadd.f32 %v2890, -1.4531521
      %v2899 = vadd.f32 %v2891, -1.4531521
      %v2900 = vmul.f32 %v2892, %v2869
      %v2901 = vmul.f32 %v2893, %v2871
      %v2902 = vmul.f32 %v2894, %v2873
      %v2903 = vmul.f32 %v2895, %v2875
      %v2904 = vmul.f32 %v2896, %v2877
      %v2905 = vmul.f32 %v2897, %v2879
      %v2906 = vmul.f32 %v2898, %v2881
      %v2907 = vmul.f32 %v2899, %v2883
      %v2908 = vadd.f32 %v2900, 1.4214138
      %v2909 = vadd.f32 %v2901, 1.4214138
      %v2910 = vadd.f32 %v2902, 1.4214138
      %v2911 = vadd.f32 %v2903, 1.4214138
      %v2912 = vadd.f32 %v2904, 1.4214138
      %v2913 = vadd.f32 %v2905, 1.4214138
      %v2914 = vadd.f32 %v2906, 1.4214138
      %v2915 = vadd.f32 %v2907, 1.4214138
      %v2916 = vmul.f32 %v2908, %v2869
      %v2917 = vmul.f32 %v2909, %v2871
      %v2918 = vmul.f32 %v2910, %v2873
      %v2919 = vmul.f32 %v2911, %v2875
      %v2920 = vmul.f32 %v2912, %v2877
      %v2921 = vmul.f32 %v2913, %v2879
      %v2922 = vmul.f32 %v2914, %v2881
      %v2923 = vmul.f32 %v2915, %v2883
      %v2924 = vadd.f32 %v2916, -0.28449672
      %v2925 = vadd.f32 %v2917, -0.28449672
      %v2926 = vadd.f32 %v2918, -0.28449672
      %v2927 = vadd.f32 %v2919, -0.28449672
      %v2928 = vadd.f32 %v2920, -0.28449672
      %v2929 = vadd.f32 %v2921, -0.28449672
      %v2930 = vadd.f32 %v2922, -0.28449672
      %v2931 = vadd.f32 %v2923, -0.28449672
      %v2932 = vmul.f32 %v2924, %v2869
      %v2933 = vmul.f32 %v2925, %v2871
      %v2934 = vmul.f32 %v2926, %v2873
      %v2935 = vmul.f32 %v2927, %v2875
      %v2936 = vmul.f32 %v2928, %v2877
      %v2937 = vmul.f32 %v2929, %v2879
      %v2938 = vmul.f32 %v2930, %v2881
      %v2939 = vmul.f32 %v2931, %v2883
      %v2940 = vadd.f32 %v2932, 0.2548296
      %v2941 = vadd.f32 %v2933, 0.2548296
      %v2942 = vadd.f32 %v2934, 0.2548296
      %v2943 = vadd.f32 %v2935, 0.2548296
      %v2944 = vadd.f32 %v2936, 0.2548296
      %v2945 = vadd.f32 %v2937, 0.2548296
      %v2946 = vadd.f32 %v2938, 0.2548296
      %v2947 = vadd.f32 %v2939, 0.2548296
      %v2948 = vmul.f32 %v2940, %v2869
      %v2949 = vmul.f32 %v2941, %v2871
      %v2950 = vmul.f32 %v2942, %v2873
      %v2951 = vmul.f32 %v2943, %v2875
      %v2952 = vmul.f32 %v2944, %v2877
      %v2953 = vmul.f32 %v2945, %v2879
      %v2954 = vmul.f32 %v2946, %v2881
      %v2955 = vmul.f32 %v2947, %v2883
      %v2956 = vsub.f32 0.0, %v2844
      %v2957 = vsub.f32 0.0, %v2845
      %v2958 = vsub.f32 0.0, %v2846
      %v2959 = vsub.f32 0.0, %v2847
      %v2960 = vsub.f32 0.0, %v2848
      %v2961 = vsub.f32 0.0, %v2849
      %v2962 = vsub.f32 0.0, %v2850
      %v2963 = vsub.f32 0.0, %v2851
      %v2964 = vmul.f32 %v2956, %v2844
      %v2965 = vmul.f32 %v2957, %v2845
      %v2966 = vmul.f32 %v2958, %v2846
      %v2967 = vmul.f32 %v2959, %v2847
      %v2968 = vmul.f32 %v2960, %v2848
      %v2969 = vmul.f32 %v2961, %v2849
      %v2970 = vmul.f32 %v2962, %v2850
      %v2971 = vmul.f32 %v2963, %v2851
      %v2972 = vmul.f32 %v2964, 1.442695
      %v2973 = vpow.pop %v2972
      %v2974 = vmul.f32 %v2965, 1.442695
      %v2975 = vpow.pop %v2974
      %v2976 = vmul.f32 %v2966, 1.442695
      %v2977 = vpow.pop %v2976
      %v2978 = vmul.f32 %v2967, 1.442695
      %v2979 = vpow.pop %v2978
      %v2980 = vmul.f32 %v2968, 1.442695
      %v2981 = vpow.pop %v2980
      %v2982 = vmul.f32 %v2969, 1.442695
      %v2983 = vpow.pop %v2982
      %v2984 = vmul.f32 %v2970, 1.442695
      %v2985 = vpow.pop %v2984
      %v2986 = vmul.f32 %v2971, 1.442695
      %v2987 = vpow.pop %v2986
      %v2988 = vmul.f32 %v2948, %v2973
      %v2989 = vmul.f32 %v2949, %v2975
      %v2990 = vmul.f32 %v2950, %v2977
      %v2991 = vmul.f32 %v2951, %v2979
      %v2992 = vmul.f32 %v2952, %v2981
      %v2993 = vmul.f32 %v2953, %v2983
      %v2994 = vmul.f32 %v2954, %v2985
      %v2995 = vmul.f32 %v2955, %v2987
      %v2996 = vsub.f32 1.0, %v2988
      %v2997 = vsub.f32 1.0, %v2989
      %v2998 = vsub.f32 1.0, %v2990
      %v2999 = vsub.f32 1.0, %v2991
      %v3000 = vsub.f32 1.0, %v2992
      %v3001 = vsub.f32 1.0, %v2993
      %v3002 = vsub.f32 1.0, %v2994
      %v3003 = vsub.f32 1.0, %v2995
      %v3004 = vmul.f32 %v2836, %v2996
      %v3005 = vmul.f32 %v2837, %v2997
      %v3006 = vmul.f32 %v2838, %v2998
      %v3007 = vmul.f32 %v2839, %v2999
      %v3008 = vmul.f32 %v2840, %v3000
      %v3009 = vmul.f32 %v2841, %v3001
      %v3010 = vmul.f32 %v2842, %v3002
      %v3011 = vmul.f32 %v2843, %v3003
      %v3012 = vadd.f32 %v3004, 1.0
      %v3013 = vadd.f32 %v3005, 1.0
      %v3014 = vadd.f32 %v3006, 1.0
      %v3015 = vadd.f32 %v3007, 1.0
      %v3016 = vadd.f32 %v3008, 1.0
      %v3017 = vadd.f32 %v3009, 1.0
      %v3018 = vadd.f32 %v3010, 1.0
      %v3019 = vadd.f32 %v3011, 1.0
      %v3020 = vmul.f32 %v2812, %v3012
      %v3021 = vmul.f32 %v2813, %v3013
      %v3022 = vmul.f32 %v2814, %v3014
      %v3023 = vmul.f32 %v2815, %v3015
      %v3024 = vmul.f32 %v2816, %v3016
      %v3025 = vmul.f32 %v2817, %v3017
      %v3026 = vmul.f32 %v2818, %v3018
      %v3027 = vmul.f32 %v2819, %v3019
      %v3028 = vld [vmem:[%s12] sm:$0xff]
      %v3029 = vld [vmem:[%s12 + $0x8] sm:$0xff]
      %v3030 = vld [vmem:[%s13] sm:$0xff]
      %v3031 = vld [vmem:[%s13 + $0x8] sm:$0xff]
      %3033 = vset.pattern.permute.xlu0 0
      %3034 = vperm.xlu0 %3033, %v3030
      %v3035 = vpop.permute.xlu0 %3034
      %3038 = vset.pattern.permute.xlu0 0
      %3039 = vperm.xlu0 %3038, %v3031
      %v3040 = vpop.permute.xlu0 %3039
      %vm3042 = vcmask 261120
      %v3044 = vsel %vm3042, %v3028, 0
      %v3047 = vsel %vm3042, %v3029, 0
      %3049 = vmatprep.subr.mxu0 %v3021
      %3050 = vmatpush1.msra.mxu0 %v3020
      %3051 = vmatprep.subr.mxu0 %v3023
      %3052 = vmatpush1.msra.mxu0 %v3022
      %3053 = vmatprep.subr.mxu0 %v3025
      %3054 = vmatpush1.msra.mxu0 %v3024
      %3055 = vmatprep.subr.mxu0 %v3027
      %3056 = vmatpush1.msra.mxu0 %v3026
      %3057 = vmatprep.subr.mxu0 0.0
      %3058 = vmatpush1.msra.mxu0 0.0
      %3059 = vmatprep.subr.mxu0 0.0
      %3060 = vmatpush1.msra.mxu0 0.0
      %3061 = vmatprep.subr.mxu0 0.0
      %3062 = vmatpush1.msra.mxu0 0.0
      %3063 = vmatprep.subr.mxu0 0.0
      %3064 = vmatpush1.msra.mxu0 0.0
      %3065 = vmatprep.subr.mxu0 0.0
      %3066 = vmatpush1.msra.mxu0 0.0
      %3067 = vmatprep.subr.mxu0 0.0
      %3068 = vmatpush1.msra.mxu0 0.0
      %3069 = vmatprep.subr.mxu0 0.0
      %3070 = vmatpush1.msra.mxu0 0.0
      %3071 = vmatprep.subr.mxu0 0.0
      %3072 = vmatpush1.msra.mxu0 0.0
      %3073 = vmatprep.subr.mxu0 0.0
      %3074 = vmatpush1.msra.mxu0 0.0
      %3075 = vmatprep.subr.mxu0 0.0
      %3076 = vmatpush1.msra.mxu0 0.0
      %3077 = vmatprep.subr.mxu0 0.0
      %3078 = vmatpush1.msra.mxu0 0.0
      %3079 = vmatprep.subr.mxu0 0.0
      %3080 = vmatpush1.msra.mxu0 0.0
      %3081 = vmatprep.subr.mxu0 0.0
      %3082 = vmatpush1.msra.mxu0 0.0
      %3083 = vmatprep.subr.mxu0 0.0
      %3084 = vmatpush1.msra.mxu0 0.0
      %3085 = vmatprep.subr.mxu0 0.0
      %3086 = vmatpush1.msra.mxu0 0.0
      %3087 = vmatprep.subr.mxu0 0.0
      %3088 = vmatpush1.msra.mxu0 0.0
      %3089 = vmatprep.subr.mxu0 0.0
      %3090 = vmatpush1.msra.mxu0 0.0
      %3091 = vmatprep.subr.mxu0 0.0
      %3092 = vmatpush1.msra.mxu0 0.0
      %3093 = vmatprep.subr.mxu0 0.0
      %3094 = vmatpush1.msra.mxu0 0.0
      %3095 = vmatprep.subr.mxu0 0.0
      %3096 = vmatpush1.msra.mxu0 0.0
      %3097 = vmatprep.subr.mxu0 0.0
      %3098 = vmatpush1.msra.mxu0 0.0
      %3099 = vmatprep.subr.mxu0 0.0
      %3100 = vmatpush1.msra.mxu0 0.0
      %3101 = vmatprep.subr.mxu0 0.0
      %3102 = vmatpush1.msra.mxu0 0.0
      %3103 = vmatprep.subr.mxu0 0.0
      %3104 = vmatpush1.msra.mxu0 0.0
      %3105 = vmatprep.subr.mxu0 0.0
      %3106 = vmatpush1.msra.mxu0 0.0
      %3107 = vmatprep.subr.mxu0 0.0
      %3108 = vmatpush1.msra.mxu0 0.0
      %3109 = vmatprep.subr.mxu0 0.0
      %3110 = vmatpush1.msra.mxu0 0.0
      %3111 = vmatprep.subr.mxu0 0.0
      %3112 = vmatpush1.msra.mxu0 0.0
      %3113 = vmatprep.mubr.f32.mxu0 0.0
      %3114 = vmatmul.mubr.f32.gmra.mrb[0].mxu0 %v3044
      %v3115 = vpop.f32.mrb[0].mxu0
      %v3116 = vadd.f32 %v3035, %v3115
      %v3117 = vpop.f32.mrb[0].mxu0
      %v3118 = vadd.f32 %v3035, %v3117
      %3119 = vmatprep.mubr.f32.mxu0 0.0
      %3120 = vmatmul.mubr.f32.gmra.mrb[0].mxu0 %v3047
      %v3121 = vpop.f32.mrb[0].mxu0
      %v3122 = vadd.f32 %v3040, %v3121
      %v3123 = vpop.f32.mrb[0].mxu0
      %v3124 = vadd.f32 %v3040, %v3123
      %3125 = vdwg.mxu0
      %v3126 = vadd.f32 %v3116, %v641
      %v3127 = vadd.f32 %v3118, %v642
      %v3128 = vadd.f32 %v3122, %v643
      %v3129 = vadd.f32 %v3124, %v644
      %3130 = vst [vmem:[%s575] sm:$0xff] %v3126
      %3131 = vst [vmem:[%s575 + $0x8] sm:$0xff] %v3127
      %3132 = vst [vmem:[%s575 + $0x10] sm:$0xff] %v3128
      %3133 = vst [vmem:[%s575 + $0x18] sm:$0xff] %v3129
      %p3134 = scmp.lt.s32.totalorder %s29, 1
      %s3135 = scalar_select %p3134, %s29, 1
      %s3136 = smul.addr %s3135, 4
      %s3137 = smul.addr %s3136, 8
      %s3138 = scalar_lea.vmem %s18, %s3137
      // Predicated region
      $region93: #{sfno_forward.5} parent=91 // pred_check
        %p3139 = pneg %p430
      $region94: #{sfno_forward.5} parent=91 // pred_check_branch
        %3141 = sbr.rel (%p3139) target = $region96
      $region95: #{sfno_forward.5} parent=91 // pred_region
        _
      $region96: #{sfno_forward.5} parent=91 // pred_fallthru
        _
    $region92: #{sfno_forward.5} parent=5 // pred_fallthru
      _
    %p3142 = scmp.le.s32.totalorder 2, %s24
    // Predicated region
    $region97: #{sfno_forward.5} parent=5 // pred_check
      %p3143 = pneg %p3142
    $region98: #{sfno_forward.5} parent=5 // pred_check_branch
      %3145 = sbr.rel (%p3143) target = $region100
    $region99: #{sfno_forward.5} parent=5 // pred_region
      %s3146 = ssub.s32 %s24, 2
      // Predicated region
      $region101: #{sfno_forward.5} parent=99 // pred_check
        %p3147 = pneg %p436
      $region102: #{sfno_forward.5} parent=99 // pred_check_branch
        %3149 = sbr.rel (%p3147) target = $region104
      $region103: #{sfno_forward.5} parent=99 // pred_region
        %p3150 = scmp.lt.s32.totalorder %s30, 1
        %s3151 = scalar_select %p3150, %s30, 1
        %s3152 = smul.addr %s3151, 4
        %s3153 = smul.addr %s3152, 8
        %s3154 = scalar_lea.vmem %s18, %s3153
      $region104: #{sfno_forward.5} parent=99 // pred_fallthru
        _
    $region100: #{sfno_forward.5} parent=5 // pred_fallthru
      _
  $region6: #{sfno_forward.5} parent=0 // loop_footer
    %s28 = sadd.s32 1, %s24
  $region7: #{sfno_forward.5} parent=0 // loop_footer_branch
    %23 = sbr.rel target = $region3
  $region8: #{sfno_forward.5} parent=0 // loop_exit
    _

</llo_original>
